<compile_context>
chip_gen: v7x
topology: tpu7x:2x2x1
jax: 0.10.0
libtpu: 0.0.40
codegen_flags: <defaults>
</compile_context>

<pallas_src>
import functools
import math

import jax
import jax.numpy as jnp
from jax.experimental import pallas as pl
from jax.experimental.pallas import tpu as pltpu


# -----------------------------------------------------------------------------
# Fused stack kernel: grid axis = encoder layer (sequential / "arbitrary").
# -----------------------------------------------------------------------------
def _encoder_stack_kernel(x_ref, mask_ref, hm_ref, wqkv_ref, bqkv_ref,
                          wih_ref, whh_ref, b_ref, h0_ref, c0_ref,
                          o_ref, act_ref, *, num_heads, hidden, chain):
    B, S, D = x_ref.shape
    H = hidden
    nh = num_heads
    dh = D // nh
    SW = nh * S
    scale = 1.0 / math.sqrt(dh)

    # ---- layer input ---------------------------------------------------------
    if chain:
        # Layers > 0 read the previous layer's output from the VMEM scratch;
        # layer 0 seeds the scratch from the kernel input (D == 2H guaranteed).
        @pl.when(pl.program_id(0) == 0)
        def _():
            act_ref[...] = x_ref[...]
        xin = act_ref[...]
    else:
        xin = x_ref[...]

    # ---- fused QKV projection -------------------------------------------------
    x_flat = xin.reshape(B * S, D)
    qkv = jnp.dot(x_flat, wqkv_ref[0],
                  preferred_element_type=jnp.float32) + bqkv_ref[0]
    q = qkv[:, 0:D].reshape(B, S, D)
    k = qkv[:, D:2 * D].reshape(B, S, D)
    v = qkv[:, 2 * D:3 * D].reshape(B, S, D)

    # ---- all heads at once: head-masked "wide" keys/values --------------------
    # kw[b, h*S + j, :] = k[b, j, :] * headmask[h, :].  The cross-head block
    # mask folded into mask_ref kills (h_row != h_col) scores, so one last-axis
    # softmax over SW keys reproduces the per-head softmax exactly.
    hm = hm_ref[...]                                            # (SW, D)
    qw = jnp.concatenate([q] * nh, axis=1)                      # (B, SW, D)
    kw = jnp.concatenate([k] * nh, axis=1) * hm[None, :, :]     # (B, SW, D)
    vw = jnp.concatenate([v] * nh, axis=1) * hm[None, :, :]     # (B, SW, D)

    s = jnp.einsum('bqd,bkd->bqk', qw, kw,
                   preferred_element_type=jnp.float32) * scale  # (B, SW, SW)
    s = s + mask_ref[...]             # additive attention mask + block mask
    m = jnp.max(s, axis=-1, keepdims=True)
    e = jnp.exp(s - m)
    den = jnp.sum(e, axis=-1, keepdims=True)
    p = e / den                        # exact division (reference numerics)
    # TODO(synk): attention-probs dropout not implemented (eval-mode identity).
    ctx_w = jnp.einsum('bqk,bkd->bqd', p, vw,
                       preferred_element_type=jnp.float32)      # (B, SW, D)
    # Collapse the head axis (rows h*S+q); the head mask already zeroed the
    # off-head feature columns, so summing the nh row-blocks yields the usual
    # concat-heads context.
    ctx = ctx_w[:, 0:S, :]
    for h in range(1, nh):
        ctx = ctx + ctx_w[:, h * S:(h + 1) * S, :]              # (B, S, D)

    # ---- bidirectional LSTM ----------------------------------------------------
    # Input projection for BOTH directions hoisted out of the recurrence and
    # fused into one (B*S, D) x (D, 8H) matmul.  Column layout:
    #   [ i_f f_f o_f g_f | i_r f_r o_r g_r ]  (per-direction gate order i,f,o,g)
    gx = (jnp.dot(ctx.reshape(B * S, D), wih_ref[0],
                  preferred_element_type=jnp.float32) + b_ref[0]).reshape(B, S, 8 * H)
    whh = whh_ref[0]                    # (2H, 8H) block-diagonal [fwd | rev]
    h_cat = h0_ref[0]                   # (B, 2H) = [h_fwd | h_rev]
    c_f = c0_ref[0][:, 0:H]
    c_r = c0_ref[0][:, H:2 * H]

    # TODO(synk): at larger S, switch gx to time-major + fori_loop; the fully
    #             unrolled batch-major form is fine at S=8.
    for t in range(S):
        tb = S - 1 - t
        # ONE recurrence matmul per step for both directions (block-diag whh).
        r = jnp.dot(h_cat, whh, preferred_element_type=jnp.float32)   # (B, 8H)
        g_f = gx[:, t, 0:4 * H] + r[:, 0:4 * H]
        g_r = gx[:, tb, 4 * H:8 * H] + r[:, 4 * H:8 * H]
        sf = jax.nn.sigmoid(g_f[:, 0:3 * H])       # [i | f | o] forward
        sr = jax.nn.sigmoid(g_r[:, 0:3 * H])       # [i | f | o] reverse
        gf = jnp.tanh(g_f[:, 3 * H:4 * H])
        gr = jnp.tanh(g_r[:, 3 * H:4 * H])
        c_f = sf[:, H:2 * H] * c_f + sf[:, 0:H] * gf
        c_r = sr[:, H:2 * H] * c_r + sr[:, 0:H] * gr
        h_f = sf[:, 2 * H:3 * H] * jnp.tanh(c_f)
        h_r = sr[:, 2 * H:3 * H] * jnp.tanh(c_r)
        h_cat = jnp.concatenate([h_f, h_r], axis=-1)
        # Write straight into the (B, S, 2H) activation scratch, which is also
        # the next layer's input — no list/stack/concat epilogue.
        act_ref[:, t, 0:H] = h_f
        act_ref[:, tb, H:2 * H] = h_r

    # nn.Dropout on the LSTM output: identity (drop_prob forced to 0.0 when
    # rnn_layers == 1), so the scratch content IS this layer's output.
    # TODO(synk): pack layer outputs into a >=128-lane slab if S/H scale up.
    o_ref[...] = act_ref[...].reshape(B, 1, S, 2 * H)


# -----------------------------------------------------------------------------
# One pallas_call per segment of layers sharing the same input dim.
# -----------------------------------------------------------------------------
def encoder_segment(x, attention_mask, seg, num_heads, hidden, h0_s, c0_s):
    B, S, D = x.shape
    H = hidden
    nh = num_heads
    assert D % nh == 0, (D, nh)
    dh = D // nh
    SW = nh * S
    L = seg["wqkv"].shape[0]

    # Head mask (SW, D): row h*S+j selects head h's feature columns.
    row_head = jnp.arange(SW) // S
    col_head = jnp.arange(D) // dh
    hm_wide = (row_head[:, None] == col_head[None, :]).astype(jnp.float32)

    # Combined additive mask (B, SW, SW): attention mask over key positions plus
    # the cross-head block mask.
    am = attention_mask.reshape(B, S).astype(jnp.float32)
    am_wide = jnp.tile(am, (1, nh))                                    # (B, SW)
    same_head = (jnp.arange(SW)[:, None] // S) == (jnp.arange(SW)[None, :] // S)
    block_mask = jnp.where(same_head, 0.0, -1e9).astype(jnp.float32)   # (SW, SW)
    full_mask = am_wide[:, None, :] + block_mask[None, :, :]           # (B, SW, SW)

    kernel = functools.partial(_encoder_stack_kernel, num_heads=nh,
                               hidden=H, chain=bool(seg["chain"]))
    return pl.pallas_call(
        kernel,
        out_shape=jax.ShapeDtypeStruct((B, L, S, 2 * H), jnp.float32),
        grid_spec=pltpu.PrefetchScalarGridSpec(
            num_scalar_prefetch=0,
            grid=(L,),
            in_specs=[
                pl.BlockSpec((B, S, D), lambda l: (0, 0, 0)),           # x
                pl.BlockSpec((B, SW, SW), lambda l: (0, 0, 0)),         # additive mask
                pl.BlockSpec((SW, D), lambda l: (0, 0)),                # head mask
                pl.BlockSpec((1, D, 3 * D), lambda l: (l, 0, 0)),       # wqkv
                pl.BlockSpec((1, 1, 3 * D), lambda l: (l, 0, 0)),       # bqkv
                pl.BlockSpec((1, D, 8 * H), lambda l: (l, 0, 0)),       # wih (both dirs)
                pl.BlockSpec((1, 2 * H, 8 * H), lambda l: (l, 0, 0)),   # whh (block-diag)
                pl.BlockSpec((1, 1, 8 * H), lambda l: (l, 0, 0)),       # lstm bias
                pl.BlockSpec((1, B, 2 * H), lambda l: (l, 0, 0)),       # h0
                pl.BlockSpec((1, B, 2 * H), lambda l: (l, 0, 0)),       # c0
            ],
            out_specs=pl.BlockSpec((B, 1, S, 2 * H), lambda l: (0, l, 0, 0)),
            scratch_shapes=[pltpu.VMEM((B, S, 2 * H), jnp.float32)],
        ),
        compiler_params=pltpu.CompilerParams(
            # Layers are sequentially dependent through the activation scratch.
            dimension_semantics=("arbitrary",)),
    )(x, full_mask, hm_wide, seg["wqkv"], seg["bqkv"], seg["wih"],
      seg["whh"], seg["b"], h0_s, c0_s)


# -----------------------------------------------------------------------------
# Parameter construction (deterministic, synthetic) + one-time weight fusion.
# -----------------------------------------------------------------------------
def _uniform(key, shape, bound):
    return jax.random.uniform(key, shape, jnp.float32, -bound, bound)


def init_layer_params(key, input_dim, hidden):
    keys = jax.random.split(key, 16)
    lb = 1.0 / math.sqrt(input_dim)
    hb = 1.0 / math.sqrt(hidden)
    return {
        # self-attention Q/K/V linears (PyTorch nn.Linear layout: (out, in))
        "wq": _uniform(keys[0], (input_dim, input_dim), lb),
        "bq": _uniform(keys[1], (input_dim,), lb),
        "wk": _uniform(keys[2], (input_dim, input_dim), lb),
        "bk": _uniform(keys[3], (input_dim,), lb),
        "wv": _uniform(keys[4], (input_dim, input_dim), lb),
        "bv": _uniform(keys[5], (input_dim,), lb),
        # bidirectional LSTM (forward + reverse), PyTorch gate order [i, f, g, o]
        "wih_f": _uniform(keys[6], (4 * hidden, input_dim), hb),
        "whh_f": _uniform(keys[7], (4 * hidden, hidden), hb),
        "b_f": _uniform(keys[8], (4 * hidden,), hb) + _uniform(keys[9], (4 * hidden,), hb),
        "wih_r": _uniform(keys[10], (4 * hidden, input_dim), hb),
        "whh_r": _uniform(keys[11], (4 * hidden, hidden), hb),
        "b_r": _uniform(keys[12], (4 * hidden,), hb) + _uniform(keys[13], (4 * hidden,), hb),
        # init_hidden (xavier_normal in the reference; deterministic here)
        "h0_key": keys[14],
        "c0_key": keys[15],
    }


def _fuse_layer_params(p, hidden):
    """Pre-fuse / pre-transpose all per-layer weights (runs once, outside the kernel)."""
    H = hidden
    wqkv = jnp.concatenate([p["wq"].T, p["wk"].T, p["wv"].T], axis=1)        # (D, 3D)
    bqkv = jnp.concatenate([p["bq"], p["bk"], p["bv"]]).reshape(1, -1)        # (1, 3D)

    order = (0, 1, 3, 2)   # PyTorch rows [i, f, g, o] -> fused columns [i, f, o, g]

    def one_direction(wih, whh, b):   # b is already b_ih + b_hh
        wih_t = jnp.concatenate([wih[g * H:(g + 1) * H, :].T for g in order], axis=1)
        whh_t = jnp.concatenate([whh[g * H:(g + 1) * H, :].T for g in order], axis=1)
        b_t = jnp.concatenate([b[g * H:(g + 1) * H] for g in order])
        return wih_t, whh_t, b_t      # (D,4H), (H,4H), (4H,)

    wih_f, whh_f, b_f = one_direction(p["wih_f"], p["whh_f"], p["b_f"])
    wih_r, whh_r, b_r = one_direction(p["wih_r"], p["whh_r"], p["b_r"])

    wih = jnp.concatenate([wih_f, wih_r], axis=1)                             # (D, 8H)
    z = jnp.zeros_like(whh_f)
    whh = jnp.concatenate([jnp.concatenate([whh_f, z], axis=1),
                           jnp.concatenate([z, whh_r], axis=1)], axis=0)      # (2H, 8H)
    b = jnp.concatenate([b_f, b_r]).reshape(1, -1)                            # (1, 8H)
    return {"wqkv": wqkv, "bqkv": bqkv, "wih": wih, "whh": whh, "b": b}


def prepare_stack_params(params_list, hidden):
    """Fuse per-layer weights and stack consecutive layers with in_dim == 2H
    into segments so each segment is a single fused pallas_call."""
    H = hidden
    fused = [_fuse_layer_params(p, H) for p in params_list]
    in_dims = [p["wq"].shape[1] for p in params_list]
    segments = []
    i, L = 0, len(params_list)
    while i < L:
        if in_dims[i] == 2 * H:
            j = i
            while j < L and in_dims[j] == 2 * H:
                j += 1
        else:
            j = i + 1   # cannot chain through a layer whose in_dim != 2H
        layer_ids = list(range(i, j))
        seg = {k: jnp.stack([fused[li][k] for li in layer_ids], axis=0)
               for k in fused[0]}
        seg["layers"] = layer_ids
        seg["chain"] = (in_dims[i] == 2 * H)
        segments.append(seg)
        i = j
    return segments


def init_hidden(params, batch_size, hidden):
    # xavier_normal over a (2*rnn_layers, B, H) tensor (deterministic keys here)
    std = math.sqrt(2.0 / (batch_size + hidden))
    h0 = jax.random.normal(params["h0_key"], (2, batch_size, hidden)) * std
    c0 = jax.random.normal(params["c0_key"], (2, batch_size, hidden)) * std
    return h0.astype(jnp.float32), c0.astype(jnp.float32)


# -----------------------------------------------------------------------------
# Stack forward
# -----------------------------------------------------------------------------
def self_attention_lstm_encoder_stack(x, params_list, num_heads, hidden,
                                      attention_mask=None,
                                      return_all_layers=True,
                                      return_all_states=True,
                                      prepared=None):
    B, S, _ = x.shape
    H = hidden
    if attention_mask is None:
        attention_mask = (1.0 - jnp.ones((B, 1, 1, S), jnp.float32)) * -10000.0
    if prepared is None:
        prepared = prepare_stack_params(params_list, H)

    seg_outs = []
    inp = x
    for seg in prepared:
        h0s, c0s = [], []
        for li in seg["layers"]:
            h0, c0 = init_hidden(params_list[li], B, H)
            h0s.append(jnp.concatenate([h0[0], h0[1]], axis=-1))   # (B, 2H) [fwd|rev]
            c0s.append(jnp.concatenate([c0[0], c0[1]], axis=-1))
        h0_s = jnp.stack(h0s, axis=0)                               # (Lseg, B, 2H)
        c0_s = jnp.stack(c0s, axis=0)
        seg_out = encoder_segment(inp, attention_mask, seg, num_heads, H, h0_s, c0_s)
        seg_outs.append(seg_out)
        inp = seg_out[:, -1]                                        # (B, S, 2H)

    out = seg_outs[0] if len(seg_outs) == 1 else jnp.concatenate(seg_outs, axis=1)
    if not return_all_states:
        out = out[:, :, S - 1:S, :]
    if not return_all_layers:
        out = out[:, -1:, :, :]
    return out


# -----------------------------------------------------------------------------
if __name__ == "__main__":
    BATCH = 2
    SEQ = 8
    INPUT_DIM = 32
    RNN_HIDDEN = 16          # bidirectional -> 2*16 = 32 feeds the next layer
    N_LAYERS = 2
    NUM_HEADS = 8

    root = jax.random.PRNGKey(0)
    kx, kp = jax.random.split(root)
    x = jax.random.normal(kx, (BATCH, SEQ, INPUT_DIM), jnp.float32)

    layer_keys = jax.random.split(kp, N_LAYERS)
    params_list = []
    for i in range(N_LAYERS):
        in_dim = INPUT_DIM if i == 0 else 2 * RNN_HIDDEN
        params_list.append(init_layer_params(layer_keys[i], in_dim, RNN_HIDDEN))

    # Weight fusion / transposition / stacking done ONCE, outside the forward.
    prepared = prepare_stack_params(params_list, RNN_HIDDEN)

    out = self_attention_lstm_encoder_stack(
        x, params_list, NUM_HEADS, RNN_HIDDEN,
        attention_mask=None, return_all_layers=True, return_all_states=True,
        prepared=prepared)
    out = jax.block_until_ready(out)

    expected_shape = (BATCH, N_LAYERS, SEQ, 2 * RNN_HIDDEN)
    assert out.shape == expected_shape, (out.shape, expected_shape)
    assert bool(jnp.all(jnp.isfinite(out)))
    print("KERNEL_OK")
</pallas_src>

<mosaic_0001>
module attributes {stable_mosaic.version = 11 : i64} {
  func.func @_encoder_stack_kernel(%arg0: i32, %arg1: memref<2x8x32xf32, #tpu.memory_space<vmem>>, %arg2: memref<2x64x64xf32, #tpu.memory_space<vmem>>, %arg3: memref<64x32xf32, #tpu.memory_space<vmem>>, %arg4: memref<1x32x96xf32, #tpu.memory_space<vmem>>, %arg5: memref<1x1x96xf32, #tpu.memory_space<vmem>>, %arg6: memref<1x32x128xf32, #tpu.memory_space<vmem>>, %arg7: memref<1x32x128xf32, #tpu.memory_space<vmem>>, %arg8: memref<1x1x128xf32, #tpu.memory_space<vmem>>, %arg9: memref<1x2x32xf32, #tpu.memory_space<vmem>>, %arg10: memref<1x2x32xf32, #tpu.memory_space<vmem>>, %arg11: memref<2x1x8x32xf32, #tpu.memory_space<vmem>>, %arg12: memref<2x8x32xf32, #tpu.memory_space<vmem>>) attributes {dimension_semantics = [#tpu.dimension_semantics<arbitrary>], iteration_bounds = array<i64: 2>, scalar_prefetch = 0 : i64, scratch_operands = 1 : i64, tpu.core_type = #tpu.core_type<tc>, window_params = [{pipeline_mode = #tpu.pipeline_mode<synchronous>, transform_indices = @transform_0, window_bounds = array<i64: 2, 8, 32>}, {pipeline_mode = #tpu.pipeline_mode<synchronous>, transform_indices = @transform_1, window_bounds = array<i64: 2, 64, 64>}, {pipeline_mode = #tpu.pipeline_mode<synchronous>, transform_indices = @transform_2, window_bounds = array<i64: 64, 32>}, {transform_indices = @transform_3, window_bounds = array<i64: 1, 32, 96>}, {transform_indices = @transform_4, window_bounds = array<i64: 1, 1, 96>}, {transform_indices = @transform_5, window_bounds = array<i64: 1, 32, 128>}, {transform_indices = @transform_6, window_bounds = array<i64: 1, 32, 128>}, {transform_indices = @transform_7, window_bounds = array<i64: 1, 1, 128>}, {transform_indices = @transform_8, window_bounds = array<i64: 1, 2, 32>}, {transform_indices = @transform_9, window_bounds = array<i64: 1, 2, 32>}, {transform_indices = @transform_10, window_bounds = array<i64: 2, 1, 8, 32>}]} {
    %c0_i32 = arith.constant 0 : i32
    %0 = arith.cmpi eq, %arg0, %c0_i32 : i32
    %1 = arith.extui %0 : i1 to i32
    %c0_i32_0 = arith.constant 0 : i32
    %2 = arith.cmpi ne, %1, %c0_i32_0 : i32
    scf.if %2 {
      %c0_109 = arith.constant 0 : index
      %c0_110 = arith.constant 0 : index
      %c0_111 = arith.constant 0 : index
      %463 = vector.load %arg1[%c0_109, %c0_110, %c0_111] : memref<2x8x32xf32, #tpu.memory_space<vmem>>, vector<2x8x32xf32>
      %c0_112 = arith.constant 0 : index
      %c0_113 = arith.constant 0 : index
      %c0_114 = arith.constant 0 : index
      %464 = vector.load %arg12[%c0_112, %c0_113, %c0_114] : memref<2x8x32xf32, #tpu.memory_space<vmem>>, vector<2x8x32xf32>
      tpu.vector_store %arg12[%c0_112, %c0_113, %c0_114], %463 {strides = array<i32>} : memref<2x8x32xf32, #tpu.memory_space<vmem>>, vector<2x8x32xf32>,
    } else {
    }
    %c0 = arith.constant 0 : index
    %c0_1 = arith.constant 0 : index
    %c0_2 = arith.constant 0 : index
    %3 = vector.load %arg12[%c0, %c0_1, %c0_2] : memref<2x8x32xf32, #tpu.memory_space<vmem>>, vector<2x8x32xf32>
    %4 = vector.shape_cast %3 : vector<2x8x32xf32> to vector<16x32xf32>
    %c0_3 = arith.constant 0 : index
    %c0_4 = arith.constant 0 : index
    %c0_5 = arith.constant 0 : index
    %5 = vector.load %arg4[%c0_3, %c0_4, %c0_5] : memref<1x32x96xf32, #tpu.memory_space<vmem>>, vector<1x32x96xf32>
    %6 = vector.shape_cast %5 : vector<1x32x96xf32> to vector<32x96xf32>
    %cst = arith.constant dense<0.000000e+00> : vector<16x96xf32>
    %7 = tpu.matmul %4, %6, %cst {dimension_numbers = #tpu.dot_dimension_numbers<[1], [0], [0], [1], [0, 0, 1, 1], [], []>} : vector<16x32xf32>, vector<32x96xf32>, vector<16x96xf32> -> vector<16x96xf32>
    %c0_6 = arith.constant 0 : index
    %c0_7 = arith.constant 0 : index
    %c0_8 = arith.constant 0 : index
    %8 = vector.load %arg5[%c0_6, %c0_7, %c0_8] : memref<1x1x96xf32, #tpu.memory_space<vmem>>, vector<1x1x96xf32>
    %9 = vector.shape_cast %8 : vector<1x1x96xf32> to vector<1x96xf32>
    %10 = vector.broadcast %9 : vector<1x96xf32> to vector<16x96xf32>
    %11 = arith.addf %7, %10 : vector<16x96xf32>
    %12 = vector.extract_strided_slice %11 {offsets = [0, 0], sizes = [16, 32], strides = [1, 1]} : vector<16x96xf32> to vector<16x32xf32>
    %13 = vector.shape_cast %12 : vector<16x32xf32> to vector<2x8x32xf32>
    %14 = vector.extract_strided_slice %11 {offsets = [0, 32], sizes = [16, 32], strides = [1, 1]} : vector<16x96xf32> to vector<16x32xf32>
    %15 = vector.shape_cast %14 : vector<16x32xf32> to vector<2x8x32xf32>
    %16 = vector.extract_strided_slice %11 {offsets = [0, 64], sizes = [16, 32], strides = [1, 1]} : vector<16x96xf32> to vector<16x32xf32>
    %17 = vector.shape_cast %16 : vector<16x32xf32> to vector<2x8x32xf32>
    %c0_9 = arith.constant 0 : index
    %c0_10 = arith.constant 0 : index
    %18 = vector.load %arg3[%c0_9, %c0_10] : memref<64x32xf32, #tpu.memory_space<vmem>>, vector<64x32xf32>
    %19 = tpu.concatenate %13, %13, %13, %13, %13, %13, %13, %13 in 1 : vector<2x8x32xf32>, vector<2x8x32xf32>, vector<2x8x32xf32>, vector<2x8x32xf32>, vector<2x8x32xf32>, vector<2x8x32xf32>, vector<2x8x32xf32>, vector<2x8x32xf32> -> vector<2x64x32xf32>
    %20 = tpu.concatenate %15, %15, %15, %15, %15, %15, %15, %15 in 1 : vector<2x8x32xf32>, vector<2x8x32xf32>, vector<2x8x32xf32>, vector<2x8x32xf32>, vector<2x8x32xf32>, vector<2x8x32xf32>, vector<2x8x32xf32>, vector<2x8x32xf32> -> vector<2x64x32xf32>
    %21 = vector.shape_cast %18 : vector<64x32xf32> to vector<1x64x32xf32>
    %22 = vector.broadcast %21 : vector<1x64x32xf32> to vector<2x64x32xf32>
    %23 = arith.mulf %20, %22 : vector<2x64x32xf32>
    %24 = tpu.concatenate %17, %17, %17, %17, %17, %17, %17, %17 in 1 : vector<2x8x32xf32>, vector<2x8x32xf32>, vector<2x8x32xf32>, vector<2x8x32xf32>, vector<2x8x32xf32>, vector<2x8x32xf32>, vector<2x8x32xf32>, vector<2x8x32xf32> -> vector<2x64x32xf32>
    %25 = vector.shape_cast %18 : vector<64x32xf32> to vector<1x64x32xf32>
    %26 = vector.broadcast %25 : vector<1x64x32xf32> to vector<2x64x32xf32>
    %27 = arith.mulf %24, %26 : vector<2x64x32xf32>
    "tpu.trace_start"() <{level = 10 : i32, message = "bqd,bkd->bqk"}> : () -> ()
    %cst_11 = arith.constant dense<0.000000e+00> : vector<2x64x64xf32>
    %28 = tpu.matmul %19, %23, %cst_11 {dimension_numbers = #tpu.dot_dimension_numbers<[2], [2], [1], [1], [0, 0, 0, 1, 1, 1], [0], [0]>} : vector<2x64x32xf32>, vector<2x64x32xf32>, vector<2x64x64xf32> -> vector<2x64x64xf32>
    "tpu.trace_stop"() : () -> ()
    %cst_12 = arith.constant 5.000000e-01 : f32
    %29 = vector.broadcast %cst_12 : f32 to vector<2x64x64xf32>
    %30 = arith.mulf %28, %29 : vector<2x64x64xf32>
    %c0_13 = arith.constant 0 : index
    %c0_14 = arith.constant 0 : index
    %c0_15 = arith.constant 0 : index
    %31 = vector.load %arg2[%c0_13, %c0_14, %c0_15] : memref<2x64x64xf32, #tpu.memory_space<vmem>>, vector<2x64x64xf32>
    %32 = arith.addf %30, %31 : vector<2x64x64xf32>
    %cst_16 = arith.constant dense<0xFF800000> : vector<2x64xf32>
    %33 = vector.multi_reduction <maximumf>, %32, %cst_16 [2] : vector<2x64x64xf32> to vector<2x64xf32>
    %34 = vector.shape_cast %33 : vector<2x64xf32> to vector<2x64x1xf32>
    %35 = vector.broadcast %34 : vector<2x64x1xf32> to vector<2x64x64xf32>
    %36 = arith.subf %32, %35 : vector<2x64x64xf32>
    %37 = math.exp %36 : vector<2x64x64xf32>
    %cst_17 = arith.constant dense<0.000000e+00> : vector<2x64xf32>
    %38 = vector.multi_reduction <add>, %37, %cst_17 [2] : vector<2x64x64xf32> to vector<2x64xf32>
    %39 = vector.shape_cast %38 : vector<2x64xf32> to vector<2x64x1xf32>
    %40 = vector.broadcast %39 : vector<2x64x1xf32> to vector<2x64x64xf32>
    %41 = arith.divf %37, %40 : vector<2x64x64xf32>
    "tpu.trace_start"() <{level = 10 : i32, message = "bqk,bkd->bqd"}> : () -> ()
    %cst_18 = arith.constant dense<0.000000e+00> : vector<2x64x32xf32>
    %42 = tpu.matmul %41, %27, %cst_18 {dimension_numbers = #tpu.dot_dimension_numbers<[2], [1], [1], [2], [0, 0, 0, 1, 1, 2], [0], [0]>} : vector<2x64x64xf32>, vector<2x64x32xf32>, vector<2x64x32xf32> -> vector<2x64x32xf32>
    "tpu.trace_stop"() : () -> ()
    %43 = vector.extract_strided_slice %42 {offsets = [0, 0, 0], sizes = [2, 8, 32], strides = [1, 1, 1]} : vector<2x64x32xf32> to vector<2x8x32xf32>
    %44 = vector.extract_strided_slice %42 {offsets = [0, 8, 0], sizes = [2, 8, 32], strides = [1, 1, 1]} : vector<2x64x32xf32> to vector<2x8x32xf32>
    %45 = arith.addf %43, %44 : vector<2x8x32xf32>
    %46 = vector.extract_strided_slice %42 {offsets = [0, 16, 0], sizes = [2, 8, 32], strides = [1, 1, 1]} : vector<2x64x32xf32> to vector<2x8x32xf32>
    %47 = arith.addf %45, %46 : vector<2x8x32xf32>
    %48 = vector.extract_strided_slice %42 {offsets = [0, 24, 0], sizes = [2, 8, 32], strides = [1, 1, 1]} : vector<2x64x32xf32> to vector<2x8x32xf32>
    %49 = arith.addf %47, %48 : vector<2x8x32xf32>
    %50 = vector.extract_strided_slice %42 {offsets = [0, 32, 0], sizes = [2, 8, 32], strides = [1, 1, 1]} : vector<2x64x32xf32> to vector<2x8x32xf32>
    %51 = arith.addf %49, %50 : vector<2x8x32xf32>
    %52 = vector.extract_strided_slice %42 {offsets = [0, 40, 0], sizes = [2, 8, 32], strides = [1, 1, 1]} : vector<2x64x32xf32> to vector<2x8x32xf32>
    %53 = arith.addf %51, %52 : vector<2x8x32xf32>
    %54 = vector.extract_strided_slice %42 {offsets = [0, 48, 0], sizes = [2, 8, 32], strides = [1, 1, 1]} : vector<2x64x32xf32> to vector<2x8x32xf32>
    %55 = arith.addf %53, %54 : vector<2x8x32xf32>
    %56 = vector.extract_strided_slice %42 {offsets = [0, 56, 0], sizes = [2, 8, 32], strides = [1, 1, 1]} : vector<2x64x32xf32> to vector<2x8x32xf32>
    %57 = arith.addf %55, %56 : vector<2x8x32xf32>
    %58 = vector.shape_cast %57 : vector<2x8x32xf32> to vector<16x32xf32>
    %c0_19 = arith.constant 0 : index
    %c0_20 = arith.constant 0 : index
    %c0_21 = arith.constant 0 : index
    %59 = vector.load %arg6[%c0_19, %c0_20, %c0_21] : memref<1x32x128xf32, #tpu.memory_space<vmem>>, vector<1x32x128xf32>
    %60 = vector.shape_cast %59 : vector<1x32x128xf32> to vector<32x128xf32>
    %cst_22 = arith.constant dense<0.000000e+00> : vector<16x128xf32>
    %61 = tpu.matmul %58, %60, %cst_22 {dimension_numbers = #tpu.dot_dimension_numbers<[1], [0], [0], [1], [0, 0, 1, 1], [], []>} : vector<16x32xf32>, vector<32x128xf32>, vector<16x128xf32> -> vector<16x128xf32>
    %c0_23 = arith.constant 0 : index
    %c0_24 = arith.constant 0 : index
    %c0_25 = arith.constant 0 : index
    %62 = vector.load %arg8[%c0_23, %c0_24, %c0_25] : memref<1x1x128xf32, #tpu.memory_space<vmem>>, vector<1x1x128xf32>
    %63 = vector.shape_cast %62 : vector<1x1x128xf32> to vector<1x128xf32>
    %64 = vector.broadcast %63 : vector<1x128xf32> to vector<16x128xf32>
    %65 = arith.addf %61, %64 : vector<16x128xf32>
    %66 = vector.shape_cast %65 : vector<16x128xf32> to vector<2x8x128xf32>
    %c0_26 = arith.constant 0 : index
    %c0_27 = arith.constant 0 : index
    %c0_28 = arith.constant 0 : index
    %67 = vector.load %arg7[%c0_26, %c0_27, %c0_28] : memref<1x32x128xf32, #tpu.memory_space<vmem>>, vector<1x32x128xf32>
    %68 = vector.shape_cast %67 : vector<1x32x128xf32> to vector<32x128xf32>
    %c0_29 = arith.constant 0 : index
    %c0_30 = arith.constant 0 : index
    %c0_31 = arith.constant 0 : index
    %69 = vector.load %arg9[%c0_29, %c0_30, %c0_31] : memref<1x2x32xf32, #tpu.memory_space<vmem>>, vector<1x2x32xf32>
    %70 = vector.shape_cast %69 : vector<1x2x32xf32> to vector<2x32xf32>
    %c0_32 = arith.constant 0 : index
    %c0_33 = arith.constant 0 : index
    %c0_34 = arith.constant 0 : index
    %71 = vector.load %arg10[%c0_32, %c0_33, %c0_34] : memref<1x2x32xf32, #tpu.memory_space<vmem>>, vector<1x2x32xf32>
    %72 = vector.shape_cast %71 : vector<1x2x32xf32> to vector<2x32xf32>
    %73 = vector.extract_strided_slice %72 {offsets = [0, 0], sizes = [2, 16], strides = [1, 1]} : vector<2x32xf32> to vector<2x16xf32>
    %c0_35 = arith.constant 0 : index
    %c0_36 = arith.constant 0 : index
    %c0_37 = arith.constant 0 : index
    %74 = vector.load %arg10[%c0_35, %c0_36, %c0_37] : memref<1x2x32xf32, #tpu.memory_space<vmem>>, vector<1x2x32xf32>
    %75 = vector.shape_cast %74 : vector<1x2x32xf32> to vector<2x32xf32>
    %76 = vector.extract_strided_slice %75 {offsets = [0, 16], sizes = [2, 16], strides = [1, 1]} : vector<2x32xf32> to vector<2x16xf32>
    %cst_38 = arith.constant dense<0.000000e+00> : vector<2x128xf32>
    %77 = tpu.matmul %70, %68, %cst_38 {dimension_numbers = #tpu.dot_dimension_numbers<[1], [0], [0], [1], [0, 0, 1, 1], [], []>} : vector<2x32xf32>, vector<32x128xf32>, vector<2x128xf32> -> vector<2x128xf32>
    %78 = vector.extract_strided_slice %66 {offsets = [0, 0, 0], sizes = [2, 1, 64], strides = [1, 1, 1]} : vector<2x8x128xf32> to vector<2x1x64xf32>
    %79 = vector.shape_cast %78 : vector<2x1x64xf32> to vector<2x64xf32>
    %80 = vector.extract_strided_slice %77 {offsets = [0, 0], sizes = [2, 64], strides = [1, 1]} : vector<2x128xf32> to vector<2x64xf32>
    %81 = arith.addf %79, %80 : vector<2x64xf32>
    %82 = vector.extract_strided_slice %66 {offsets = [0, 7, 64], sizes = [2, 1, 64], strides = [1, 1, 1]} : vector<2x8x128xf32> to vector<2x1x64xf32>
    %83 = vector.shape_cast %82 : vector<2x1x64xf32> to vector<2x64xf32>
    %84 = vector.extract_strided_slice %77 {offsets = [0, 64], sizes = [2, 64], strides = [1, 1]} : vector<2x128xf32> to vector<2x64xf32>
    %85 = arith.addf %83, %84 : vector<2x64xf32>
    %86 = vector.extract_strided_slice %81 {offsets = [0, 0], sizes = [2, 48], strides = [1, 1]} : vector<2x64xf32> to vector<2x48xf32>
    %87 = arith.negf %86 : vector<2x48xf32>
    %88 = math.exp %87 : vector<2x48xf32>
    %cst_39 = arith.constant 1.000000e+00 : f32
    %89 = vector.broadcast %cst_39 : f32 to vector<2x48xf32>
    %90 = arith.addf %89, %88 : vector<2x48xf32>
    %91 = arith.divf %89, %90 : vector<2x48xf32>
    %92 = vector.extract_strided_slice %85 {offsets = [0, 0], sizes = [2, 48], strides = [1, 1]} : vector<2x64xf32> to vector<2x48xf32>
    %93 = arith.negf %92 : vector<2x48xf32>
    %94 = math.exp %93 : vector<2x48xf32>
    %cst_40 = arith.constant 1.000000e+00 : f32
    %95 = vector.broadcast %cst_40 : f32 to vector<2x48xf32>
    %96 = arith.addf %95, %94 : vector<2x48xf32>
    %97 = arith.divf %95, %96 : vector<2x48xf32>
    %98 = vector.extract_strided_slice %81 {offsets = [0, 48], sizes = [2, 16], strides = [1, 1]} : vector<2x64xf32> to vector<2x16xf32>
    %99 = math.tanh %98 : vector<2x16xf32>
    %100 = vector.extract_strided_slice %85 {offsets = [0, 48], sizes = [2, 16], strides = [1, 1]} : vector<2x64xf32> to vector<2x16xf32>
    %101 = math.tanh %100 : vector<2x16xf32>
    %102 = vector.extract_strided_slice %91 {offsets = [0, 16], sizes = [2, 16], strides = [1, 1]} : vector<2x48xf32> to vector<2x16xf32>
    %103 = arith.mulf %102, %73 : vector<2x16xf32>
    %104 = vector.extract_strided_slice %91 {offsets = [0, 0], sizes = [2, 16], strides = [1, 1]} : vector<2x48xf32> to vector<2x16xf32>
    %105 = arith.mulf %104, %99 : vector<2x16xf32>
    %106 = arith.addf %103, %105 : vector<2x16xf32>
    %107 = vector.extract_strided_slice %97 {offsets = [0, 16], sizes = [2, 16], strides = [1, 1]} : vector<2x48xf32> to vector<2x16xf32>
    %108 = arith.mulf %107, %76 : vector<2x16xf32>
    %109 = vector.extract_strided_slice %97 {offsets = [0, 0], sizes = [2, 16], strides = [1, 1]} : vector<2x48xf32> to vector<2x16xf32>
    %110 = arith.mulf %109, %101 : vector<2x16xf32>
    %111 = arith.addf %108, %110 : vector<2x16xf32>
    %112 = vector.extract_strided_slice %91 {offsets = [0, 32], sizes = [2, 16], strides = [1, 1]} : vector<2x48xf32> to vector<2x16xf32>
    %113 = math.tanh %106 : vector<2x16xf32>
    %114 = arith.mulf %112, %113 : vector<2x16xf32>
    %115 = vector.extract_strided_slice %97 {offsets = [0, 32], sizes = [2, 16], strides = [1, 1]} : vector<2x48xf32> to vector<2x16xf32>
    %116 = math.tanh %111 : vector<2x16xf32>
    %117 = arith.mulf %115, %116 : vector<2x16xf32>
    %118 = tpu.concatenate %114, %117 in 1 : vector<2x16xf32>, vector<2x16xf32> -> vector<2x32xf32>
    %c0_41 = arith.constant 0 : index
    %c0_42 = arith.constant 0 : index
    %c0_43 = arith.constant 0 : index
    %119 = vector.load %arg12[%c0_41, %c0_42, %c0_43] : memref<2x8x32xf32, #tpu.memory_space<vmem>>, vector<2x1x16xf32>
    %120 = vector.shape_cast %119 : vector<2x1x16xf32> to vector<2x16xf32>
    %121 = vector.shape_cast %114 : vector<2x16xf32> to vector<2x1x16xf32>
    tpu.vector_store %arg12[%c0_41, %c0_42, %c0_43], %121 {strides = array<i32>} : memref<2x8x32xf32, #tpu.memory_space<vmem>>, vector<2x1x16xf32>,
    %c0_44 = arith.constant 0 : index
    %c7 = arith.constant 7 : index
    %c16 = arith.constant 16 : index
    %122 = vector.load %arg12[%c0_44, %c7, %c16] : memref<2x8x32xf32, #tpu.memory_space<vmem>>, vector<2x1x16xf32>
    %123 = vector.shape_cast %122 : vector<2x1x16xf32> to vector<2x16xf32>
    %124 = vector.shape_cast %117 : vector<2x16xf32> to vector<2x1x16xf32>
    tpu.vector_store %arg12[%c0_44, %c7, %c16], %124 {strides = array<i32>} : memref<2x8x32xf32, #tpu.memory_space<vmem>>, vector<2x1x16xf32>,
    %cst_45 = arith.constant dense<0.000000e+00> : vector<2x128xf32>
    %125 = tpu.matmul %118, %68, %cst_45 {dimension_numbers = #tpu.dot_dimension_numbers<[1], [0], [0], [1], [0, 0, 1, 1], [], []>} : vector<2x32xf32>, vector<32x128xf32>, vector<2x128xf32> -> vector<2x128xf32>
    %126 = vector.extract_strided_slice %66 {offsets = [0, 1, 0], sizes = [2, 1, 64], strides = [1, 1, 1]} : vector<2x8x128xf32> to vector<2x1x64xf32>
    %127 = vector.shape_cast %126 : vector<2x1x64xf32> to vector<2x64xf32>
    %128 = vector.extract_strided_slice %125 {offsets = [0, 0], sizes = [2, 64], strides = [1, 1]} : vector<2x128xf32> to vector<2x64xf32>
    %129 = arith.addf %127, %128 : vector<2x64xf32>
    %130 = vector.extract_strided_slice %66 {offsets = [0, 6, 64], sizes = [2, 1, 64], strides = [1, 1, 1]} : vector<2x8x128xf32> to vector<2x1x64xf32>
    %131 = vector.shape_cast %130 : vector<2x1x64xf32> to vector<2x64xf32>
    %132 = vector.extract_strided_slice %125 {offsets = [0, 64], sizes = [2, 64], strides = [1, 1]} : vector<2x128xf32> to vector<2x64xf32>
    %133 = arith.addf %131, %132 : vector<2x64xf32>
    %134 = vector.extract_strided_slice %129 {offsets = [0, 0], sizes = [2, 48], strides = [1, 1]} : vector<2x64xf32> to vector<2x48xf32>
    %135 = arith.negf %134 : vector<2x48xf32>
    %136 = math.exp %135 : vector<2x48xf32>
    %cst_46 = arith.constant 1.000000e+00 : f32
    %137 = vector.broadcast %cst_46 : f32 to vector<2x48xf32>
    %138 = arith.addf %137, %136 : vector<2x48xf32>
    %139 = arith.divf %137, %138 : vector<2x48xf32>
    %140 = vector.extract_strided_slice %133 {offsets = [0, 0], sizes = [2, 48], strides = [1, 1]} : vector<2x64xf32> to vector<2x48xf32>
    %141 = arith.negf %140 : vector<2x48xf32>
    %142 = math.exp %141 : vector<2x48xf32>
    %cst_47 = arith.constant 1.000000e+00 : f32
    %143 = vector.broadcast %cst_47 : f32 to vector<2x48xf32>
    %144 = arith.addf %143, %142 : vector<2x48xf32>
    %145 = arith.divf %143, %144 : vector<2x48xf32>
    %146 = vector.extract_strided_slice %129 {offsets = [0, 48], sizes = [2, 16], strides = [1, 1]} : vector<2x64xf32> to vector<2x16xf32>
    %147 = math.tanh %146 : vector<2x16xf32>
    %148 = vector.extract_strided_slice %133 {offsets = [0, 48], sizes = [2, 16], strides = [1, 1]} : vector<2x64xf32> to vector<2x16xf32>
    %149 = math.tanh %148 : vector<2x16xf32>
    %150 = vector.extract_strided_slice %139 {offsets = [0, 16], sizes = [2, 16], strides = [1, 1]} : vector<2x48xf32> to vector<2x16xf32>
    %151 = arith.mulf %150, %106 : vector<2x16xf32>
    %152 = vector.extract_strided_slice %139 {offsets = [0, 0], sizes = [2, 16], strides = [1, 1]} : vector<2x48xf32> to vector<2x16xf32>
    %153 = arith.mulf %152, %147 : vector<2x16xf32>
    %154 = arith.addf %151, %153 : vector<2x16xf32>
    %155 = vector.extract_strided_slice %145 {offsets = [0, 16], sizes = [2, 16], strides = [1, 1]} : vector<2x48xf32> to vector<2x16xf32>
    %156 = arith.mulf %155, %111 : vector<2x16xf32>
    %157 = vector.extract_strided_slice %145 {offsets = [0, 0], sizes = [2, 16], strides = [1, 1]} : vector<2x48xf32> to vector<2x16xf32>
    %158 = arith.mulf %157, %149 : vector<2x16xf32>
    %159 = arith.addf %156, %158 : vector<2x16xf32>
    %160 = vector.extract_strided_slice %139 {offsets = [0, 32], sizes = [2, 16], strides = [1, 1]} : vector<2x48xf32> to vector<2x16xf32>
    %161 = math.tanh %154 : vector<2x16xf32>
    %162 = arith.mulf %160, %161 : vector<2x16xf32>
    %163 = vector.extract_strided_slice %145 {offsets = [0, 32], sizes = [2, 16], strides = [1, 1]} : vector<2x48xf32> to vector<2x16xf32>
    %164 = math.tanh %159 : vector<2x16xf32>
    %165 = arith.mulf %163, %164 : vector<2x16xf32>
    %166 = tpu.concatenate %162, %165 in 1 : vector<2x16xf32>, vector<2x16xf32> -> vector<2x32xf32>
    %c0_48 = arith.constant 0 : index
    %c1 = arith.constant 1 : index
    %c0_49 = arith.constant 0 : index
    %167 = vector.load %arg12[%c0_48, %c1, %c0_49] : memref<2x8x32xf32, #tpu.memory_space<vmem>>, vector<2x1x16xf32>
    %168 = vector.shape_cast %167 : vector<2x1x16xf32> to vector<2x16xf32>
    %169 = vector.shape_cast %162 : vector<2x16xf32> to vector<2x1x16xf32>
    tpu.vector_store %arg12[%c0_48, %c1, %c0_49], %169 {strides = array<i32>} : memref<2x8x32xf32, #tpu.memory_space<vmem>>, vector<2x1x16xf32>,
    %c0_50 = arith.constant 0 : index
    %c6 = arith.constant 6 : index
    %c16_51 = arith.constant 16 : index
    %170 = vector.load %arg12[%c0_50, %c6, %c16_51] : memref<2x8x32xf32, #tpu.memory_space<vmem>>, vector<2x1x16xf32>
    %171 = vector.shape_cast %170 : vector<2x1x16xf32> to vector<2x16xf32>
    %172 = vector.shape_cast %165 : vector<2x16xf32> to vector<2x1x16xf32>
    tpu.vector_store %arg12[%c0_50, %c6, %c16_51], %172 {strides = array<i32>} : memref<2x8x32xf32, #tpu.memory_space<vmem>>, vector<2x1x16xf32>,
    %cst_52 = arith.constant dense<0.000000e+00> : vector<2x128xf32>
    %173 = tpu.matmul %166, %68, %cst_52 {dimension_numbers = #tpu.dot_dimension_numbers<[1], [0], [0], [1], [0, 0, 1, 1], [], []>} : vector<2x32xf32>, vector<32x128xf32>, vector<2x128xf32> -> vector<2x128xf32>
    %174 = vector.extract_strided_slice %66 {offsets = [0, 2, 0], sizes = [2, 1, 64], strides = [1, 1, 1]} : vector<2x8x128xf32> to vector<2x1x64xf32>
    %175 = vector.shape_cast %174 : vector<2x1x64xf32> to vector<2x64xf32>
    %176 = vector.extract_strided_slice %173 {offsets = [0, 0], sizes = [2, 64], strides = [1, 1]} : vector<2x128xf32> to vector<2x64xf32>
    %177 = arith.addf %175, %176 : vector<2x64xf32>
    %178 = vector.extract_strided_slice %66 {offsets = [0, 5, 64], sizes = [2, 1, 64], strides = [1, 1, 1]} : vector<2x8x128xf32> to vector<2x1x64xf32>
    %179 = vector.shape_cast %178 : vector<2x1x64xf32> to vector<2x64xf32>
    %180 = vector.extract_strided_slice %173 {offsets = [0, 64], sizes = [2, 64], strides = [1, 1]} : vector<2x128xf32> to vector<2x64xf32>
    %181 = arith.addf %179, %180 : vector<2x64xf32>
    %182 = vector.extract_strided_slice %177 {offsets = [0, 0], sizes = [2, 48], strides = [1, 1]} : vector<2x64xf32> to vector<2x48xf32>
    %183 = arith.negf %182 : vector<2x48xf32>
    %184 = math.exp %183 : vector<2x48xf32>
    %cst_53 = arith.constant 1.000000e+00 : f32
    %185 = vector.broadcast %cst_53 : f32 to vector<2x48xf32>
    %186 = arith.addf %185, %184 : vector<2x48xf32>
    %187 = arith.divf %185, %186 : vector<2x48xf32>
    %188 = vector.extract_strided_slice %181 {offsets = [0, 0], sizes = [2, 48], strides = [1, 1]} : vector<2x64xf32> to vector<2x48xf32>
    %189 = arith.negf %188 : vector<2x48xf32>
    %190 = math.exp %189 : vector<2x48xf32>
    %cst_54 = arith.constant 1.000000e+00 : f32
    %191 = vector.broadcast %cst_54 : f32 to vector<2x48xf32>
    %192 = arith.addf %191, %190 : vector<2x48xf32>
    %193 = arith.divf %191, %192 : vector<2x48xf32>
    %194 = vector.extract_strided_slice %177 {offsets = [0, 48], sizes = [2, 16], strides = [1, 1]} : vector<2x64xf32> to vector<2x16xf32>
    %195 = math.tanh %194 : vector<2x16xf32>
    %196 = vector.extract_strided_slice %181 {offsets = [0, 48], sizes = [2, 16], strides = [1, 1]} : vector<2x64xf32> to vector<2x16xf32>
    %197 = math.tanh %196 : vector<2x16xf32>
    %198 = vector.extract_strided_slice %187 {offsets = [0, 16], sizes = [2, 16], strides = [1, 1]} : vector<2x48xf32> to vector<2x16xf32>
    %199 = arith.mulf %198, %154 : vector<2x16xf32>
    %200 = vector.extract_strided_slice %187 {offsets = [0, 0], sizes = [2, 16], strides = [1, 1]} : vector<2x48xf32> to vector<2x16xf32>
    %201 = arith.mulf %200, %195 : vector<2x16xf32>
    %202 = arith.addf %199, %201 : vector<2x16xf32>
    %203 = vector.extract_strided_slice %193 {offsets = [0, 16], sizes = [2, 16], strides = [1, 1]} : vector<2x48xf32> to vector<2x16xf32>
    %204 = arith.mulf %203, %159 : vector<2x16xf32>
    %205 = vector.extract_strided_slice %193 {offsets = [0, 0], sizes = [2, 16], strides = [1, 1]} : vector<2x48xf32> to vector<2x16xf32>
    %206 = arith.mulf %205, %197 : vector<2x16xf32>
    %207 = arith.addf %204, %206 : vector<2x16xf32>
    %208 = vector.extract_strided_slice %187 {offsets = [0, 32], sizes = [2, 16], strides = [1, 1]} : vector<2x48xf32> to vector<2x16xf32>
    %209 = math.tanh %202 : vector<2x16xf32>
    %210 = arith.mulf %208, %209 : vector<2x16xf32>
    %211 = vector.extract_strided_slice %193 {offsets = [0, 32], sizes = [2, 16], strides = [1, 1]} : vector<2x48xf32> to vector<2x16xf32>
    %212 = math.tanh %207 : vector<2x16xf32>
    %213 = arith.mulf %211, %212 : vector<2x16xf32>
    %214 = tpu.concatenate %210, %213 in 1 : vector<2x16xf32>, vector<2x16xf32> -> vector<2x32xf32>
    %c0_55 = arith.constant 0 : index
    %c2 = arith.constant 2 : index
    %c0_56 = arith.constant 0 : index
    %215 = vector.load %arg12[%c0_55, %c2, %c0_56] : memref<2x8x32xf32, #tpu.memory_space<vmem>>, vector<2x1x16xf32>
    %216 = vector.shape_cast %215 : vector<2x1x16xf32> to vector<2x16xf32>
    %217 = vector.shape_cast %210 : vector<2x16xf32> to vector<2x1x16xf32>
    tpu.vector_store %arg12[%c0_55, %c2, %c0_56], %217 {strides = array<i32>} : memref<2x8x32xf32, #tpu.memory_space<vmem>>, vector<2x1x16xf32>,
    %c0_57 = arith.constant 0 : index
    %c5 = arith.constant 5 : index
    %c16_58 = arith.constant 16 : index
    %218 = vector.load %arg12[%c0_57, %c5, %c16_58] : memref<2x8x32xf32, #tpu.memory_space<vmem>>, vector<2x1x16xf32>
    %219 = vector.shape_cast %218 : vector<2x1x16xf32> to vector<2x16xf32>
    %220 = vector.shape_cast %213 : vector<2x16xf32> to vector<2x1x16xf32>
    tpu.vector_store %arg12[%c0_57, %c5, %c16_58], %220 {strides = array<i32>} : memref<2x8x32xf32, #tpu.memory_space<vmem>>, vector<2x1x16xf32>,
    %cst_59 = arith.constant dense<0.000000e+00> : vector<2x128xf32>
    %221 = tpu.matmul %214, %68, %cst_59 {dimension_numbers = #tpu.dot_dimension_numbers<[1], [0], [0], [1], [0, 0, 1, 1], [], []>} : vector<2x32xf32>, vector<32x128xf32>, vector<2x128xf32> -> vector<2x128xf32>
    %222 = vector.extract_strided_slice %66 {offsets = [0, 3, 0], sizes = [2, 1, 64], strides = [1, 1, 1]} : vector<2x8x128xf32> to vector<2x1x64xf32>
    %223 = vector.shape_cast %222 : vector<2x1x64xf32> to vector<2x64xf32>
    %224 = vector.extract_strided_slice %221 {offsets = [0, 0], sizes = [2, 64], strides = [1, 1]} : vector<2x128xf32> to vector<2x64xf32>
    %225 = arith.addf %223, %224 : vector<2x64xf32>
    %226 = vector.extract_strided_slice %66 {offsets = [0, 4, 64], sizes = [2, 1, 64], strides = [1, 1, 1]} : vector<2x8x128xf32> to vector<2x1x64xf32>
    %227 = vector.shape_cast %226 : vector<2x1x64xf32> to vector<2x64xf32>
    %228 = vector.extract_strided_slice %221 {offsets = [0, 64], sizes = [2, 64], strides = [1, 1]} : vector<2x128xf32> to vector<2x64xf32>
    %229 = arith.addf %227, %228 : vector<2x64xf32>
    %230 = vector.extract_strided_slice %225 {offsets = [0, 0], sizes = [2, 48], strides = [1, 1]} : vector<2x64xf32> to vector<2x48xf32>
    %231 = arith.negf %230 : vector<2x48xf32>
    %232 = math.exp %231 : vector<2x48xf32>
    %cst_60 = arith.constant 1.000000e+00 : f32
    %233 = vector.broadcast %cst_60 : f32 to vector<2x48xf32>
    %234 = arith.addf %233, %232 : vector<2x48xf32>
    %235 = arith.divf %233, %234 : vector<2x48xf32>
    %236 = vector.extract_strided_slice %229 {offsets = [0, 0], sizes = [2, 48], strides = [1, 1]} : vector<2x64xf32> to vector<2x48xf32>
    %237 = arith.negf %236 : vector<2x48xf32>
    %238 = math.exp %237 : vector<2x48xf32>
    %cst_61 = arith.constant 1.000000e+00 : f32
    %239 = vector.broadcast %cst_61 : f32 to vector<2x48xf32>
    %240 = arith.addf %239, %238 : vector<2x48xf32>
    %241 = arith.divf %239, %240 : vector<2x48xf32>
    %242 = vector.extract_strided_slice %225 {offsets = [0, 48], sizes = [2, 16], strides = [1, 1]} : vector<2x64xf32> to vector<2x16xf32>
    %243 = math.tanh %242 : vector<2x16xf32>
    %244 = vector.extract_strided_slice %229 {offsets = [0, 48], sizes = [2, 16], strides = [1, 1]} : vector<2x64xf32> to vector<2x16xf32>
    %245 = math.tanh %244 : vector<2x16xf32>
    %246 = vector.extract_strided_slice %235 {offsets = [0, 16], sizes = [2, 16], strides = [1, 1]} : vector<2x48xf32> to vector<2x16xf32>
    %247 = arith.mulf %246, %202 : vector<2x16xf32>
    %248 = vector.extract_strided_slice %235 {offsets = [0, 0], sizes = [2, 16], strides = [1, 1]} : vector<2x48xf32> to vector<2x16xf32>
    %249 = arith.mulf %248, %243 : vector<2x16xf32>
    %250 = arith.addf %247, %249 : vector<2x16xf32>
    %251 = vector.extract_strided_slice %241 {offsets = [0, 16], sizes = [2, 16], strides = [1, 1]} : vector<2x48xf32> to vector<2x16xf32>
    %252 = arith.mulf %251, %207 : vector<2x16xf32>
    %253 = vector.extract_strided_slice %241 {offsets = [0, 0], sizes = [2, 16], strides = [1, 1]} : vector<2x48xf32> to vector<2x16xf32>
    %254 = arith.mulf %253, %245 : vector<2x16xf32>
    %255 = arith.addf %252, %254 : vector<2x16xf32>
    %256 = vector.extract_strided_slice %235 {offsets = [0, 32], sizes = [2, 16], strides = [1, 1]} : vector<2x48xf32> to vector<2x16xf32>
    %257 = math.tanh %250 : vector<2x16xf32>
    %258 = arith.mulf %256, %257 : vector<2x16xf32>
    %259 = vector.extract_strided_slice %241 {offsets = [0, 32], sizes = [2, 16], strides = [1, 1]} : vector<2x48xf32> to vector<2x16xf32>
    %260 = math.tanh %255 : vector<2x16xf32>
    %261 = arith.mulf %259, %260 : vector<2x16xf32>
    %262 = tpu.concatenate %258, %261 in 1 : vector<2x16xf32>, vector<2x16xf32> -> vector<2x32xf32>
    %c0_62 = arith.constant 0 : index
    %c3 = arith.constant 3 : index
    %c0_63 = arith.constant 0 : index
    %263 = vector.load %arg12[%c0_62, %c3, %c0_63] : memref<2x8x32xf32, #tpu.memory_space<vmem>>, vector<2x1x16xf32>
    %264 = vector.shape_cast %263 : vector<2x1x16xf32> to vector<2x16xf32>
    %265 = vector.shape_cast %258 : vector<2x16xf32> to vector<2x1x16xf32>
    tpu.vector_store %arg12[%c0_62, %c3, %c0_63], %265 {strides = array<i32>} : memref<2x8x32xf32, #tpu.memory_space<vmem>>, vector<2x1x16xf32>,
    %c0_64 = arith.constant 0 : index
    %c4 = arith.constant 4 : index
    %c16_65 = arith.constant 16 : index
    %266 = vector.load %arg12[%c0_64, %c4, %c16_65] : memref<2x8x32xf32, #tpu.memory_space<vmem>>, vector<2x1x16xf32>
    %267 = vector.shape_cast %266 : vector<2x1x16xf32> to vector<2x16xf32>
    %268 = vector.shape_cast %261 : vector<2x16xf32> to vector<2x1x16xf32>
    tpu.vector_store %arg12[%c0_64, %c4, %c16_65], %268 {strides = array<i32>} : memref<2x8x32xf32, #tpu.memory_space<vmem>>, vector<2x1x16xf32>,
    %cst_66 = arith.constant dense<0.000000e+00> : vector<2x128xf32>
    %269 = tpu.matmul %262, %68, %cst_66 {dimension_numbers = #tpu.dot_dimension_numbers<[1], [0], [0], [1], [0, 0, 1, 1], [], []>} : vector<2x32xf32>, vector<32x128xf32>, vector<2x128xf32> -> vector<2x128xf32>
    %270 = vector.extract_strided_slice %66 {offsets = [0, 4, 0], sizes = [2, 1, 64], strides = [1, 1, 1]} : vector<2x8x128xf32> to vector<2x1x64xf32>
    %271 = vector.shape_cast %270 : vector<2x1x64xf32> to vector<2x64xf32>
    %272 = vector.extract_strided_slice %269 {offsets = [0, 0], sizes = [2, 64], strides = [1, 1]} : vector<2x128xf32> to vector<2x64xf32>
    %273 = arith.addf %271, %272 : vector<2x64xf32>
    %274 = vector.extract_strided_slice %66 {offsets = [0, 3, 64], sizes = [2, 1, 64], strides = [1, 1, 1]} : vector<2x8x128xf32> to vector<2x1x64xf32>
    %275 = vector.shape_cast %274 : vector<2x1x64xf32> to vector<2x64xf32>
    %276 = vector.extract_strided_slice %269 {offsets = [0, 64], sizes = [2, 64], strides = [1, 1]} : vector<2x128xf32> to vector<2x64xf32>
    %277 = arith.addf %275, %276 : vector<2x64xf32>
    %278 = vector.extract_strided_slice %273 {offsets = [0, 0], sizes = [2, 48], strides = [1, 1]} : vector<2x64xf32> to vector<2x48xf32>
    %279 = arith.negf %278 : vector<2x48xf32>
    %280 = math.exp %279 : vector<2x48xf32>
    %cst_67 = arith.constant 1.000000e+00 : f32
    %281 = vector.broadcast %cst_67 : f32 to vector<2x48xf32>
    %282 = arith.addf %281, %280 : vector<2x48xf32>
    %283 = arith.divf %281, %282 : vector<2x48xf32>
    %284 = vector.extract_strided_slice %277 {offsets = [0, 0], sizes = [2, 48], strides = [1, 1]} : vector<2x64xf32> to vector<2x48xf32>
    %285 = arith.negf %284 : vector<2x48xf32>
    %286 = math.exp %285 : vector<2x48xf32>
    %cst_68 = arith.constant 1.000000e+00 : f32
    %287 = vector.broadcast %cst_68 : f32 to vector<2x48xf32>
    %288 = arith.addf %287, %286 : vector<2x48xf32>
    %289 = arith.divf %287, %288 : vector<2x48xf32>
    %290 = vector.extract_strided_slice %273 {offsets = [0, 48], sizes = [2, 16], strides = [1, 1]} : vector<2x64xf32> to vector<2x16xf32>
    %291 = math.tanh %290 : vector<2x16xf32>
    %292 = vector.extract_strided_slice %277 {offsets = [0, 48], sizes = [2, 16], strides = [1, 1]} : vector<2x64xf32> to vector<2x16xf32>
    %293 = math.tanh %292 : vector<2x16xf32>
    %294 = vector.extract_strided_slice %283 {offsets = [0, 16], sizes = [2, 16], strides = [1, 1]} : vector<2x48xf32> to vector<2x16xf32>
    %295 = arith.mulf %294, %250 : vector<2x16xf32>
    %296 = vector.extract_strided_slice %283 {offsets = [0, 0], sizes = [2, 16], strides = [1, 1]} : vector<2x48xf32> to vector<2x16xf32>
    %297 = arith.mulf %296, %291 : vector<2x16xf32>
    %298 = arith.addf %295, %297 : vector<2x16xf32>
    %299 = vector.extract_strided_slice %289 {offsets = [0, 16], sizes = [2, 16], strides = [1, 1]} : vector<2x48xf32> to vector<2x16xf32>
    %300 = arith.mulf %299, %255 : vector<2x16xf32>
    %301 = vector.extract_strided_slice %289 {offsets = [0, 0], sizes = [2, 16], strides = [1, 1]} : vector<2x48xf32> to vector<2x16xf32>
    %302 = arith.mulf %301, %293 : vector<2x16xf32>
    %303 = arith.addf %300, %302 : vector<2x16xf32>
    %304 = vector.extract_strided_slice %283 {offsets = [0, 32], sizes = [2, 16], strides = [1, 1]} : vector<2x48xf32> to vector<2x16xf32>
    %305 = math.tanh %298 : vector<2x16xf32>
    %306 = arith.mulf %304, %305 : vector<2x16xf32>
    %307 = vector.extract_strided_slice %289 {offsets = [0, 32], sizes = [2, 16], strides = [1, 1]} : vector<2x48xf32> to vector<2x16xf32>
    %308 = math.tanh %303 : vector<2x16xf32>
    %309 = arith.mulf %307, %308 : vector<2x16xf32>
    %310 = tpu.concatenate %306, %309 in 1 : vector<2x16xf32>, vector<2x16xf32> -> vector<2x32xf32>
    %c0_69 = arith.constant 0 : index
    %c4_70 = arith.constant 4 : index
    %c0_71 = arith.constant 0 : index
    %311 = vector.load %arg12[%c0_69, %c4_70, %c0_71] : memref<2x8x32xf32, #tpu.memory_space<vmem>>, vector<2x1x16xf32>
    %312 = vector.shape_cast %311 : vector<2x1x16xf32> to vector<2x16xf32>
    %313 = vector.shape_cast %306 : vector<2x16xf32> to vector<2x1x16xf32>
    tpu.vector_store %arg12[%c0_69, %c4_70, %c0_71], %313 {strides = array<i32>} : memref<2x8x32xf32, #tpu.memory_space<vmem>>, vector<2x1x16xf32>,
    %c0_72 = arith.constant 0 : index
    %c3_73 = arith.constant 3 : index
    %c16_74 = arith.constant 16 : index
    %314 = vector.load %arg12[%c0_72, %c3_73, %c16_74] : memref<2x8x32xf32, #tpu.memory_space<vmem>>, vector<2x1x16xf32>
    %315 = vector.shape_cast %314 : vector<2x1x16xf32> to vector<2x16xf32>
    %316 = vector.shape_cast %309 : vector<2x16xf32> to vector<2x1x16xf32>
    tpu.vector_store %arg12[%c0_72, %c3_73, %c16_74], %316 {strides = array<i32>} : memref<2x8x32xf32, #tpu.memory_space<vmem>>, vector<2x1x16xf32>,
    %cst_75 = arith.constant dense<0.000000e+00> : vector<2x128xf32>
    %317 = tpu.matmul %310, %68, %cst_75 {dimension_numbers = #tpu.dot_dimension_numbers<[1], [0], [0], [1], [0, 0, 1, 1], [], []>} : vector<2x32xf32>, vector<32x128xf32>, vector<2x128xf32> -> vector<2x128xf32>
    %318 = vector.extract_strided_slice %66 {offsets = [0, 5, 0], sizes = [2, 1, 64], strides = [1, 1, 1]} : vector<2x8x128xf32> to vector<2x1x64xf32>
    %319 = vector.shape_cast %318 : vector<2x1x64xf32> to vector<2x64xf32>
    %320 = vector.extract_strided_slice %317 {offsets = [0, 0], sizes = [2, 64], strides = [1, 1]} : vector<2x128xf32> to vector<2x64xf32>
    %321 = arith.addf %319, %320 : vector<2x64xf32>
    %322 = vector.extract_strided_slice %66 {offsets = [0, 2, 64], sizes = [2, 1, 64], strides = [1, 1, 1]} : vector<2x8x128xf32> to vector<2x1x64xf32>
    %323 = vector.shape_cast %322 : vector<2x1x64xf32> to vector<2x64xf32>
    %324 = vector.extract_strided_slice %317 {offsets = [0, 64], sizes = [2, 64], strides = [1, 1]} : vector<2x128xf32> to vector<2x64xf32>
    %325 = arith.addf %323, %324 : vector<2x64xf32>
    %326 = vector.extract_strided_slice %321 {offsets = [0, 0], sizes = [2, 48], strides = [1, 1]} : vector<2x64xf32> to vector<2x48xf32>
    %327 = arith.negf %326 : vector<2x48xf32>
    %328 = math.exp %327 : vector<2x48xf32>
    %cst_76 = arith.constant 1.000000e+00 : f32
    %329 = vector.broadcast %cst_76 : f32 to vector<2x48xf32>
    %330 = arith.addf %329, %328 : vector<2x48xf32>
    %331 = arith.divf %329, %330 : vector<2x48xf32>
    %332 = vector.extract_strided_slice %325 {offsets = [0, 0], sizes = [2, 48], strides = [1, 1]} : vector<2x64xf32> to vector<2x48xf32>
    %333 = arith.negf %332 : vector<2x48xf32>
    %334 = math.exp %333 : vector<2x48xf32>
    %cst_77 = arith.constant 1.000000e+00 : f32
    %335 = vector.broadcast %cst_77 : f32 to vector<2x48xf32>
    %336 = arith.addf %335, %334 : vector<2x48xf32>
    %337 = arith.divf %335, %336 : vector<2x48xf32>
    %338 = vector.extract_strided_slice %321 {offsets = [0, 48], sizes = [2, 16], strides = [1, 1]} : vector<2x64xf32> to vector<2x16xf32>
    %339 = math.tanh %338 : vector<2x16xf32>
    %340 = vector.extract_strided_slice %325 {offsets = [0, 48], sizes = [2, 16], strides = [1, 1]} : vector<2x64xf32> to vector<2x16xf32>
    %341 = math.tanh %340 : vector<2x16xf32>
    %342 = vector.extract_strided_slice %331 {offsets = [0, 16], sizes = [2, 16], strides = [1, 1]} : vector<2x48xf32> to vector<2x16xf32>
    %343 = arith.mulf %342, %298 : vector<2x16xf32>
    %344 = vector.extract_strided_slice %331 {offsets = [0, 0], sizes = [2, 16], strides = [1, 1]} : vector<2x48xf32> to vector<2x16xf32>
    %345 = arith.mulf %344, %339 : vector<2x16xf32>
    %346 = arith.addf %343, %345 : vector<2x16xf32>
    %347 = vector.extract_strided_slice %337 {offsets = [0, 16], sizes = [2, 16], strides = [1, 1]} : vector<2x48xf32> to vector<2x16xf32>
    %348 = arith.mulf %347, %303 : vector<2x16xf32>
    %349 = vector.extract_strided_slice %337 {offsets = [0, 0], sizes = [2, 16], strides = [1, 1]} : vector<2x48xf32> to vector<2x16xf32>
    %350 = arith.mulf %349, %341 : vector<2x16xf32>
    %351 = arith.addf %348, %350 : vector<2x16xf32>
    %352 = vector.extract_strided_slice %331 {offsets = [0, 32], sizes = [2, 16], strides = [1, 1]} : vector<2x48xf32> to vector<2x16xf32>
    %353 = math.tanh %346 : vector<2x16xf32>
    %354 = arith.mulf %352, %353 : vector<2x16xf32>
    %355 = vector.extract_strided_slice %337 {offsets = [0, 32], sizes = [2, 16], strides = [1, 1]} : vector<2x48xf32> to vector<2x16xf32>
    %356 = math.tanh %351 : vector<2x16xf32>
    %357 = arith.mulf %355, %356 : vector<2x16xf32>
    %358 = tpu.concatenate %354, %357 in 1 : vector<2x16xf32>, vector<2x16xf32> -> vector<2x32xf32>
    %c0_78 = arith.constant 0 : index
    %c5_79 = arith.constant 5 : index
    %c0_80 = arith.constant 0 : index
    %359 = vector.load %arg12[%c0_78, %c5_79, %c0_80] : memref<2x8x32xf32, #tpu.memory_space<vmem>>, vector<2x1x16xf32>
    %360 = vector.shape_cast %359 : vector<2x1x16xf32> to vector<2x16xf32>
    %361 = vector.shape_cast %354 : vector<2x16xf32> to vector<2x1x16xf32>
    tpu.vector_store %arg12[%c0_78, %c5_79, %c0_80], %361 {strides = array<i32>} : memref<2x8x32xf32, #tpu.memory_space<vmem>>, vector<2x1x16xf32>,
    %c0_81 = arith.constant 0 : index
    %c2_82 = arith.constant 2 : index
    %c16_83 = arith.constant 16 : index
    %362 = vector.load %arg12[%c0_81, %c2_82, %c16_83] : memref<2x8x32xf32, #tpu.memory_space<vmem>>, vector<2x1x16xf32>
    %363 = vector.shape_cast %362 : vector<2x1x16xf32> to vector<2x16xf32>
    %364 = vector.shape_cast %357 : vector<2x16xf32> to vector<2x1x16xf32>
    tpu.vector_store %arg12[%c0_81, %c2_82, %c16_83], %364 {strides = array<i32>} : memref<2x8x32xf32, #tpu.memory_space<vmem>>, vector<2x1x16xf32>,
    %cst_84 = arith.constant dense<0.000000e+00> : vector<2x128xf32>
    %365 = tpu.matmul %358, %68, %cst_84 {dimension_numbers = #tpu.dot_dimension_numbers<[1], [0], [0], [1], [0, 0, 1, 1], [], []>} : vector<2x32xf32>, vector<32x128xf32>, vector<2x128xf32> -> vector<2x128xf32>
    %366 = vector.extract_strided_slice %66 {offsets = [0, 6, 0], sizes = [2, 1, 64], strides = [1, 1, 1]} : vector<2x8x128xf32> to vector<2x1x64xf32>
    %367 = vector.shape_cast %366 : vector<2x1x64xf32> to vector<2x64xf32>
    %368 = vector.extract_strided_slice %365 {offsets = [0, 0], sizes = [2, 64], strides = [1, 1]} : vector<2x128xf32> to vector<2x64xf32>
    %369 = arith.addf %367, %368 : vector<2x64xf32>
    %370 = vector.extract_strided_slice %66 {offsets = [0, 1, 64], sizes = [2, 1, 64], strides = [1, 1, 1]} : vector<2x8x128xf32> to vector<2x1x64xf32>
    %371 = vector.shape_cast %370 : vector<2x1x64xf32> to vector<2x64xf32>
    %372 = vector.extract_strided_slice %365 {offsets = [0, 64], sizes = [2, 64], strides = [1, 1]} : vector<2x128xf32> to vector<2x64xf32>
    %373 = arith.addf %371, %372 : vector<2x64xf32>
    %374 = vector.extract_strided_slice %369 {offsets = [0, 0], sizes = [2, 48], strides = [1, 1]} : vector<2x64xf32> to vector<2x48xf32>
    %375 = arith.negf %374 : vector<2x48xf32>
    %376 = math.exp %375 : vector<2x48xf32>
    %cst_85 = arith.constant 1.000000e+00 : f32
    %377 = vector.broadcast %cst_85 : f32 to vector<2x48xf32>
    %378 = arith.addf %377, %376 : vector<2x48xf32>
    %379 = arith.divf %377, %378 : vector<2x48xf32>
    %380 = vector.extract_strided_slice %373 {offsets = [0, 0], sizes = [2, 48], strides = [1, 1]} : vector<2x64xf32> to vector<2x48xf32>
    %381 = arith.negf %380 : vector<2x48xf32>
    %382 = math.exp %381 : vector<2x48xf32>
    %cst_86 = arith.constant 1.000000e+00 : f32
    %383 = vector.broadcast %cst_86 : f32 to vector<2x48xf32>
    %384 = arith.addf %383, %382 : vector<2x48xf32>
    %385 = arith.divf %383, %384 : vector<2x48xf32>
    %386 = vector.extract_strided_slice %369 {offsets = [0, 48], sizes = [2, 16], strides = [1, 1]} : vector<2x64xf32> to vector<2x16xf32>
    %387 = math.tanh %386 : vector<2x16xf32>
    %388 = vector.extract_strided_slice %373 {offsets = [0, 48], sizes = [2, 16], strides = [1, 1]} : vector<2x64xf32> to vector<2x16xf32>
    %389 = math.tanh %388 : vector<2x16xf32>
    %390 = vector.extract_strided_slice %379 {offsets = [0, 16], sizes = [2, 16], strides = [1, 1]} : vector<2x48xf32> to vector<2x16xf32>
    %391 = arith.mulf %390, %346 : vector<2x16xf32>
    %392 = vector.extract_strided_slice %379 {offsets = [0, 0], sizes = [2, 16], strides = [1, 1]} : vector<2x48xf32> to vector<2x16xf32>
    %393 = arith.mulf %392, %387 : vector<2x16xf32>
    %394 = arith.addf %391, %393 : vector<2x16xf32>
    %395 = vector.extract_strided_slice %385 {offsets = [0, 16], sizes = [2, 16], strides = [1, 1]} : vector<2x48xf32> to vector<2x16xf32>
    %396 = arith.mulf %395, %351 : vector<2x16xf32>
    %397 = vector.extract_strided_slice %385 {offsets = [0, 0], sizes = [2, 16], strides = [1, 1]} : vector<2x48xf32> to vector<2x16xf32>
    %398 = arith.mulf %397, %389 : vector<2x16xf32>
    %399 = arith.addf %396, %398 : vector<2x16xf32>
    %400 = vector.extract_strided_slice %379 {offsets = [0, 32], sizes = [2, 16], strides = [1, 1]} : vector<2x48xf32> to vector<2x16xf32>
    %401 = math.tanh %394 : vector<2x16xf32>
    %402 = arith.mulf %400, %401 : vector<2x16xf32>
    %403 = vector.extract_strided_slice %385 {offsets = [0, 32], sizes = [2, 16], strides = [1, 1]} : vector<2x48xf32> to vector<2x16xf32>
    %404 = math.tanh %399 : vector<2x16xf32>
    %405 = arith.mulf %403, %404 : vector<2x16xf32>
    %406 = tpu.concatenate %402, %405 in 1 : vector<2x16xf32>, vector<2x16xf32> -> vector<2x32xf32>
    %c0_87 = arith.constant 0 : index
    %c6_88 = arith.constant 6 : index
    %c0_89 = arith.constant 0 : index
    %407 = vector.load %arg12[%c0_87, %c6_88, %c0_89] : memref<2x8x32xf32, #tpu.memory_space<vmem>>, vector<2x1x16xf32>
    %408 = vector.shape_cast %407 : vector<2x1x16xf32> to vector<2x16xf32>
    %409 = vector.shape_cast %402 : vector<2x16xf32> to vector<2x1x16xf32>
    tpu.vector_store %arg12[%c0_87, %c6_88, %c0_89], %409 {strides = array<i32>} : memref<2x8x32xf32, #tpu.memory_space<vmem>>, vector<2x1x16xf32>,
    %c0_90 = arith.constant 0 : index
    %c1_91 = arith.constant 1 : index
    %c16_92 = arith.constant 16 : index
    %410 = vector.load %arg12[%c0_90, %c1_91, %c16_92] : memref<2x8x32xf32, #tpu.memory_space<vmem>>, vector<2x1x16xf32>
    %411 = vector.shape_cast %410 : vector<2x1x16xf32> to vector<2x16xf32>
    %412 = vector.shape_cast %405 : vector<2x16xf32> to vector<2x1x16xf32>
    tpu.vector_store %arg12[%c0_90, %c1_91, %c16_92], %412 {strides = array<i32>} : memref<2x8x32xf32, #tpu.memory_space<vmem>>, vector<2x1x16xf32>,
    %cst_93 = arith.constant dense<0.000000e+00> : vector<2x128xf32>
    %413 = tpu.matmul %406, %68, %cst_93 {dimension_numbers = #tpu.dot_dimension_numbers<[1], [0], [0], [1], [0, 0, 1, 1], [], []>} : vector<2x32xf32>, vector<32x128xf32>, vector<2x128xf32> -> vector<2x128xf32>
    %414 = vector.extract_strided_slice %66 {offsets = [0, 7, 0], sizes = [2, 1, 64], strides = [1, 1, 1]} : vector<2x8x128xf32> to vector<2x1x64xf32>
    %415 = vector.shape_cast %414 : vector<2x1x64xf32> to vector<2x64xf32>
    %416 = vector.extract_strided_slice %413 {offsets = [0, 0], sizes = [2, 64], strides = [1, 1]} : vector<2x128xf32> to vector<2x64xf32>
    %417 = arith.addf %415, %416 : vector<2x64xf32>
    %418 = vector.extract_strided_slice %66 {offsets = [0, 0, 64], sizes = [2, 1, 64], strides = [1, 1, 1]} : vector<2x8x128xf32> to vector<2x1x64xf32>
    %419 = vector.shape_cast %418 : vector<2x1x64xf32> to vector<2x64xf32>
    %420 = vector.extract_strided_slice %413 {offsets = [0, 64], sizes = [2, 64], strides = [1, 1]} : vector<2x128xf32> to vector<2x64xf32>
    %421 = arith.addf %419, %420 : vector<2x64xf32>
    %422 = vector.extract_strided_slice %417 {offsets = [0, 0], sizes = [2, 48], strides = [1, 1]} : vector<2x64xf32> to vector<2x48xf32>
    %423 = arith.negf %422 : vector<2x48xf32>
    %424 = math.exp %423 : vector<2x48xf32>
    %cst_94 = arith.constant 1.000000e+00 : f32
    %425 = vector.broadcast %cst_94 : f32 to vector<2x48xf32>
    %426 = arith.addf %425, %424 : vector<2x48xf32>
    %427 = arith.divf %425, %426 : vector<2x48xf32>
    %428 = vector.extract_strided_slice %421 {offsets = [0, 0], sizes = [2, 48], strides = [1, 1]} : vector<2x64xf32> to vector<2x48xf32>
    %429 = arith.negf %428 : vector<2x48xf32>
    %430 = math.exp %429 : vector<2x48xf32>
    %cst_95 = arith.constant 1.000000e+00 : f32
    %431 = vector.broadcast %cst_95 : f32 to vector<2x48xf32>
    %432 = arith.addf %431, %430 : vector<2x48xf32>
    %433 = arith.divf %431, %432 : vector<2x48xf32>
    %434 = vector.extract_strided_slice %417 {offsets = [0, 48], sizes = [2, 16], strides = [1, 1]} : vector<2x64xf32> to vector<2x16xf32>
    %435 = math.tanh %434 : vector<2x16xf32>
    %436 = vector.extract_strided_slice %421 {offsets = [0, 48], sizes = [2, 16], strides = [1, 1]} : vector<2x64xf32> to vector<2x16xf32>
    %437 = math.tanh %436 : vector<2x16xf32>
    %438 = vector.extract_strided_slice %427 {offsets = [0, 16], sizes = [2, 16], strides = [1, 1]} : vector<2x48xf32> to vector<2x16xf32>
    %439 = arith.mulf %438, %394 : vector<2x16xf32>
    %440 = vector.extract_strided_slice %427 {offsets = [0, 0], sizes = [2, 16], strides = [1, 1]} : vector<2x48xf32> to vector<2x16xf32>
    %441 = arith.mulf %440, %435 : vector<2x16xf32>
    %442 = arith.addf %439, %441 : vector<2x16xf32>
    %443 = vector.extract_strided_slice %433 {offsets = [0, 16], sizes = [2, 16], strides = [1, 1]} : vector<2x48xf32> to vector<2x16xf32>
    %444 = arith.mulf %443, %399 : vector<2x16xf32>
    %445 = vector.extract_strided_slice %433 {offsets = [0, 0], sizes = [2, 16], strides = [1, 1]} : vector<2x48xf32> to vector<2x16xf32>
    %446 = arith.mulf %445, %437 : vector<2x16xf32>
    %447 = arith.addf %444, %446 : vector<2x16xf32>
    %448 = vector.extract_strided_slice %427 {offsets = [0, 32], sizes = [2, 16], strides = [1, 1]} : vector<2x48xf32> to vector<2x16xf32>
    %449 = math.tanh %442 : vector<2x16xf32>
    %450 = arith.mulf %448, %449 : vector<2x16xf32>
    %451 = vector.extract_strided_slice %433 {offsets = [0, 32], sizes = [2, 16], strides = [1, 1]} : vector<2x48xf32> to vector<2x16xf32>
    %452 = math.tanh %447 : vector<2x16xf32>
    %453 = arith.mulf %451, %452 : vector<2x16xf32>
    %c0_96 = arith.constant 0 : index
    %c7_97 = arith.constant 7 : index
    %c0_98 = arith.constant 0 : index
    %454 = vector.load %arg12[%c0_96, %c7_97, %c0_98] : memref<2x8x32xf32, #tpu.memory_space<vmem>>, vector<2x1x16xf32>
    %455 = vector.shape_cast %454 : vector<2x1x16xf32> to vector<2x16xf32>
    %456 = vector.shape_cast %450 : vector<2x16xf32> to vector<2x1x16xf32>
    tpu.vector_store %arg12[%c0_96, %c7_97, %c0_98], %456 {strides = array<i32>} : memref<2x8x32xf32, #tpu.memory_space<vmem>>, vector<2x1x16xf32>,
    %c0_99 = arith.constant 0 : index
    %c0_100 = arith.constant 0 : index
    %c16_101 = arith.constant 16 : index
    %457 = vector.load %arg12[%c0_99, %c0_100, %c16_101] : memref<2x8x32xf32, #tpu.memory_space<vmem>>, vector<2x1x16xf32>
    %458 = vector.shape_cast %457 : vector<2x1x16xf32> to vector<2x16xf32>
    %459 = vector.shape_cast %453 : vector<2x16xf32> to vector<2x1x16xf32>
    tpu.vector_store %arg12[%c0_99, %c0_100, %c16_101], %459 {strides = array<i32>} : memref<2x8x32xf32, #tpu.memory_space<vmem>>, vector<2x1x16xf32>,
    %c0_102 = arith.constant 0 : index
    %c0_103 = arith.constant 0 : index
    %c0_104 = arith.constant 0 : index
    %460 = vector.load %arg12[%c0_102, %c0_103, %c0_104] : memref<2x8x32xf32, #tpu.memory_space<vmem>>, vector<2x8x32xf32>
    %461 = vector.shape_cast %460 : vector<2x8x32xf32> to vector<2x1x8x32xf32>
    %c0_105 = arith.constant 0 : index
    %c0_106 = arith.constant 0 : index
    %c0_107 = arith.constant 0 : index
    %c0_108 = arith.constant 0 : index
    %462 = vector.load %arg11[%c0_105, %c0_106, %c0_107, %c0_108] : memref<2x1x8x32xf32, #tpu.memory_space<vmem>>, vector<2x1x8x32xf32>
    tpu.vector_store %arg11[%c0_105, %c0_106, %c0_107, %c0_108], %461 {strides = array<i32>} : memref<2x1x8x32xf32, #tpu.memory_space<vmem>>, vector<2x1x8x32xf32>,
    return
  }
  func.func @transform_0(%arg0: i32) -> (i32, i32, i32) {
    %c0_i32 = arith.constant 0 : i32
    %c0_i32_0 = arith.constant 0 : i32
    %c0_i32_1 = arith.constant 0 : i32
    %c0_i32_2 = arith.constant 0 : i32
    return %c0_i32, %c0_i32_0, %c0_i32_1 : i32, i32, i32
  }
  func.func @transform_1(%arg0: i32) -> (i32, i32, i32) {
    %c0_i32 = arith.constant 0 : i32
    %c0_i32_0 = arith.constant 0 : i32
    %c0_i32_1 = arith.constant 0 : i32
    %c0_i32_2 = arith.constant 0 : i32
    return %c0_i32, %c0_i32_0, %c0_i32_1 : i32, i32, i32
  }
  func.func @transform_2(%arg0: i32) -> (i32, i32) {
    %c0_i32 = arith.constant 0 : i32
    %c0_i32_0 = arith.constant 0 : i32
    %c0_i32_1 = arith.constant 0 : i32
    return %c0_i32, %c0_i32_0 : i32, i32
  }
  func.func @transform_3(%arg0: i32) -> (i32, i32, i32) {
    %c0_i32 = arith.constant 0 : i32
    %c0_i32_0 = arith.constant 0 : i32
    %c0_i32_1 = arith.constant 0 : i32
    return %arg0, %c0_i32, %c0_i32_0 : i32, i32, i32
  }
  func.func @transform_4(%arg0: i32) -> (i32, i32, i32) {
    %c0_i32 = arith.constant 0 : i32
    %c0_i32_0 = arith.constant 0 : i32
    %c0_i32_1 = arith.constant 0 : i32
    return %arg0, %c0_i32, %c0_i32_0 : i32, i32, i32
  }
  func.func @transform_5(%arg0: i32) -> (i32, i32, i32) {
    %c0_i32 = arith.constant 0 : i32
    %c0_i32_0 = arith.constant 0 : i32
    %c0_i32_1 = arith.constant 0 : i32
    return %arg0, %c0_i32, %c0_i32_0 : i32, i32, i32
  }
  func.func @transform_6(%arg0: i32) -> (i32, i32, i32) {
    %c0_i32 = arith.constant 0 : i32
    %c0_i32_0 = arith.constant 0 : i32
    %c0_i32_1 = arith.constant 0 : i32
    return %arg0, %c0_i32, %c0_i32_0 : i32, i32, i32
  }
  func.func @transform_7(%arg0: i32) -> (i32, i32, i32) {
    %c0_i32 = arith.constant 0 : i32
    %c0_i32_0 = arith.constant 0 : i32
    %c0_i32_1 = arith.constant 0 : i32
    return %arg0, %c0_i32, %c0_i32_0 : i32, i32, i32
  }
  func.func @transform_8(%arg0: i32) -> (i32, i32, i32) {
    %c0_i32 = arith.constant 0 : i32
    %c0_i32_0 = arith.constant 0 : i32
    %c0_i32_1 = arith.constant 0 : i32
    return %arg0, %c0_i32, %c0_i32_0 : i32, i32, i32
  }
  func.func @transform_9(%arg0: i32) -> (i32, i32, i32) {
    %c0_i32 = arith.constant 0 : i32
    %c0_i32_0 = arith.constant 0 : i32
    %c0_i32_1 = arith.constant 0 : i32
    return %arg0, %c0_i32, %c0_i32_0 : i32, i32, i32
  }
  func.func @transform_10(%arg0: i32) -> (i32, i32, i32, i32) {
    %c0_i32 = arith.constant 0 : i32
    %c0_i32_0 = arith.constant 0 : i32
    %c0_i32_1 = arith.constant 0 : i32
    %c0_i32_2 = arith.constant 0 : i32
    return %c0_i32, %arg0, %c0_i32_0, %c0_i32_1 : i32, i32, i32, i32
  }
}

</mosaic_0001>

<llo_original>
// kernel: tpu_custom_call.1
$region0: #{tpu_custom_call.1}
  #allocation0 [shape = 'u32[]', space=smem, size = 0x4, offset = 0x4, fixed_abs, tag = 'smem constant byte address 0x4 - core index']
  #allocation1 [shape = 'u32[144,128]{1,0:T(1,128)}', space=vmem, size = 0x12000, scoped, tag = 'internal scratch']
  #allocation2 [shape = 'f32[2,8,32]{2,1,0:T(8,128)}', space=vmem, size = 0x2000, scoped, tag = 'scratch operand']
  %s0 = inlined_call_operand.vmem [shape: f32[2,8,32], index: 0, kind: input, shape index: {}]
  %s1 = inlined_call_operand.hbm [shape: f32[2,64,64], index: 1, kind: input, shape index: {}]
  %s2 = inlined_call_operand.vmem [shape: f32[64,32], index: 2, kind: input, shape index: {}]
  %s3 = inlined_call_operand.vmem [shape: f32[2,32,96], index: 3, kind: input, shape index: {}]
  %s4 = inlined_call_operand.vmem [shape: f32[2,1,96], index: 4, kind: input, shape index: {}]
  %s5 = inlined_call_operand.hbm [shape: f32[2,32,128], index: 5, kind: input, shape index: {}]
  %s6 = inlined_call_operand.hbm [shape: f32[2,32,128], index: 6, kind: input, shape index: {}]
  %s7 = inlined_call_operand.vmem [shape: f32[2,1,128], index: 7, kind: input, shape index: {}]
  %s8 = inlined_call_operand.vmem [shape: f32[2,2,32], index: 8, kind: input, shape index: {}]
  %s9 = inlined_call_operand.vmem [shape: f32[2,2,32], index: 9, kind: input, shape index: {}]
  %s10 = inlined_call_operand.hbm [shape: f32[2,2,8,32], index: 10, kind: output, shape index: {}]
  %s11 = sld [smem:[#allocation0]]
  $region89: #{tpu_custom_call.1} parent=0
    _
  %s13 = ssub.s32 1, %s11
  %s14 = scalar_select 0, %s13, %s11
  $region1: #{tpu_custom_call.1} parent=0
    #allocation3 [shape = 'u8[65536]{0}', space=vmem, size = 0x10000, scoped, tag = 'input window, operand 1, single buffered']
    #allocation4 [shape = 's32[2]{0}', space=sflag, size = 0x8, scoped, tag = 'scoped memory for tpu_custom_call.1']
    #allocation5 [shape = 's32[2]{0}', space=sflag, size = 0x8, scoped, tag = 'scoped memory for tpu_custom_call.1']
    #allocation6 [shape = 'u8[32768]{0}', space=vmem, size = 0x8000, scoped, tag = 'input window, operand 5']
    #allocation7 [shape = 's32[2]{0}', space=sflag, size = 0x8, scoped, tag = 'scoped memory for tpu_custom_call.1']
    #allocation8 [shape = 'u8[32768]{0}', space=vmem, size = 0x8000, scoped, tag = 'input window, operand 6']
    #allocation9 [shape = 'u8[16384]{0}', space=vmem, size = 0x4000, scoped, tag = 'output window, operand 0']
    %15 = vsyncpa [#allocation4], 0
    %16 = vsyncpa [#allocation7], 0
    %s17 = scalar_lea.sflag [#allocation7], 1
    %18 = vsyncpa %s17, 0
    %19 = vsyncpa [#allocation5], 0
    %s20 = scalar_lea.sflag [#allocation5], 1
    %21 = vsyncpa %s20, 0
    loop: start=0, step=1, limit=4
    $region2: #{tpu_custom_call.1} parent=1 // loop_pre_header
      _
    $region3: #{tpu_custom_call.1} parent=1 // loop_header
      %s23 = sphi 0, %s27
      %p24 = scmp.ge.s32.totalorder %s23, 4
      %s31 = sphi 0, %s31
      %s33 = sphi 0, %s31
      %s34 = sphi 0, %s33
      %s48 = sphi 0, %s34
      %s52 = sphi 0, %s52
      %s54 = sphi 0, %s52
      %s55 = sphi 0, %s54
      %s69 = sphi 0, %s55
      %s73 = sphi 0, %s73
      %s75 = sphi 0, %s73
      %s76 = sphi 0, %s75
      %s90 = sphi 0, %s76
      %s96 = sphi 0, %s98
      %s99 = sphi 0, %s96
      %s100 = sphi 0, %s99
      %s116 = sphi 0, %s100
      %s122 = sphi 0, %s124
      %s125 = sphi 0, %s122
      %s126 = sphi 0, %s125
      %s142 = sphi 0, %s126
      %s148 = sphi 0, %s150
      %s151 = sphi 0, %s148
      %s152 = sphi 0, %s151
      %s168 = sphi 0, %s152
      %s174 = sphi 0, %s176
      %s177 = sphi 0, %s174
      %s178 = sphi 0, %s177
      %s194 = sphi 0, %s178
      %s200 = sphi 0, %s202
      %s203 = sphi 0, %s200
      %s204 = sphi 0, %s203
      %s220 = sphi 0, %s204
      %s226 = sphi 0, %s228
      %s229 = sphi 0, %s226
      %s230 = sphi 0, %s229
      %s246 = sphi 0, %s230
      %s252 = sphi 0, %s254
      %s255 = sphi 0, %s252
      %s256 = sphi 0, %s255
      %s272 = sphi 0, %s256
      %s278 = sphi 0, %s280
      %s281 = sphi 0, %s278
      %s282 = sphi 0, %s281
      %s298 = sphi 0, %s282
    $region4: #{tpu_custom_call.1} parent=1 // loop_header_branch
      %26 = sbr.rel (%p24) target = $region8
    $region5: #{tpu_custom_call.1} parent=1 // loop_body
      %s28 = ssub.s32 %s23, 1
      %s29 = ssub.s32 %s23, 2
      %s30 = sadd.s32 %s23, 1
      %s32 = sadd.s32 %s31, 1
      %p35 = scmp.eq.s32.totalorder %s23, 1
      %p36 = scmp.ne.s32.totalorder %s31, %s33
      %p37 = scmp.eq.s32.totalorder %s23, 0
      %p38 = por %p36, %p37
      %p39 = scmp.ne.s32.totalorder %s31, %s33
      %p40 = scmp.eq.s32.totalorder %s28, 1
      %p41 = por %p39, %p40
      %p42 = scmp.ne.s32.totalorder %s33, %s34
      %p43 = scmp.eq.s32.totalorder %s28, 0
      %p44 = por %p42, %p43
      %p45 = scmp.ne.s32.totalorder %s33, %s34
      %p46 = scmp.eq.s32.totalorder %s29, 1
      %p47 = por %p45, %p46
      %p49 = scmp.ne.s32.totalorder %s34, %s48
      %p50 = scmp.eq.s32.totalorder %s29, 0
      %p51 = por %p49, %p50
      %s53 = sadd.s32 %s52, 1
      %p56 = scmp.eq.s32.totalorder %s23, 1
      %p57 = scmp.ne.s32.totalorder %s52, %s54
      %p58 = scmp.eq.s32.totalorder %s23, 0
      %p59 = por %p57, %p58
      %p60 = scmp.ne.s32.totalorder %s52, %s54
      %p61 = scmp.eq.s32.totalorder %s28, 1
      %p62 = por %p60, %p61
      %p63 = scmp.ne.s32.totalorder %s54, %s55
      %p64 = scmp.eq.s32.totalorder %s28, 0
      %p65 = por %p63, %p64
      %p66 = scmp.ne.s32.totalorder %s54, %s55
      %p67 = scmp.eq.s32.totalorder %s29, 1
      %p68 = por %p66, %p67
      %p70 = scmp.ne.s32.totalorder %s55, %s69
      %p71 = scmp.eq.s32.totalorder %s29, 0
      %p72 = por %p70, %p71
      %s74 = sadd.s32 %s73, 1
      %p77 = scmp.eq.s32.totalorder %s23, 1
      %p78 = scmp.ne.s32.totalorder %s73, %s75
      %p79 = scmp.eq.s32.totalorder %s23, 0
      %p80 = por %p78, %p79
      %p81 = scmp.ne.s32.totalorder %s73, %s75
      %p82 = scmp.eq.s32.totalorder %s28, 1
      %p83 = por %p81, %p82
      %p84 = scmp.ne.s32.totalorder %s75, %s76
      %p85 = scmp.eq.s32.totalorder %s28, 0
      %p86 = por %p84, %p85
      %p87 = scmp.ne.s32.totalorder %s75, %s76
      %p88 = scmp.eq.s32.totalorder %s29, 1
      %p89 = por %p87, %p88
      %p91 = scmp.ne.s32.totalorder %s76, %s90
      %p92 = scmp.eq.s32.totalorder %s29, 0
      %p93 = por %p91, %p92
      %s94 = ssub.s32 %s23, %s30
      %p95 = scmp.eq.s32.totalorder %s94, 0
      %s97 = sadd.s32 %s96, 1
      %s98 = scalar_select %p95, %s96, %s97
      %p101 = pneg %p95
      %p102 = scmp.eq.s32.totalorder %s23, 1
      %p103 = por %p101, %p102
      %p104 = scmp.ne.s32.totalorder %s96, %s99
      %p105 = scmp.eq.s32.totalorder %s23, 0
      %p106 = por %p104, %p105
      %p107 = scmp.ne.s32.totalorder %s96, %s99
      %p108 = scmp.eq.s32.totalorder %s28, 1
      %p109 = por %p107, %p108
      %p110 = scmp.ne.s32.totalorder %s99, %s100
      %p111 = scmp.eq.s32.totalorder %s28, 0
      %p112 = por %p110, %p111
      %p113 = scmp.ne.s32.totalorder %s99, %s100
      %p114 = scmp.eq.s32.totalorder %s29, 1
      %p115 = por %p113, %p114
      %p117 = scmp.ne.s32.totalorder %s100, %s116
      %p118 = scmp.eq.s32.totalorder %s29, 0
      %p119 = por %p117, %p118
      %s120 = ssub.s32 %s23, %s30
      %p121 = scmp.eq.s32.totalorder %s120, 0
      %s123 = sadd.s32 %s122, 1
      %s124 = scalar_select %p121, %s122, %s123
      %p127 = pneg %p121
      %p128 = scmp.eq.s32.totalorder %s23, 1
      %p129 = por %p127, %p128
      %p130 = scmp.ne.s32.totalorder %s122, %s125
      %p131 = scmp.eq.s32.totalorder %s23, 0
      %p132 = por %p130, %p131
      %p133 = scmp.ne.s32.totalorder %s122, %s125
      %p134 = scmp.eq.s32.totalorder %s28, 1
      %p135 = por %p133, %p134
      %p136 = scmp.ne.s32.totalorder %s125, %s126
      %p137 = scmp.eq.s32.totalorder %s28, 0
      %p138 = por %p136, %p137
      %p139 = scmp.ne.s32.totalorder %s125, %s126
      %p140 = scmp.eq.s32.totalorder %s29, 1
      %p141 = por %p139, %p140
      %p143 = scmp.ne.s32.totalorder %s126, %s142
      %p144 = scmp.eq.s32.totalorder %s29, 0
      %p145 = por %p143, %p144
      %s146 = ssub.s32 %s23, %s30
      %p147 = scmp.eq.s32.totalorder %s146, 0
      %s149 = sadd.s32 %s148, 1
      %s150 = scalar_select %p147, %s148, %s149
      %p153 = pneg %p147
      %p154 = scmp.eq.s32.totalorder %s23, 1
      %p155 = por %p153, %p154
      %p156 = scmp.ne.s32.totalorder %s148, %s151
      %p157 = scmp.eq.s32.totalorder %s23, 0
      %p158 = por %p156, %p157
      %p159 = scmp.ne.s32.totalorder %s148, %s151
      %p160 = scmp.eq.s32.totalorder %s28, 1
      %p161 = por %p159, %p160
      %p162 = scmp.ne.s32.totalorder %s151, %s152
      %p163 = scmp.eq.s32.totalorder %s28, 0
      %p164 = por %p162, %p163
      %p165 = scmp.ne.s32.totalorder %s151, %s152
      %p166 = scmp.eq.s32.totalorder %s29, 1
      %p167 = por %p165, %p166
      %p169 = scmp.ne.s32.totalorder %s152, %s168
      %p170 = scmp.eq.s32.totalorder %s29, 0
      %p171 = por %p169, %p170
      %s172 = ssub.s32 %s23, %s30
      %p173 = scmp.eq.s32.totalorder %s172, 0
      %s175 = sadd.s32 %s174, 1
      %s176 = scalar_select %p173, %s174, %s175
      %p179 = pneg %p173
      %p180 = scmp.eq.s32.totalorder %s23, 1
      %p181 = por %p179, %p180
      %p182 = scmp.ne.s32.totalorder %s174, %s177
      %p183 = scmp.eq.s32.totalorder %s23, 0
      %p184 = por %p182, %p183
      %p185 = scmp.ne.s32.totalorder %s174, %s177
      %p186 = scmp.eq.s32.totalorder %s28, 1
      %p187 = por %p185, %p186
      %p188 = scmp.ne.s32.totalorder %s177, %s178
      %p189 = scmp.eq.s32.totalorder %s28, 0
      %p190 = por %p188, %p189
      %p191 = scmp.ne.s32.totalorder %s177, %s178
      %p192 = scmp.eq.s32.totalorder %s29, 1
      %p193 = por %p191, %p192
      %p195 = scmp.ne.s32.totalorder %s178, %s194
      %p196 = scmp.eq.s32.totalorder %s29, 0
      %p197 = por %p195, %p196
      %s198 = ssub.s32 %s23, %s30
      %p199 = scmp.eq.s32.totalorder %s198, 0
      %s201 = sadd.s32 %s200, 1
      %s202 = scalar_select %p199, %s200, %s201
      %p205 = pneg %p199
      %p206 = scmp.eq.s32.totalorder %s23, 1
      %p207 = por %p205, %p206
      %p208 = scmp.ne.s32.totalorder %s200, %s203
      %p209 = scmp.eq.s32.totalorder %s23, 0
      %p210 = por %p208, %p209
      %p211 = scmp.ne.s32.totalorder %s200, %s203
      %p212 = scmp.eq.s32.totalorder %s28, 1
      %p213 = por %p211, %p212
      %p214 = scmp.ne.s32.totalorder %s203, %s204
      %p215 = scmp.eq.s32.totalorder %s28, 0
      %p216 = por %p214, %p215
      %p217 = scmp.ne.s32.totalorder %s203, %s204
      %p218 = scmp.eq.s32.totalorder %s29, 1
      %p219 = por %p217, %p218
      %p221 = scmp.ne.s32.totalorder %s204, %s220
      %p222 = scmp.eq.s32.totalorder %s29, 0
      %p223 = por %p221, %p222
      %s224 = ssub.s32 %s23, %s30
      %p225 = scmp.eq.s32.totalorder %s224, 0
      %s227 = sadd.s32 %s226, 1
      %s228 = scalar_select %p225, %s226, %s227
      %p231 = pneg %p225
      %p232 = scmp.eq.s32.totalorder %s23, 1
      %p233 = por %p231, %p232
      %p234 = scmp.ne.s32.totalorder %s226, %s229
      %p235 = scmp.eq.s32.totalorder %s23, 0
      %p236 = por %p234, %p235
      %p237 = scmp.ne.s32.totalorder %s226, %s229
      %p238 = scmp.eq.s32.totalorder %s28, 1
      %p239 = por %p237, %p238
      %p240 = scmp.ne.s32.totalorder %s229, %s230
      %p241 = scmp.eq.s32.totalorder %s28, 0
      %p242 = por %p240, %p241
      %p243 = scmp.ne.s32.totalorder %s229, %s230
      %p244 = scmp.eq.s32.totalorder %s29, 1
      %p245 = por %p243, %p244
      %p247 = scmp.ne.s32.totalorder %s230, %s246
      %p248 = scmp.eq.s32.totalorder %s29, 0
      %p249 = por %p247, %p248
      %s250 = ssub.s32 %s23, %s30
      %p251 = scmp.eq.s32.totalorder %s250, 0
      %s253 = sadd.s32 %s252, 1
      %s254 = scalar_select %p251, %s252, %s253
      %p257 = pneg %p251
      %p258 = scmp.eq.s32.totalorder %s23, 1
      %p259 = por %p257, %p258
      %p260 = scmp.ne.s32.totalorder %s252, %s255
      %p261 = scmp.eq.s32.totalorder %s23, 0
      %p262 = por %p260, %p261
      %p263 = scmp.ne.s32.totalorder %s252, %s255
      %p264 = scmp.eq.s32.totalorder %s28, 1
      %p265 = por %p263, %p264
      %p266 = scmp.ne.s32.totalorder %s255, %s256
      %p267 = scmp.eq.s32.totalorder %s28, 0
      %p268 = por %p266, %p267
      %p269 = scmp.ne.s32.totalorder %s255, %s256
      %p270 = scmp.eq.s32.totalorder %s29, 1
      %p271 = por %p269, %p270
      %p273 = scmp.ne.s32.totalorder %s256, %s272
      %p274 = scmp.eq.s32.totalorder %s29, 0
      %p275 = por %p273, %p274
      %s276 = ssub.s32 %s23, %s30
      %p277 = scmp.eq.s32.totalorder %s276, 0
      %s279 = sadd.s32 %s278, 1
      %s280 = scalar_select %p277, %s278, %s279
      %p283 = pneg %p277
      %p284 = scmp.eq.s32.totalorder %s23, 1
      %p285 = por %p283, %p284
      %p286 = scmp.ne.s32.totalorder %s278, %s281
      %p287 = scmp.eq.s32.totalorder %s23, 0
      %p288 = por %p286, %p287
      %p289 = scmp.ne.s32.totalorder %s278, %s281
      %p290 = scmp.eq.s32.totalorder %s28, 1
      %p291 = por %p289, %p290
      %p292 = scmp.ne.s32.totalorder %s281, %s282
      %p293 = scmp.eq.s32.totalorder %s28, 0
      %p294 = por %p292, %p293
      %p295 = scmp.ne.s32.totalorder %s281, %s282
      %p296 = scmp.eq.s32.totalorder %s29, 1
      %p297 = por %p295, %p296
      %p299 = scmp.ne.s32.totalorder %s282, %s298
      %p300 = scmp.eq.s32.totalorder %s29, 0
      %p301 = por %p299, %p300
      %p302 = scmp.le.s32.totalorder 1, %s23
      %p303 = scmp.lt.s32.totalorder %s23, 3
      %p304 = pnand %p302, %p303
      %p305 = pneg %p304
      // Predicated region
      $region9: #{tpu_custom_call.1} parent=5 // pred_check
        _
      $region10: #{tpu_custom_call.1} parent=5 // pred_check_branch
        %307 = sbr.rel (%p304) target = $region12
      $region11: #{tpu_custom_call.1} parent=5 // pred_region
        %s308 = ssub.s32 %s23, 1
        // Predicated region
        $region13: #{tpu_custom_call.1} parent=11 // pred_check
          %p309 = pneg %p44
        $region14: #{tpu_custom_call.1} parent=11 // pred_check_branch
          %311 = sbr.rel (%p309) target = $region16
        $region15: #{tpu_custom_call.1} parent=11 // pred_region
          _
        $region16: #{tpu_custom_call.1} parent=11 // pred_fallthru
          _
        // Predicated region
        $region17: #{tpu_custom_call.1} parent=11 // pred_check
          %p312 = pneg %p65
        $region18: #{tpu_custom_call.1} parent=11 // pred_check_branch
          %314 = sbr.rel (%p312) target = $region20
        $region19: #{tpu_custom_call.1} parent=11 // pred_region
          %s316 = ssub.s32 2048, 2048
          %317 = vsyncadd [#allocation4], %s316
          %s318 = sshll.u32 [#allocation3], 4
          %s319 = int_to_ptr.vmem [resolvable:$true] %s318
          %324 = dma.hbm_to_vmem [thread:$0]  %s1, 2048, %s319, [#allocation4], 128, 128, 8
        $region20: #{tpu_custom_call.1} parent=11 // pred_fallthru
          _
        // Predicated region
        $region21: #{tpu_custom_call.1} parent=11 // pred_check
          %p325 = pneg %p86
        $region22: #{tpu_custom_call.1} parent=11 // pred_check_branch
          %327 = sbr.rel (%p325) target = $region24
        $region23: #{tpu_custom_call.1} parent=11 // pred_region
          _
        $region24: #{tpu_custom_call.1} parent=11 // pred_fallthru
          _
      $region12: #{tpu_custom_call.1} parent=5 // pred_fallthru
        _
      %p328 = scmp.lt.s32.totalorder %s23, 2
      // Predicated region
      $region25: #{tpu_custom_call.1} parent=5 // pred_check
        %p329 = pneg %p328
      $region26: #{tpu_custom_call.1} parent=5 // pred_check_branch
        %331 = sbr.rel (%p329) target = $region28
      $region27: #{tpu_custom_call.1} parent=5 // pred_region
        // Predicated region
        $region29: #{tpu_custom_call.1} parent=27 // pred_check
          %p332 = pneg %p106
        $region30: #{tpu_custom_call.1} parent=27 // pred_check_branch
          %334 = sbr.rel (%p332) target = $region32
        $region31: #{tpu_custom_call.1} parent=27 // pred_region
          %p335 = scmp.lt.s32.totalorder %s23, 1
          %s336 = scalar_select %p335, %s23, 1
          %s337 = smul.addr %s336, 4
          %s338 = smul.addr %s337, 8
          %s339 = scalar_lea.vmem %s3, %s338
        $region32: #{tpu_custom_call.1} parent=27 // pred_fallthru
          _
        // Predicated region
        $region33: #{tpu_custom_call.1} parent=27 // pred_check
          %p340 = pneg %p132
        $region34: #{tpu_custom_call.1} parent=27 // pred_check_branch
          %342 = sbr.rel (%p340) target = $region36
        $region35: #{tpu_custom_call.1} parent=27 // pred_region
          %p343 = scmp.lt.s32.totalorder %s23, 1
          %s344 = scalar_select %p343, %s23, 1
          %s345 = scalar_lea.vmem %s4, %s344
        $region36: #{tpu_custom_call.1} parent=27 // pred_fallthru
          _
        // Predicated region
        $region37: #{tpu_custom_call.1} parent=27 // pred_check
          %p346 = pneg %p158
        $region38: #{tpu_custom_call.1} parent=27 // pred_check_branch
          %348 = sbr.rel (%p346) target = $region40
        $region39: #{tpu_custom_call.1} parent=27 // pred_region
          %s349 = sand.u32 %s23, 1
          %s350 = scalar_lea.sflag [#allocation7], %s349
          %s351 = sand.u32 %s148, 1
          %s352 = smul.addr %s351, 32
          %s353 = scalar_lea.vmem [#allocation6], %s352
          %s355 = ssub.s32 512, 512
          %356 = vsyncadd %s350, %s355
          %s357 = smul.addr %s23, 4
          %s358 = smul.addr %s357, 128
          %s359 = scalar_lea.hbm %s5, %s358
          %s360 = sshll.u32 %s353, 4
          %s361 = int_to_ptr.vmem [resolvable:$true] %s360
          %366 = dma.hbm_to_vmem [thread:$0]  %s359, 512, %s361, %s350, 128, 128, 8
        $region40: #{tpu_custom_call.1} parent=27 // pred_fallthru
          _
        // Predicated region
        $region41: #{tpu_custom_call.1} parent=27 // pred_check
          %p367 = pneg %p184
        $region42: #{tpu_custom_call.1} parent=27 // pred_check_branch
          %369 = sbr.rel (%p367) target = $region44
        $region43: #{tpu_custom_call.1} parent=27 // pred_region
          %s370 = sand.u32 %s23, 1
          %s371 = scalar_lea.sflag [#allocation7], %s370
          %s372 = sand.u32 %s174, 1
          %s373 = smul.addr %s372, 32
          %s374 = scalar_lea.vmem [#allocation8], %s373
          %s376 = ssub.s32 512, 512
          %377 = vsyncadd %s371, %s376
          %s378 = smul.addr %s23, 4
          %s379 = smul.addr %s378, 128
          %s380 = scalar_lea.hbm %s6, %s379
          %s381 = sshll.u32 %s374, 4
          %s382 = int_to_ptr.vmem [resolvable:$true] %s381
          %387 = dma.hbm_to_vmem [thread:$0]  %s380, 512, %s382, %s371, 128, 128, 8
        $region44: #{tpu_custom_call.1} parent=27 // pred_fallthru
          _
        // Predicated region
        $region45: #{tpu_custom_call.1} parent=27 // pred_check
          %p388 = pneg %p210
        $region46: #{tpu_custom_call.1} parent=27 // pred_check_branch
          %390 = sbr.rel (%p388) target = $region48
        $region47: #{tpu_custom_call.1} parent=27 // pred_region
          %p391 = scmp.lt.s32.totalorder %s23, 1
          %s392 = scalar_select %p391, %s23, 1
          %s393 = scalar_lea.vmem %s7, %s392
        $region48: #{tpu_custom_call.1} parent=27 // pred_fallthru
          _
        // Predicated region
        $region49: #{tpu_custom_call.1} parent=27 // pred_check
          %p394 = pneg %p236
        $region50: #{tpu_custom_call.1} parent=27 // pred_check_branch
          %396 = sbr.rel (%p394) target = $region52
        $region51: #{tpu_custom_call.1} parent=27 // pred_region
          %p397 = scmp.lt.s32.totalorder %s23, 1
          %s398 = scalar_select %p397, %s23, 1
          %s399 = smul.addr %s398, 2
          %s400 = scalar_lea.vmem %s8, %s399
        $region52: #{tpu_custom_call.1} parent=27 // pred_fallthru
          _
        // Predicated region
        $region53: #{tpu_custom_call.1} parent=27 // pred_check
          %p401 = pneg %p262
        $region54: #{tpu_custom_call.1} parent=27 // pred_check_branch
          %403 = sbr.rel (%p401) target = $region56
        $region55: #{tpu_custom_call.1} parent=27 // pred_region
          %p404 = scmp.lt.s32.totalorder %s23, 1
          %s405 = scalar_select %p404, %s23, 1
          %s406 = smul.addr %s405, 2
          %s407 = scalar_lea.vmem %s9, %s406
        $region56: #{tpu_custom_call.1} parent=27 // pred_fallthru
          _
      $region28: #{tpu_custom_call.1} parent=5 // pred_fallthru
        _
      %p408 = scmp.le.s32.totalorder 1, %s23
      %p409 = scmp.lt.s32.totalorder %s23, 3
      %p410 = pnand %p408, %p409
      %p411 = pneg %p410
      // Predicated region
      $region57: #{tpu_custom_call.1} parent=5 // pred_check
        _
      $region58: #{tpu_custom_call.1} parent=5 // pred_check_branch
        %413 = sbr.rel (%p410) target = $region60
      $region59: #{tpu_custom_call.1} parent=5 // pred_region
        %s414 = ssub.s32 %s23, 1
        // Predicated region
        $region61: #{tpu_custom_call.1} parent=59 // pred_check
          %p415 = pneg %p65
        $region62: #{tpu_custom_call.1} parent=59 // pred_check_branch
          %417 = sbr.rel (%p415) target = $region64
        $region63: #{tpu_custom_call.1} parent=59 // pred_region
          %418 = dma.done [#allocation4], 2048
        $region64: #{tpu_custom_call.1} parent=59 // pred_fallthru
          _
        %s419 = sand.u32 %s28, 1
        %s420 = scalar_lea.sflag [#allocation7], %s419
        %s421 = sand.u32 %s151, 1
        %s422 = smul.addr %s421, 32
        %s423 = scalar_lea.vmem [#allocation6], %s422
        // Predicated region
        $region65: #{tpu_custom_call.1} parent=59 // pred_check
          %p424 = pneg %p164
        $region66: #{tpu_custom_call.1} parent=59 // pred_check_branch
          %426 = sbr.rel (%p424) target = $region68
        $region67: #{tpu_custom_call.1} parent=59 // pred_region
          %427 = dma.done %s420, 512
        $region68: #{tpu_custom_call.1} parent=59 // pred_fallthru
          _
        %s428 = sand.u32 %s28, 1
        %s429 = scalar_lea.sflag [#allocation7], %s428
        %s430 = sand.u32 %s177, 1
        %s431 = smul.addr %s430, 32
        %s432 = scalar_lea.vmem [#allocation8], %s431
        // Predicated region
        $region69: #{tpu_custom_call.1} parent=59 // pred_check
          %p433 = pneg %p190
        $region70: #{tpu_custom_call.1} parent=59 // pred_check_branch
          %435 = sbr.rel (%p433) target = $region72
        $region71: #{tpu_custom_call.1} parent=59 // pred_region
          %436 = dma.done %s429, 512
        $region72: #{tpu_custom_call.1} parent=59 // pred_fallthru
          _
        %p437 = pneg %p44
        %p438 = pneg %p41
        %p439 = pneg %p65
        %p440 = pneg %p62
        %p441 = pneg %p86
        %p442 = pneg %p83
        %p443 = scmp.lt.s32.totalorder %s28, 1
        %s444 = scalar_select %p443, %s28, 1
        %s445 = smul.addr %s444, 4
        %s446 = smul.addr %s445, 8
        %s447 = scalar_lea.vmem %s3, %s446
        %p448 = pneg %p112
        %p449 = pneg %p109
        %p450 = scmp.lt.s32.totalorder %s28, 1
        %s451 = scalar_select %p450, %s28, 1
        %s452 = scalar_lea.vmem %s4, %s451
        %p453 = pneg %p138
        %p454 = pneg %p135
        %s455 = sand.u32 %s28, 1
        %s456 = scalar_lea.sflag [#allocation7], %s455
        %s457 = sand.u32 %s151, 1
        %s458 = smul.addr %s457, 32
        %s459 = scalar_lea.vmem [#allocation6], %s458
        %p460 = pneg %p164
        %p461 = pneg %p161
        %s462 = sand.u32 %s28, 1
        %s463 = scalar_lea.sflag [#allocation7], %s462
        %s464 = sand.u32 %s177, 1
        %s465 = smul.addr %s464, 32
        %s466 = scalar_lea.vmem [#allocation8], %s465
        %p467 = pneg %p190
        %p468 = pneg %p187
        %p469 = scmp.lt.s32.totalorder %s28, 1
        %s470 = scalar_select %p469, %s28, 1
        %s471 = scalar_lea.vmem %s7, %s470
        %p472 = pneg %p216
        %p473 = pneg %p213
        %p474 = scmp.lt.s32.totalorder %s28, 1
        %s475 = scalar_select %p474, %s28, 1
        %s476 = smul.addr %s475, 2
        %s477 = scalar_lea.vmem %s8, %s476
        %p478 = pneg %p242
        %p479 = pneg %p239
        %p480 = scmp.lt.s32.totalorder %s28, 1
        %s481 = scalar_select %p480, %s28, 1
        %s482 = smul.addr %s481, 2
        %s483 = scalar_lea.vmem %s9, %s482
        %p484 = pneg %p268
        %p485 = pneg %p265
        %p486 = pneg %p294
        %p487 = pneg %p291
        %s488 = sand.u32 %s281, 1
        %s489 = scalar_lea.sflag [#allocation5], %s488
        %s490 = sand.u32 %s281, 1
        %s491 = smul.addr %s490, 16
        %s492 = scalar_lea.vmem [#allocation9], %s491
        %p493 = scmp.lt.s32.totalorder %s28, 1
        %s494 = scalar_select %p493, %s28, 1
        %s495 = smul.addr %s494, 4
        %s496 = smul.addr %s495, 8
        %s497 = scalar_lea.vmem %s3, %s496
        %p498 = scmp.lt.s32.totalorder %s28, 1
        %s499 = scalar_select %p498, %s28, 1
        %s500 = scalar_lea.vmem %s4, %s499
        %p501 = scmp.lt.s32.totalorder %s28, 1
        %s502 = scalar_select %p501, %s28, 1
        %s503 = scalar_lea.vmem %s7, %s502
        %p504 = scmp.lt.s32.totalorder %s28, 1
        %s505 = scalar_select %p504, %s28, 1
        %s506 = smul.addr %s505, 2
        %s507 = scalar_lea.vmem %s8, %s506
        %p508 = scmp.lt.s32.totalorder %s28, 1
        %s509 = scalar_select %p508, %s28, 1
        %s510 = smul.addr %s509, 2
        %s511 = scalar_lea.vmem %s9, %s510
        %p512 = scmp.eq.s32.totalorder %s28, 0
        // Predicated region
        $region73: #{tpu_custom_call.1} parent=59 // pred_check
          %p513 = pneg %p512
        $region74: #{tpu_custom_call.1} parent=59 // pred_check_branch
          %515 = sbr.rel (%p513) target = $region76
        $region75: #{tpu_custom_call.1} parent=59 // pred_region
          %v516 = vld [vmem:[%s0] sm:$0xff]
          %v517 = vld [vmem:[%s0 + $0x8] sm:$0xff]
          %vm518 = vcmask 261120
          %519 = vst.msk [vmem:[#allocation2] sm:$0xff] %vm518, %v516
          %520 = vst.msk [vmem:[#allocation2 + $0x8] sm:$0xff] %vm518, %v517
        $region76: #{tpu_custom_call.1} parent=59 // pred_fallthru
          _
        %v521 = vld [vmem:[#allocation2] sm:$0xff]
        %v522 = vld [vmem:[#allocation2 + $0x8] sm:$0xff]
        %v523 = vld [vmem:[%s497] sm:$0xff]
        %v524 = vld [vmem:[%s497 + $0x8] sm:$0xff]
        %v525 = vld [vmem:[%s497 + $0x10] sm:$0xff]
        %v526 = vld [vmem:[%s497 + $0x18] sm:$0xff]
        %v527 = vld [vmem:[%s500] sm:$0x1]
        %v529 = vlaneseq
        %v530 = vshrl.u32 %v529, 7
        %v531 = vsub.s32 0, %v530
        %v532 = vrot.slane %v527, %v531
        %vm534 = vcmask 261120
        %v536 = vsel %vm534, %v521, 0
        %v539 = vsel %vm534, %v522, 0
        %541 = vmatprep.subr.mxu0 0.0
        %542 = vmatpush1.msra.mxu0 %v523
        %543 = vmatprep.subr.mxu0 0.0
        %544 = vmatpush1.msra.mxu0 %v524
        %545 = vmatprep.subr.mxu0 0.0
        %546 = vmatpush1.msra.mxu0 %v525
        %547 = vmatprep.subr.mxu0 0.0
        %548 = vmatpush1.msra.mxu0 %v526
        %549 = vmatprep.subr.mxu0 0.0
        %550 = vmatpush1.msra.mxu0 0.0
        %551 = vmatprep.subr.mxu0 0.0
        %552 = vmatpush1.msra.mxu0 0.0
        %553 = vmatprep.subr.mxu0 0.0
        %554 = vmatpush1.msra.mxu0 0.0
        %555 = vmatprep.subr.mxu0 0.0
        %556 = vmatpush1.msra.mxu0 0.0
        %557 = vmatprep.subr.mxu0 0.0
        %558 = vmatpush1.msra.mxu0 0.0
        %559 = vmatprep.subr.mxu0 0.0
        %560 = vmatpush1.msra.mxu0 0.0
        %561 = vmatprep.subr.mxu0 0.0
        %562 = vmatpush1.msra.mxu0 0.0
        %563 = vmatprep.subr.mxu0 0.0
        %564 = vmatpush1.msra.mxu0 0.0
        %565 = vmatprep.subr.mxu0 0.0
        %566 = vmatpush1.msra.mxu0 0.0
        %567 = vmatprep.subr.mxu0 0.0
        %568 = vmatpush1.msra.mxu0 0.0
        %569 = vmatprep.subr.mxu0 0.0
        %570 = vmatpush1.msra.mxu0 0.0
        %571 = vmatprep.subr.mxu0 0.0
        %572 = vmatpush1.msra.mxu0 0.0
        %573 = vmatprep.subr.mxu0 0.0
        %574 = vmatpush1.msra.mxu0 0.0
        %575 = vmatprep.subr.mxu0 0.0
        %576 = vmatpush1.msra.mxu0 0.0
        %577 = vmatprep.subr.mxu0 0.0
        %578 = vmatpush1.msra.mxu0 0.0
        %579 = vmatprep.subr.mxu0 0.0
        %580 = vmatpush1.msra.mxu0 0.0
        %581 = vmatprep.subr.mxu0 0.0
        %582 = vmatpush1.msra.mxu0 0.0
        %583 = vmatprep.subr.mxu0 0.0
        %584 = vmatpush1.msra.mxu0 0.0
        %585 = vmatprep.subr.mxu0 0.0
        %586 = vmatpush1.msra.mxu0 0.0
        %587 = vmatprep.subr.mxu0 0.0
        %588 = vmatpush1.msra.mxu0 0.0
        %589 = vmatprep.subr.mxu0 0.0
        %590 = vmatpush1.msra.mxu0 0.0
        %591 = vmatprep.subr.mxu0 0.0
        %592 = vmatpush1.msra.mxu0 0.0
        %593 = vmatprep.subr.mxu0 0.0
        %594 = vmatpush1.msra.mxu0 0.0
        %595 = vmatprep.subr.mxu0 0.0
        %596 = vmatpush1.msra.mxu0 0.0
        %597 = vmatprep.subr.mxu0 0.0
        %598 = vmatpush1.msra.mxu0 0.0
        %599 = vmatprep.subr.mxu0 0.0
        %600 = vmatpush1.msra.mxu0 0.0
        %601 = vmatprep.subr.mxu0 0.0
        %602 = vmatpush1.msra.mxu0 0.0
        %603 = vmatprep.subr.mxu0 0.0
        %604 = vmatpush1.msra.mxu0 0.0
        %605 = vmatprep.mubr.f32.mxu0 0.0
        %606 = vmatmul.mubr.f32.gmra.mrb[0].mxu0 %v536
        %v607 = vpop.f32.mrb[0].mxu0
        %v608 = vadd.f32 %v532, %v607
        %v609 = vpop.f32.mrb[0].mxu0
        %610 = vmatprep.mubr.f32.mxu0 0.0
        %611 = vmatmul.mubr.f32.gmra.mrb[0].mxu0 %v539
        %v612 = vpop.f32.mrb[0].mxu0
        %v613 = vadd.f32 %v532, %v612
        %v614 = vpop.f32.mrb[0].mxu0
        %615 = vdwg.mxu0
        %v616 = vld [vmem:[%s2] sm:$0xff]
        %v617 = vld [vmem:[%s2 + $0x8] sm:$0xff]
        %v618 = vld [vmem:[%s2 + $0x10] sm:$0xff]
        %v619 = vld [vmem:[%s2 + $0x18] sm:$0xff]
        %v620 = vld [vmem:[%s2 + $0x20] sm:$0xff]
        %v621 = vld [vmem:[%s2 + $0x28] sm:$0xff]
        %v622 = vld [vmem:[%s2 + $0x30] sm:$0xff]
        %v623 = vld [vmem:[%s2 + $0x38] sm:$0xff]
        %632 = vrot.lane.b32.xlu0 %v616, 32
        %v633 = vpop.permute.xlu0 %632
        %634 = vrot.lane.b32.xlu0 %v617, 32
        %v635 = vpop.permute.xlu0 %634
        %636 = vrot.lane.b32.xlu0 %v618, 32
        %v637 = vpop.permute.xlu0 %636
        %638 = vrot.lane.b32.xlu0 %v619, 32
        %v639 = vpop.permute.xlu0 %638
        %640 = vrot.lane.b32.xlu0 %v620, 32
        %v641 = vpop.permute.xlu0 %640
        %642 = vrot.lane.b32.xlu0 %v621, 32
        %v643 = vpop.permute.xlu0 %642
        %644 = vrot.lane.b32.xlu0 %v622, 32
        %v645 = vpop.permute.xlu0 %644
        %646 = vrot.lane.b32.xlu0 %v623, 32
        %v647 = vpop.permute.xlu0 %646
        %v656 = vmul.f32 %v608, %v633
        %v657 = vmul.f32 %v608, %v635
        %v658 = vmul.f32 %v608, %v637
        %v659 = vmul.f32 %v608, %v639
        %v660 = vmul.f32 %v608, %v641
        %v661 = vmul.f32 %v608, %v643
        %v662 = vmul.f32 %v608, %v645
        %v663 = vmul.f32 %v608, %v647
        %v664 = vmul.f32 %v613, %v633
        %v665 = vmul.f32 %v613, %v635
        %v666 = vmul.f32 %v613, %v637
        %v667 = vmul.f32 %v613, %v639
        %v668 = vmul.f32 %v613, %v641
        %v669 = vmul.f32 %v613, %v643
        %v670 = vmul.f32 %v613, %v645
        %v671 = vmul.f32 %v613, %v647
        %672 = vrot.lane.b32.xlu0 %v616, 64
        %v673 = vpop.permute.xlu0 %672
        %674 = vrot.lane.b32.xlu0 %v617, 64
        %v675 = vpop.permute.xlu0 %674
        %676 = vrot.lane.b32.xlu0 %v618, 64
        %v677 = vpop.permute.xlu0 %676
        %678 = vrot.lane.b32.xlu0 %v619, 64
        %v679 = vpop.permute.xlu0 %678
        %680 = vrot.lane.b32.xlu0 %v620, 64
        %v681 = vpop.permute.xlu0 %680
        %682 = vrot.lane.b32.xlu0 %v621, 64
        %v683 = vpop.permute.xlu0 %682
        %684 = vrot.lane.b32.xlu0 %v622, 64
        %v685 = vpop.permute.xlu0 %684
        %686 = vrot.lane.b32.xlu0 %v623, 64
        %v687 = vpop.permute.xlu0 %686
        %v696 = vmul.f32 %v608, %v673
        %v697 = vmul.f32 %v608, %v675
        %v698 = vmul.f32 %v608, %v677
        %v699 = vmul.f32 %v608, %v679
        %v700 = vmul.f32 %v608, %v681
        %v701 = vmul.f32 %v608, %v683
        %v702 = vmul.f32 %v608, %v685
        %v703 = vmul.f32 %v608, %v687
        %v704 = vmul.f32 %v613, %v673
        %v705 = vmul.f32 %v613, %v675
        %v706 = vmul.f32 %v613, %v677
        %v707 = vmul.f32 %v613, %v679
        %v708 = vmul.f32 %v613, %v681
        %v709 = vmul.f32 %v613, %v683
        %v710 = vmul.f32 %v613, %v685
        %v711 = vmul.f32 %v613, %v687
        %720 = vrot.lane.b32.xlu0 %v656, 96
        %v721 = vpop.permute.xlu0 %720
        %722 = vrot.lane.b32.xlu0 %v657, 96
        %v723 = vpop.permute.xlu0 %722
        %724 = vrot.lane.b32.xlu0 %v658, 96
        %v725 = vpop.permute.xlu0 %724
        %726 = vrot.lane.b32.xlu0 %v659, 96
        %v727 = vpop.permute.xlu0 %726
        %728 = vrot.lane.b32.xlu0 %v660, 96
        %v729 = vpop.permute.xlu0 %728
        %730 = vrot.lane.b32.xlu0 %v661, 96
        %v731 = vpop.permute.xlu0 %730
        %732 = vrot.lane.b32.xlu0 %v662, 96
        %v733 = vpop.permute.xlu0 %732
        %734 = vrot.lane.b32.xlu0 %v663, 96
        %v735 = vpop.permute.xlu0 %734
        %v737 = vsel %vm534, %v608, 0
        %v739 = vsel %vm534, %v721, 0
        %v741 = vsel %vm534, %v723, 0
        %v743 = vsel %vm534, %v725, 0
        %v745 = vsel %vm534, %v727, 0
        %v747 = vsel %vm534, %v729, 0
        %v749 = vsel %vm534, %v731, 0
        %v751 = vsel %vm534, %v733, 0
        %v753 = vsel %vm534, %v735, 0
        %755 = vmatprep.subr.mxu0 0.0
        %756 = vmatpush1.xpose.msra.mxu0 %v739
        %757 = vmatprep.subr.mxu0 0.0
        %758 = vmatpush1.xpose.msra.mxu0 %v741
        %759 = vmatprep.subr.mxu0 0.0
        %760 = vmatpush1.xpose.msra.mxu0 %v743
        %761 = vmatprep.subr.mxu0 0.0
        %762 = vmatpush1.xpose.msra.mxu0 %v745
        %763 = vmatprep.subr.mxu0 0.0
        %764 = vmatpush1.xpose.msra.mxu0 %v747
        %765 = vmatprep.subr.mxu0 0.0
        %766 = vmatpush1.xpose.msra.mxu0 %v749
        %767 = vmatprep.subr.mxu0 0.0
        %768 = vmatpush1.xpose.msra.mxu0 %v751
        %769 = vmatprep.subr.mxu0 0.0
        %770 = vmatpush1.xpose.msra.mxu0 %v753
        %771 = vmatprep.subr.mxu0 0.0
        %772 = vmatpush1.xpose.msra.mxu0 0.0
        %773 = vmatprep.subr.mxu0 0.0
        %774 = vmatpush1.xpose.msra.mxu0 0.0
        %775 = vmatprep.subr.mxu0 0.0
        %776 = vmatpush1.xpose.msra.mxu0 0.0
        %777 = vmatprep.subr.mxu0 0.0
        %778 = vmatpush1.xpose.msra.mxu0 0.0
        %779 = vmatprep.subr.mxu0 0.0
        %780 = vmatpush1.xpose.msra.mxu0 0.0
        %781 = vmatprep.subr.mxu0 0.0
        %782 = vmatpush1.xpose.msra.mxu0 0.0
        %783 = vmatprep.subr.mxu0 0.0
        %784 = vmatpush1.xpose.msra.mxu0 0.0
        %785 = vmatprep.subr.mxu0 0.0
        %786 = vmatpush1.xpose.msra.mxu0 0.0
        %787 = vmatprep.subr.mxu0 0.0
        %788 = vmatpush1.xpose.msra.mxu0 0.0
        %789 = vmatprep.subr.mxu0 0.0
        %790 = vmatpush1.xpose.msra.mxu0 0.0
        %791 = vmatprep.subr.mxu0 0.0
        %792 = vmatpush1.xpose.msra.mxu0 0.0
        %793 = vmatprep.subr.mxu0 0.0
        %794 = vmatpush1.xpose.msra.mxu0 0.0
        %795 = vmatprep.subr.mxu0 0.0
        %796 = vmatpush1.xpose.msra.mxu0 0.0
        %797 = vmatprep.subr.mxu0 0.0
        %798 = vmatpush1.xpose.msra.mxu0 0.0
        %799 = vmatprep.subr.mxu0 0.0
        %800 = vmatpush1.xpose.msra.mxu0 0.0
        %801 = vmatprep.subr.mxu0 0.0
        %802 = vmatpush1.xpose.msra.mxu0 0.0
        %803 = vmatprep.subr.mxu0 0.0
        %804 = vmatpush1.xpose.msra.mxu0 0.0
        %805 = vmatprep.subr.mxu0 0.0
        %806 = vmatpush1.xpose.msra.mxu0 0.0
        %807 = vmatprep.subr.mxu0 0.0
        %808 = vmatpush1.xpose.msra.mxu0 0.0
        %809 = vmatprep.subr.mxu0 0.0
        %810 = vmatpush1.xpose.msra.mxu0 0.0
        %811 = vmatprep.subr.mxu0 0.0
        %812 = vmatpush1.xpose.msra.mxu0 0.0
        %813 = vmatprep.subr.mxu0 0.0
        %814 = vmatpush1.xpose.msra.mxu0 0.0
        %815 = vmatprep.subr.mxu0 0.0
        %816 = vmatpush1.xpose.msra.mxu0 0.0
        %817 = vmatprep.subr.mxu0 0.0
        %818 = vmatpush1.xpose.msra.mxu0 0.0
        %819 = vmatprep.mubr.f32.mxu0 0.0
        %820 = vmatmul.mubr.f32.gmra.mrb[0].mxu0 %v737
        %v821 = vpop.f32.mrb[0].mxu0
        %v822 = vadd.f32 0.0, %v821
        %v823 = vpop.f32.mrb[0].mxu0
        %824 = vmatprep.mubr.f32.mxu0 0.0
        %825 = vmatmul.mubr.f32.gmra.mrb[0].mxu0 %v737
        %v826 = vpop.f32.mrb[0].mxu0
        %v827 = vadd.f32 0.0, %v826
        %v828 = vpop.f32.mrb[0].mxu0
        %829 = vmatprep.mubr.f32.mxu0 0.0
        %830 = vmatmul.mubr.f32.gmra.mrb[0].mxu0 %v737
        %v831 = vpop.f32.mrb[0].mxu0
        %v832 = vadd.f32 0.0, %v831
        %v833 = vpop.f32.mrb[0].mxu0
        %834 = vmatprep.mubr.f32.mxu0 0.0
        %835 = vmatmul.mubr.f32.gmra.mrb[0].mxu0 %v737
        %v836 = vpop.f32.mrb[0].mxu0
        %v837 = vadd.f32 0.0, %v836
        %v838 = vpop.f32.mrb[0].mxu0
        %839 = vmatprep.mubr.f32.mxu0 0.0
        %840 = vmatmul.mubr.f32.gmra.mrb[0].mxu0 %v737
        %v841 = vpop.f32.mrb[0].mxu0
        %v842 = vadd.f32 0.0, %v841
        %v843 = vpop.f32.mrb[0].mxu0
        %844 = vmatprep.mubr.f32.mxu0 0.0
        %845 = vmatmul.mubr.f32.gmra.mrb[0].mxu0 %v737
        %v846 = vpop.f32.mrb[0].mxu0
        %v847 = vadd.f32 0.0, %v846
        %v848 = vpop.f32.mrb[0].mxu0
        %849 = vmatprep.mubr.f32.mxu0 0.0
        %850 = vmatmul.mubr.f32.gmra.mrb[0].mxu0 %v737
        %v851 = vpop.f32.mrb[0].mxu0
        %v852 = vadd.f32 0.0, %v851
        %v853 = vpop.f32.mrb[0].mxu0
        %854 = vmatprep.mubr.f32.mxu0 0.0
        %855 = vmatmul.mubr.f32.gmra.mrb[0].mxu0 %v737
        %v856 = vpop.f32.mrb[0].mxu0
        %v857 = vadd.f32 0.0, %v856
        %v858 = vpop.f32.mrb[0].mxu0
        %859 = vdwg.mxu0
        %868 = vrot.lane.b32.xlu0 %v664, 96
        %v869 = vpop.permute.xlu0 %868
        %870 = vrot.lane.b32.xlu0 %v665, 96
        %v871 = vpop.permute.xlu0 %870
        %872 = vrot.lane.b32.xlu0 %v666, 96
        %v873 = vpop.permute.xlu0 %872
        %874 = vrot.lane.b32.xlu0 %v667, 96
        %v875 = vpop.permute.xlu0 %874
        %876 = vrot.lane.b32.xlu0 %v668, 96
        %v877 = vpop.permute.xlu0 %876
        %878 = vrot.lane.b32.xlu0 %v669, 96
        %v879 = vpop.permute.xlu0 %878
        %880 = vrot.lane.b32.xlu0 %v670, 96
        %v881 = vpop.permute.xlu0 %880
        %882 = vrot.lane.b32.xlu0 %v671, 96
        %v883 = vpop.permute.xlu0 %882
        %v885 = vsel %vm534, %v613, 0
        %v887 = vsel %vm534, %v869, 0
        %v889 = vsel %vm534, %v871, 0
        %v891 = vsel %vm534, %v873, 0
        %v893 = vsel %vm534, %v875, 0
        %v895 = vsel %vm534, %v877, 0
        %v897 = vsel %vm534, %v879, 0
        %v899 = vsel %vm534, %v881, 0
        %v901 = vsel %vm534, %v883, 0
        %903 = vmatprep.subr.mxu0 0.0
        %904 = vmatpush1.xpose.msra.mxu0 %v887
        %905 = vmatprep.subr.mxu0 0.0
        %906 = vmatpush1.xpose.msra.mxu0 %v889
        %907 = vmatprep.subr.mxu0 0.0
        %908 = vmatpush1.xpose.msra.mxu0 %v891
        %909 = vmatprep.subr.mxu0 0.0
        %910 = vmatpush1.xpose.msra.mxu0 %v893
        %911 = vmatprep.subr.mxu0 0.0
        %912 = vmatpush1.xpose.msra.mxu0 %v895
        %913 = vmatprep.subr.mxu0 0.0
        %914 = vmatpush1.xpose.msra.mxu0 %v897
        %915 = vmatprep.subr.mxu0 0.0
        %916 = vmatpush1.xpose.msra.mxu0 %v899
        %917 = vmatprep.subr.mxu0 0.0
        %918 = vmatpush1.xpose.msra.mxu0 %v901
        %919 = vmatprep.subr.mxu0 0.0
        %920 = vmatpush1.xpose.msra.mxu0 0.0
        %921 = vmatprep.subr.mxu0 0.0
        %922 = vmatpush1.xpose.msra.mxu0 0.0
        %923 = vmatprep.subr.mxu0 0.0
        %924 = vmatpush1.xpose.msra.mxu0 0.0
        %925 = vmatprep.subr.mxu0 0.0
        %926 = vmatpush1.xpose.msra.mxu0 0.0
        %927 = vmatprep.subr.mxu0 0.0
        %928 = vmatpush1.xpose.msra.mxu0 0.0
        %929 = vmatprep.subr.mxu0 0.0
        %930 = vmatpush1.xpose.msra.mxu0 0.0
        %931 = vmatprep.subr.mxu0 0.0
        %932 = vmatpush1.xpose.msra.mxu0 0.0
        %933 = vmatprep.subr.mxu0 0.0
        %934 = vmatpush1.xpose.msra.mxu0 0.0
        %935 = vmatprep.subr.mxu0 0.0
        %936 = vmatpush1.xpose.msra.mxu0 0.0
        %937 = vmatprep.subr.mxu0 0.0
        %938 = vmatpush1.xpose.msra.mxu0 0.0
        %939 = vmatprep.subr.mxu0 0.0
        %940 = vmatpush1.xpose.msra.mxu0 0.0
        %941 = vmatprep.subr.mxu0 0.0
        %942 = vmatpush1.xpose.msra.mxu0 0.0
        %943 = vmatprep.subr.mxu0 0.0
        %944 = vmatpush1.xpose.msra.mxu0 0.0
        %945 = vmatprep.subr.mxu0 0.0
        %946 = vmatpush1.xpose.msra.mxu0 0.0
        %947 = vmatprep.subr.mxu0 0.0
        %948 = vmatpush1.xpose.msra.mxu0 0.0
        %949 = vmatprep.subr.mxu0 0.0
        %950 = vmatpush1.xpose.msra.mxu0 0.0
        %951 = vmatprep.subr.mxu0 0.0
        %952 = vmatpush1.xpose.msra.mxu0 0.0
        %953 = vmatprep.subr.mxu0 0.0
        %954 = vmatpush1.xpose.msra.mxu0 0.0
        %955 = vmatprep.subr.mxu0 0.0
        %956 = vmatpush1.xpose.msra.mxu0 0.0
        %957 = vmatprep.subr.mxu0 0.0
        %958 = vmatpush1.xpose.msra.mxu0 0.0
        %959 = vmatprep.subr.mxu0 0.0
        %960 = vmatpush1.xpose.msra.mxu0 0.0
        %961 = vmatprep.subr.mxu0 0.0
        %962 = vmatpush1.xpose.msra.mxu0 0.0
        %963 = vmatprep.subr.mxu0 0.0
        %964 = vmatpush1.xpose.msra.mxu0 0.0
        %965 = vmatprep.subr.mxu0 0.0
        %966 = vmatpush1.xpose.msra.mxu0 0.0
        %967 = vmatprep.mubr.f32.mxu0 0.0
        %968 = vmatmul.mubr.f32.gmra.mrb[0].mxu0 %v885
        %v969 = vpop.f32.mrb[0].mxu0
        %v970 = vadd.f32 0.0, %v969
        %v971 = vpop.f32.mrb[0].mxu0
        %972 = vmatprep.mubr.f32.mxu0 0.0
        %973 = vmatmul.mubr.f32.gmra.mrb[0].mxu0 %v885
        %v974 = vpop.f32.mrb[0].mxu0
        %v975 = vadd.f32 0.0, %v974
        %v976 = vpop.f32.mrb[0].mxu0
        %977 = vmatprep.mubr.f32.mxu0 0.0
        %978 = vmatmul.mubr.f32.gmra.mrb[0].mxu0 %v885
        %v979 = vpop.f32.mrb[0].mxu0
        %v980 = vadd.f32 0.0, %v979
        %v981 = vpop.f32.mrb[0].mxu0
        %982 = vmatprep.mubr.f32.mxu0 0.0
        %983 = vmatmul.mubr.f32.gmra.mrb[0].mxu0 %v885
        %v984 = vpop.f32.mrb[0].mxu0
        %v985 = vadd.f32 0.0, %v984
        %v986 = vpop.f32.mrb[0].mxu0
        %987 = vmatprep.mubr.f32.mxu0 0.0
        %988 = vmatmul.mubr.f32.gmra.mrb[0].mxu0 %v885
        %v989 = vpop.f32.mrb[0].mxu0
        %v990 = vadd.f32 0.0, %v989
        %v991 = vpop.f32.mrb[0].mxu0
        %992 = vmatprep.mubr.f32.mxu0 0.0
        %993 = vmatmul.mubr.f32.gmra.mrb[0].mxu0 %v885
        %v994 = vpop.f32.mrb[0].mxu0
        %v995 = vadd.f32 0.0, %v994
        %v996 = vpop.f32.mrb[0].mxu0
        %997 = vmatprep.mubr.f32.mxu0 0.0
        %998 = vmatmul.mubr.f32.gmra.mrb[0].mxu0 %v885
        %v999 = vpop.f32.mrb[0].mxu0
        %v1000 = vadd.f32 0.0, %v999
        %v1001 = vpop.f32.mrb[0].mxu0
        %1002 = vmatprep.mubr.f32.mxu0 0.0
        %1003 = vmatmul.mubr.f32.gmra.mrb[0].mxu0 %v885
        %v1004 = vpop.f32.mrb[0].mxu0
        %v1005 = vadd.f32 0.0, %v1004
        %v1006 = vpop.f32.mrb[0].mxu0
        %1007 = vdwg.mxu0
        %v1008 = vmul.f32 %v822, 0.5
        %v1009 = vmul.f32 %v827, 0.5
        %v1010 = vmul.f32 %v832, 0.5
        %v1011 = vmul.f32 %v837, 0.5
        %v1012 = vmul.f32 %v842, 0.5
        %v1013 = vmul.f32 %v847, 0.5
        %v1014 = vmul.f32 %v852, 0.5
        %v1015 = vmul.f32 %v857, 0.5
        %v1016 = vmul.f32 %v970, 0.5
        %v1017 = vmul.f32 %v975, 0.5
        %v1018 = vmul.f32 %v980, 0.5
        %v1019 = vmul.f32 %v985, 0.5
        %v1020 = vmul.f32 %v990, 0.5
        %v1021 = vmul.f32 %v995, 0.5
        %v1022 = vmul.f32 %v1000, 0.5
        %v1023 = vmul.f32 %v1005, 0.5
        %v1024 = vld [vmem:[#allocation3] sm:$0xff]
        %v1025 = vld [vmem:[#allocation3 + $0x8] sm:$0xff]
        %v1026 = vld [vmem:[#allocation3 + $0x10] sm:$0xff]
        %v1027 = vld [vmem:[#allocation3 + $0x18] sm:$0xff]
        %v1028 = vld [vmem:[#allocation3 + $0x20] sm:$0xff]
        %v1029 = vld [vmem:[#allocation3 + $0x28] sm:$0xff]
        %v1030 = vld [vmem:[#allocation3 + $0x30] sm:$0xff]
        %v1031 = vld [vmem:[#allocation3 + $0x38] sm:$0xff]
        %v1032 = vld [vmem:[#allocation3 + $0x40] sm:$0xff]
        %v1033 = vld [vmem:[#allocation3 + $0x48] sm:$0xff]
        %v1034 = vld [vmem:[#allocation3 + $0x50] sm:$0xff]
        %v1035 = vld [vmem:[#allocation3 + $0x58] sm:$0xff]
        %v1036 = vld [vmem:[#allocation3 + $0x60] sm:$0xff]
        %v1037 = vld [vmem:[#allocation3 + $0x68] sm:$0xff]
        %v1038 = vld [vmem:[#allocation3 + $0x70] sm:$0xff]
        %v1039 = vld [vmem:[#allocation3 + $0x78] sm:$0xff]
        %v1040 = vadd.f32 %v1008, %v1024
        %v1041 = vadd.f32 %v1009, %v1025
        %v1042 = vadd.f32 %v1010, %v1026
        %v1043 = vadd.f32 %v1011, %v1027
        %v1044 = vadd.f32 %v1012, %v1028
        %v1045 = vadd.f32 %v1013, %v1029
        %v1046 = vadd.f32 %v1014, %v1030
        %v1047 = vadd.f32 %v1015, %v1031
        %v1048 = vadd.f32 %v1016, %v1032
        %v1049 = vadd.f32 %v1017, %v1033
        %v1050 = vadd.f32 %v1018, %v1034
        %v1051 = vadd.f32 %v1019, %v1035
        %v1052 = vadd.f32 %v1020, %v1036
        %v1053 = vadd.f32 %v1021, %v1037
        %v1054 = vadd.f32 %v1022, %v1038
        %v1055 = vadd.f32 %v1023, %v1039
        %vm1056 = vcmask 523264
        %v1057 = vsel %vm1056, %v1040, -inf
        %1058 = vmax.xlane.f32.xlu0 %v1057
        %v1059 = vpop.xlane.xlu0 %1058
        %v1060 = vsel %vm1056, %v1041, -inf
        %1061 = vmax.xlane.f32.xlu0 %v1060
        %v1062 = vpop.xlane.xlu0 %1061
        %v1063 = vsel %vm1056, %v1042, -inf
        %1064 = vmax.xlane.f32.xlu0 %v1063
        %v1065 = vpop.xlane.xlu0 %1064
        %v1066 = vsel %vm1056, %v1043, -inf
        %1067 = vmax.xlane.f32.xlu0 %v1066
        %v1068 = vpop.xlane.xlu0 %1067
        %v1069 = vsel %vm1056, %v1044, -inf
        %1070 = vmax.xlane.f32.xlu0 %v1069
        %v1071 = vpop.xlane.xlu0 %1070
        %v1072 = vsel %vm1056, %v1045, -inf
        %1073 = vmax.xlane.f32.xlu0 %v1072
        %v1074 = vpop.xlane.xlu0 %1073
        %v1075 = vsel %vm1056, %v1046, -inf
        %1076 = vmax.xlane.f32.xlu0 %v1075
        %v1077 = vpop.xlane.xlu0 %1076
        %v1078 = vsel %vm1056, %v1047, -inf
        %1079 = vmax.xlane.f32.xlu0 %v1078
        %v1080 = vpop.xlane.xlu0 %1079
        %v1081 = vsel %vm1056, %v1048, -inf
        %1082 = vmax.xlane.f32.xlu0 %v1081
        %v1083 = vpop.xlane.xlu0 %1082
        %v1084 = vsel %vm1056, %v1049, -inf
        %1085 = vmax.xlane.f32.xlu0 %v1084
        %v1086 = vpop.xlane.xlu0 %1085
        %v1087 = vsel %vm1056, %v1050, -inf
        %1088 = vmax.xlane.f32.xlu0 %v1087
        %v1089 = vpop.xlane.xlu0 %1088
        %v1090 = vsel %vm1056, %v1051, -inf
        %1091 = vmax.xlane.f32.xlu0 %v1090
        %v1092 = vpop.xlane.xlu0 %1091
        %v1093 = vsel %vm1056, %v1052, -inf
        %1094 = vmax.xlane.f32.xlu0 %v1093
        %v1095 = vpop.xlane.xlu0 %1094
        %v1096 = vsel %vm1056, %v1053, -inf
        %1097 = vmax.xlane.f32.xlu0 %v1096
        %v1098 = vpop.xlane.xlu0 %1097
        %v1099 = vsel %vm1056, %v1054, -inf
        %1100 = vmax.xlane.f32.xlu0 %v1099
        %v1101 = vpop.xlane.xlu0 %1100
        %v1102 = vsel %vm1056, %v1055, -inf
        %1103 = vmax.xlane.f32.xlu0 %v1102
        %v1104 = vpop.xlane.xlu0 %1103
        %v1105 = vsub.f32 %v1040, %v1059
        %v1106 = vsub.f32 %v1041, %v1062
        %v1107 = vsub.f32 %v1042, %v1065
        %v1108 = vsub.f32 %v1043, %v1068
        %v1109 = vsub.f32 %v1044, %v1071
        %v1110 = vsub.f32 %v1045, %v1074
        %v1111 = vsub.f32 %v1046, %v1077
        %v1112 = vsub.f32 %v1047, %v1080
        %v1113 = vsub.f32 %v1048, %v1083
        %v1114 = vsub.f32 %v1049, %v1086
        %v1115 = vsub.f32 %v1050, %v1089
        %v1116 = vsub.f32 %v1051, %v1092
        %v1117 = vsub.f32 %v1052, %v1095
        %v1118 = vsub.f32 %v1053, %v1098
        %v1119 = vsub.f32 %v1054, %v1101
        %v1120 = vsub.f32 %v1055, %v1104
        %v1121 = vmul.f32 %v1105, 1.442695
        %v1122 = vpow.pop %v1121
        %v1123 = vmul.f32 %v1106, 1.442695
        %v1124 = vpow.pop %v1123
        %v1125 = vmul.f32 %v1107, 1.442695
        %v1126 = vpow.pop %v1125
        %v1127 = vmul.f32 %v1108, 1.442695
        %v1128 = vpow.pop %v1127
        %v1129 = vmul.f32 %v1109, 1.442695
        %v1130 = vpow.pop %v1129
        %v1131 = vmul.f32 %v1110, 1.442695
        %v1132 = vpow.pop %v1131
        %v1133 = vmul.f32 %v1111, 1.442695
        %v1134 = vpow.pop %v1133
        %v1135 = vmul.f32 %v1112, 1.442695
        %v1136 = vpow.pop %v1135
        %v1137 = vmul.f32 %v1113, 1.442695
        %v1138 = vpow.pop %v1137
        %v1139 = vmul.f32 %v1114, 1.442695
        %v1140 = vpow.pop %v1139
        %v1141 = vmul.f32 %v1115, 1.442695
        %v1142 = vpow.pop %v1141
        %v1143 = vmul.f32 %v1116, 1.442695
        %v1144 = vpow.pop %v1143
        %v1145 = vmul.f32 %v1117, 1.442695
        %v1146 = vpow.pop %v1145
        %v1147 = vmul.f32 %v1118, 1.442695
        %v1148 = vpow.pop %v1147
        %v1149 = vmul.f32 %v1119, 1.442695
        %v1150 = vpow.pop %v1149
        %v1151 = vmul.f32 %v1120, 1.442695
        %v1152 = vpow.pop %v1151
        %v1153 = vsel %vm1056, %v1122, 0.0
        %1154 = vadd.xlane.f32.xlu0 %v1153
        %v1155 = vpop.xlane.xlu0 %1154
        %v1156 = vsel %vm1056, %v1124, 0.0
        %1157 = vadd.xlane.f32.xlu0 %v1156
        %v1158 = vpop.xlane.xlu0 %1157
        %v1159 = vsel %vm1056, %v1126, 0.0
        %1160 = vadd.xlane.f32.xlu0 %v1159
        %v1161 = vpop.xlane.xlu0 %1160
        %v1162 = vsel %vm1056, %v1128, 0.0
        %1163 = vadd.xlane.f32.xlu0 %v1162
        %v1164 = vpop.xlane.xlu0 %1163
        %v1165 = vsel %vm1056, %v1130, 0.0
        %1166 = vadd.xlane.f32.xlu0 %v1165
        %v1167 = vpop.xlane.xlu0 %1166
        %v1168 = vsel %vm1056, %v1132, 0.0
        %1169 = vadd.xlane.f32.xlu0 %v1168
        %v1170 = vpop.xlane.xlu0 %1169
        %v1171 = vsel %vm1056, %v1134, 0.0
        %1172 = vadd.xlane.f32.xlu0 %v1171
        %v1173 = vpop.xlane.xlu0 %1172
        %v1174 = vsel %vm1056, %v1136, 0.0
        %1175 = vadd.xlane.f32.xlu0 %v1174
        %v1176 = vpop.xlane.xlu0 %1175
        %v1177 = vsel %vm1056, %v1138, 0.0
        %1178 = vadd.xlane.f32.xlu0 %v1177
        %v1179 = vpop.xlane.xlu0 %1178
        %v1180 = vsel %vm1056, %v1140, 0.0
        %1181 = vadd.xlane.f32.xlu0 %v1180
        %v1182 = vpop.xlane.xlu0 %1181
        %v1183 = vsel %vm1056, %v1142, 0.0
        %1184 = vadd.xlane.f32.xlu0 %v1183
        %v1185 = vpop.xlane.xlu0 %1184
        %v1186 = vsel %vm1056, %v1144, 0.0
        %1187 = vadd.xlane.f32.xlu0 %v1186
        %v1188 = vpop.xlane.xlu0 %1187
        %v1189 = vsel %vm1056, %v1146, 0.0
        %1190 = vadd.xlane.f32.xlu0 %v1189
        %v1191 = vpop.xlane.xlu0 %1190
        %v1192 = vsel %vm1056, %v1148, 0.0
        %1193 = vadd.xlane.f32.xlu0 %v1192
        %v1194 = vpop.xlane.xlu0 %1193
        %v1195 = vsel %vm1056, %v1150, 0.0
        %1196 = vadd.xlane.f32.xlu0 %v1195
        %v1197 = vpop.xlane.xlu0 %1196
        %v1198 = vsel %vm1056, %v1152, 0.0
        %1199 = vadd.xlane.f32.xlu0 %v1198
        %v1200 = vpop.xlane.xlu0 %1199
        %v1201 = vrcp.pop %v1155
        %v1202 = vmul.f32 %v1122, %v1201
        %v1203 = vrcp.pop %v1158
        %v1204 = vmul.f32 %v1124, %v1203
        %v1205 = vrcp.pop %v1161
        %v1206 = vmul.f32 %v1126, %v1205
        %v1207 = vrcp.pop %v1164
        %v1208 = vmul.f32 %v1128, %v1207
        %v1209 = vrcp.pop %v1167
        %v1210 = vmul.f32 %v1130, %v1209
        %v1211 = vrcp.pop %v1170
        %v1212 = vmul.f32 %v1132, %v1211
        %v1213 = vrcp.pop %v1173
        %v1214 = vmul.f32 %v1134, %v1213
        %v1215 = vrcp.pop %v1176
        %v1216 = vmul.f32 %v1136, %v1215
        %v1217 = vrcp.pop %v1179
        %v1218 = vmul.f32 %v1138, %v1217
        %v1219 = vrcp.pop %v1182
        %v1220 = vmul.f32 %v1140, %v1219
        %v1221 = vrcp.pop %v1185
        %v1222 = vmul.f32 %v1142, %v1221
        %v1223 = vrcp.pop %v1188
        %v1224 = vmul.f32 %v1144, %v1223
        %v1225 = vrcp.pop %v1191
        %v1226 = vmul.f32 %v1146, %v1225
        %v1227 = vrcp.pop %v1194
        %v1228 = vmul.f32 %v1148, %v1227
        %v1229 = vrcp.pop %v1197
        %v1230 = vmul.f32 %v1150, %v1229
        %v1231 = vrcp.pop %v1200
        %v1232 = vmul.f32 %v1152, %v1231
        %1241 = vrot.lane.b32.xlu0 %v696, 64
        %v1242 = vpop.permute.xlu0 %1241
        %1243 = vrot.lane.b32.xlu0 %v697, 64
        %v1244 = vpop.permute.xlu0 %1243
        %1245 = vrot.lane.b32.xlu0 %v698, 64
        %v1246 = vpop.permute.xlu0 %1245
        %1247 = vrot.lane.b32.xlu0 %v699, 64
        %v1248 = vpop.permute.xlu0 %1247
        %1249 = vrot.lane.b32.xlu0 %v700, 64
        %v1250 = vpop.permute.xlu0 %1249
        %1251 = vrot.lane.b32.xlu0 %v701, 64
        %v1252 = vpop.permute.xlu0 %1251
        %1253 = vrot.lane.b32.xlu0 %v702, 64
        %v1254 = vpop.permute.xlu0 %1253
        %1255 = vrot.lane.b32.xlu0 %v703, 64
        %v1256 = vpop.permute.xlu0 %1255
        %v1266 = vsel %vm1056, %v1202, 0
        %v1269 = vsel %vm1056, %v1204, 0
        %v1272 = vsel %vm1056, %v1206, 0
        %v1275 = vsel %vm1056, %v1208, 0
        %v1278 = vsel %vm1056, %v1210, 0
        %v1281 = vsel %vm1056, %v1212, 0
        %v1284 = vsel %vm1056, %v1214, 0
        %v1287 = vsel %vm1056, %v1216, 0
        %1289 = vmatprep.subr.mxu0 0.0
        %1290 = vmatpush1.msra.mxu0 %v1242
        %1291 = vmatprep.subr.mxu0 0.0
        %1292 = vmatpush1.msra.mxu0 %v1244
        %1293 = vmatprep.subr.mxu0 0.0
        %1294 = vmatpush1.msra.mxu0 %v1246
        %1295 = vmatprep.subr.mxu0 0.0
        %1296 = vmatpush1.msra.mxu0 %v1248
        %1297 = vmatprep.subr.mxu0 0.0
        %1298 = vmatpush1.msra.mxu0 %v1250
        %1299 = vmatprep.subr.mxu0 0.0
        %1300 = vmatpush1.msra.mxu0 %v1252
        %1301 = vmatprep.subr.mxu0 0.0
        %1302 = vmatpush1.msra.mxu0 %v1254
        %1303 = vmatprep.subr.mxu0 0.0
        %1304 = vmatpush1.msra.mxu0 %v1256
        %1305 = vmatprep.subr.mxu0 0.0
        %1306 = vmatpush1.msra.mxu0 0.0
        %1307 = vmatprep.subr.mxu0 0.0
        %1308 = vmatpush1.msra.mxu0 0.0
        %1309 = vmatprep.subr.mxu0 0.0
        %1310 = vmatpush1.msra.mxu0 0.0
        %1311 = vmatprep.subr.mxu0 0.0
        %1312 = vmatpush1.msra.mxu0 0.0
        %1313 = vmatprep.subr.mxu0 0.0
        %1314 = vmatpush1.msra.mxu0 0.0
        %1315 = vmatprep.subr.mxu0 0.0
        %1316 = vmatpush1.msra.mxu0 0.0
        %1317 = vmatprep.subr.mxu0 0.0
        %1318 = vmatpush1.msra.mxu0 0.0
        %1319 = vmatprep.subr.mxu0 0.0
        %1320 = vmatpush1.msra.mxu0 0.0
        %1321 = vmatprep.subr.mxu0 0.0
        %1322 = vmatpush1.msra.mxu0 0.0
        %1323 = vmatprep.subr.mxu0 0.0
        %1324 = vmatpush1.msra.mxu0 0.0
        %1325 = vmatprep.subr.mxu0 0.0
        %1326 = vmatpush1.msra.mxu0 0.0
        %1327 = vmatprep.subr.mxu0 0.0
        %1328 = vmatpush1.msra.mxu0 0.0
        %1329 = vmatprep.subr.mxu0 0.0
        %1330 = vmatpush1.msra.mxu0 0.0
        %1331 = vmatprep.subr.mxu0 0.0
        %1332 = vmatpush1.msra.mxu0 0.0
        %1333 = vmatprep.subr.mxu0 0.0
        %1334 = vmatpush1.msra.mxu0 0.0
        %1335 = vmatprep.subr.mxu0 0.0
        %1336 = vmatpush1.msra.mxu0 0.0
        %1337 = vmatprep.subr.mxu0 0.0
        %1338 = vmatpush1.msra.mxu0 0.0
        %1339 = vmatprep.subr.mxu0 0.0
        %1340 = vmatpush1.msra.mxu0 0.0
        %1341 = vmatprep.subr.mxu0 0.0
        %1342 = vmatpush1.msra.mxu0 0.0
        %1343 = vmatprep.subr.mxu0 0.0
        %1344 = vmatpush1.msra.mxu0 0.0
        %1345 = vmatprep.subr.mxu0 0.0
        %1346 = vmatpush1.msra.mxu0 0.0
        %1347 = vmatprep.subr.mxu0 0.0
        %1348 = vmatpush1.msra.mxu0 0.0
        %1349 = vmatprep.subr.mxu0 0.0
        %1350 = vmatpush1.msra.mxu0 0.0
        %1351 = vmatprep.subr.mxu0 0.0
        %1352 = vmatpush1.msra.mxu0 0.0
        %1353 = vmatprep.mubr.f32.mxu0 0.0
        %1354 = vmatmul.mubr.f32.gmra.mrb[0].mxu0 %v1266
        %v1355 = vpop.f32.mrb[0].mxu0
        %v1356 = vadd.f32 0.0, %v1355
        %v1357 = vpop.f32.mrb[0].mxu0
        %1358 = vmatprep.mubr.f32.mxu0 0.0
        %1359 = vmatmul.mubr.f32.gmra.mrb[0].mxu0 %v1269
        %v1360 = vpop.f32.mrb[0].mxu0
        %v1361 = vadd.f32 0.0, %v1360
        %v1362 = vpop.f32.mrb[0].mxu0
        %1363 = vmatprep.mubr.f32.mxu0 0.0
        %1364 = vmatmul.mubr.f32.gmra.mrb[0].mxu0 %v1272
        %v1365 = vpop.f32.mrb[0].mxu0
        %v1366 = vadd.f32 0.0, %v1365
        %v1367 = vpop.f32.mrb[0].mxu0
        %1368 = vmatprep.mubr.f32.mxu0 0.0
        %1369 = vmatmul.mubr.f32.gmra.mrb[0].mxu0 %v1275
        %v1370 = vpop.f32.mrb[0].mxu0
        %v1371 = vadd.f32 0.0, %v1370
        %v1372 = vpop.f32.mrb[0].mxu0
        %1373 = vmatprep.mubr.f32.mxu0 0.0
        %1374 = vmatmul.mubr.f32.gmra.mrb[0].mxu0 %v1278
        %v1375 = vpop.f32.mrb[0].mxu0
        %v1376 = vadd.f32 0.0, %v1375
        %v1377 = vpop.f32.mrb[0].mxu0
        %1378 = vmatprep.mubr.f32.mxu0 0.0
        %1379 = vmatmul.mubr.f32.gmra.mrb[0].mxu0 %v1281
        %v1380 = vpop.f32.mrb[0].mxu0
        %v1381 = vadd.f32 0.0, %v1380
        %v1382 = vpop.f32.mrb[0].mxu0
        %1383 = vmatprep.mubr.f32.mxu0 0.0
        %1384 = vmatmul.mubr.f32.gmra.mrb[0].mxu0 %v1284
        %v1385 = vpop.f32.mrb[0].mxu0
        %v1386 = vadd.f32 0.0, %v1385
        %v1387 = vpop.f32.mrb[0].mxu0
        %1388 = vmatprep.mubr.f32.mxu0 0.0
        %1389 = vmatmul.mubr.f32.gmra.mrb[0].mxu0 %v1287
        %v1390 = vpop.f32.mrb[0].mxu0
        %v1391 = vadd.f32 0.0, %v1390
        %v1392 = vpop.f32.mrb[0].mxu0
        %1393 = vdwg.mxu0
        %1402 = vrot.lane.b32.xlu0 %v704, 64
        %v1403 = vpop.permute.xlu0 %1402
        %1404 = vrot.lane.b32.xlu0 %v705, 64
        %v1405 = vpop.permute.xlu0 %1404
        %1406 = vrot.lane.b32.xlu0 %v706, 64
        %v1407 = vpop.permute.xlu0 %1406
        %1408 = vrot.lane.b32.xlu0 %v707, 64
        %v1409 = vpop.permute.xlu0 %1408
        %1410 = vrot.lane.b32.xlu0 %v708, 64
        %v1411 = vpop.permute.xlu0 %1410
        %1412 = vrot.lane.b32.xlu0 %v709, 64
        %v1413 = vpop.permute.xlu0 %1412
        %1414 = vrot.lane.b32.xlu0 %v710, 64
        %v1415 = vpop.permute.xlu0 %1414
        %1416 = vrot.lane.b32.xlu0 %v711, 64
        %v1417 = vpop.permute.xlu0 %1416
        %v1427 = vsel %vm1056, %v1218, 0
        %v1430 = vsel %vm1056, %v1220, 0
        %v1433 = vsel %vm1056, %v1222, 0
        %v1436 = vsel %vm1056, %v1224, 0
        %v1439 = vsel %vm1056, %v1226, 0
        %v1442 = vsel %vm1056, %v1228, 0
        %v1445 = vsel %vm1056, %v1230, 0
        %v1448 = vsel %vm1056, %v1232, 0
        %1450 = vmatprep.subr.mxu0 0.0
        %1451 = vmatpush1.msra.mxu0 %v1403
        %1452 = vmatprep.subr.mxu0 0.0
        %1453 = vmatpush1.msra.mxu0 %v1405
        %1454 = vmatprep.subr.mxu0 0.0
        %1455 = vmatpush1.msra.mxu0 %v1407
        %1456 = vmatprep.subr.mxu0 0.0
        %1457 = vmatpush1.msra.mxu0 %v1409
        %1458 = vmatprep.subr.mxu0 0.0
        %1459 = vmatpush1.msra.mxu0 %v1411
        %1460 = vmatprep.subr.mxu0 0.0
        %1461 = vmatpush1.msra.mxu0 %v1413
        %1462 = vmatprep.subr.mxu0 0.0
        %1463 = vmatpush1.msra.mxu0 %v1415
        %1464 = vmatprep.subr.mxu0 0.0
        %1465 = vmatpush1.msra.mxu0 %v1417
        %1466 = vmatprep.subr.mxu0 0.0
        %1467 = vmatpush1.msra.mxu0 0.0
        %1468 = vmatprep.subr.mxu0 0.0
        %1469 = vmatpush1.msra.mxu0 0.0
        %1470 = vmatprep.subr.mxu0 0.0
        %1471 = vmatpush1.msra.mxu0 0.0
        %1472 = vmatprep.subr.mxu0 0.0
        %1473 = vmatpush1.msra.mxu0 0.0
        %1474 = vmatprep.subr.mxu0 0.0
        %1475 = vmatpush1.msra.mxu0 0.0
        %1476 = vmatprep.subr.mxu0 0.0
        %1477 = vmatpush1.msra.mxu0 0.0
        %1478 = vmatprep.subr.mxu0 0.0
        %1479 = vmatpush1.msra.mxu0 0.0
        %1480 = vmatprep.subr.mxu0 0.0
        %1481 = vmatpush1.msra.mxu0 0.0
        %1482 = vmatprep.subr.mxu0 0.0
        %1483 = vmatpush1.msra.mxu0 0.0
        %1484 = vmatprep.subr.mxu0 0.0
        %1485 = vmatpush1.msra.mxu0 0.0
        %1486 = vmatprep.subr.mxu0 0.0
        %1487 = vmatpush1.msra.mxu0 0.0
        %1488 = vmatprep.subr.mxu0 0.0
        %1489 = vmatpush1.msra.mxu0 0.0
        %1490 = vmatprep.subr.mxu0 0.0
        %1491 = vmatpush1.msra.mxu0 0.0
        %1492 = vmatprep.subr.mxu0 0.0
        %1493 = vmatpush1.msra.mxu0 0.0
        %1494 = vmatprep.subr.mxu0 0.0
        %1495 = vmatpush1.msra.mxu0 0.0
        %1496 = vmatprep.subr.mxu0 0.0
        %1497 = vmatpush1.msra.mxu0 0.0
        %1498 = vmatprep.subr.mxu0 0.0
        %1499 = vmatpush1.msra.mxu0 0.0
        %1500 = vmatprep.subr.mxu0 0.0
        %1501 = vmatpush1.msra.mxu0 0.0
        %1502 = vmatprep.subr.mxu0 0.0
        %1503 = vmatpush1.msra.mxu0 0.0
        %1504 = vmatprep.subr.mxu0 0.0
        %1505 = vmatpush1.msra.mxu0 0.0
        %1506 = vmatprep.subr.mxu0 0.0
        %1507 = vmatpush1.msra.mxu0 0.0
        %1508 = vmatprep.subr.mxu0 0.0
        %1509 = vmatpush1.msra.mxu0 0.0
        %1510 = vmatprep.subr.mxu0 0.0
        %1511 = vmatpush1.msra.mxu0 0.0
        %1512 = vmatprep.subr.mxu0 0.0
        %1513 = vmatpush1.msra.mxu0 0.0
        %1514 = vmatprep.mubr.f32.mxu0 0.0
        %1515 = vmatmul.mubr.f32.gmra.mrb[0].mxu0 %v1427
        %v1516 = vpop.f32.mrb[0].mxu0
        %v1517 = vadd.f32 0.0, %v1516
        %v1518 = vpop.f32.mrb[0].mxu0
        %1519 = vmatprep.mubr.f32.mxu0 0.0
        %1520 = vmatmul.mubr.f32.gmra.mrb[0].mxu0 %v1430
        %v1521 = vpop.f32.mrb[0].mxu0
        %v1522 = vadd.f32 0.0, %v1521
        %v1523 = vpop.f32.mrb[0].mxu0
        %1524 = vmatprep.mubr.f32.mxu0 0.0
        %1525 = vmatmul.mubr.f32.gmra.mrb[0].mxu0 %v1433
        %v1526 = vpop.f32.mrb[0].mxu0
        %v1527 = vadd.f32 0.0, %v1526
        %v1528 = vpop.f32.mrb[0].mxu0
        %1529 = vmatprep.mubr.f32.mxu0 0.0
        %1530 = vmatmul.mubr.f32.gmra.mrb[0].mxu0 %v1436
        %v1531 = vpop.f32.mrb[0].mxu0
        %v1532 = vadd.f32 0.0, %v1531
        %v1533 = vpop.f32.mrb[0].mxu0
        %1534 = vmatprep.mubr.f32.mxu0 0.0
        %1535 = vmatmul.mubr.f32.gmra.mrb[0].mxu0 %v1439
        %v1536 = vpop.f32.mrb[0].mxu0
        %v1537 = vadd.f32 0.0, %v1536
        %v1538 = vpop.f32.mrb[0].mxu0
        %1539 = vmatprep.mubr.f32.mxu0 0.0
        %1540 = vmatmul.mubr.f32.gmra.mrb[0].mxu0 %v1442
        %v1541 = vpop.f32.mrb[0].mxu0
        %v1542 = vadd.f32 0.0, %v1541
        %v1543 = vpop.f32.mrb[0].mxu0
        %1544 = vmatprep.mubr.f32.mxu0 0.0
        %1545 = vmatmul.mubr.f32.gmra.mrb[0].mxu0 %v1445
        %v1546 = vpop.f32.mrb[0].mxu0
        %v1547 = vadd.f32 0.0, %v1546
        %v1548 = vpop.f32.mrb[0].mxu0
        %1549 = vmatprep.mubr.f32.mxu0 0.0
        %1550 = vmatmul.mubr.f32.gmra.mrb[0].mxu0 %v1448
        %v1551 = vpop.f32.mrb[0].mxu0
        %v1552 = vadd.f32 0.0, %v1551
        %v1553 = vpop.f32.mrb[0].mxu0
        %1554 = vdwg.mxu0
        %v1555 = vadd.f32 %v1356, %v1361
        %v1556 = vadd.f32 %v1517, %v1522
        %v1557 = vadd.f32 %v1555, %v1366
        %v1558 = vadd.f32 %v1556, %v1527
        %v1559 = vadd.f32 %v1557, %v1371
        %v1560 = vadd.f32 %v1558, %v1532
        %v1561 = vadd.f32 %v1559, %v1376
        %v1562 = vadd.f32 %v1560, %v1537
        %v1563 = vadd.f32 %v1561, %v1381
        %v1564 = vadd.f32 %v1562, %v1542
        %v1565 = vadd.f32 %v1563, %v1386
        %v1566 = vadd.f32 %v1564, %v1547
        %v1567 = vadd.f32 %v1565, %v1391
        %v1568 = vadd.f32 %v1566, %v1552
        %v1569 = vld [vmem:[%s423] sm:$0xff]
        %v1570 = vld [vmem:[%s423 + $0x8] sm:$0xff]
        %v1571 = vld [vmem:[%s423 + $0x10] sm:$0xff]
        %v1572 = vld [vmem:[%s423 + $0x18] sm:$0xff]
        %v1573 = vld [vmem:[%s503] sm:$0x1]
        %v1575 = vlaneseq
        %v1576 = vshrl.u32 %v1575, 7
        %v1577 = vsub.s32 0, %v1576
        %v1578 = vrot.slane %v1573, %v1577
        %v1581 = vsel %vm534, %v1567, 0
        %v1584 = vsel %vm534, %v1568, 0
        %1586 = vmatprep.subr.mxu0 0.0
        %1587 = vmatpush1.msra.mxu0 %v1569
        %1588 = vmatprep.subr.mxu0 0.0
        %1589 = vmatpush1.msra.mxu0 %v1570
        %1590 = vmatprep.subr.mxu0 0.0
        %1591 = vmatpush1.msra.mxu0 %v1571
        %1592 = vmatprep.subr.mxu0 0.0
        %1593 = vmatpush1.msra.mxu0 %v1572
        %1594 = vmatprep.subr.mxu0 0.0
        %1595 = vmatpush1.msra.mxu0 0.0
        %1596 = vmatprep.subr.mxu0 0.0
        %1597 = vmatpush1.msra.mxu0 0.0
        %1598 = vmatprep.subr.mxu0 0.0
        %1599 = vmatpush1.msra.mxu0 0.0
        %1600 = vmatprep.subr.mxu0 0.0
        %1601 = vmatpush1.msra.mxu0 0.0
        %1602 = vmatprep.subr.mxu0 0.0
        %1603 = vmatpush1.msra.mxu0 0.0
        %1604 = vmatprep.subr.mxu0 0.0
        %1605 = vmatpush1.msra.mxu0 0.0
        %1606 = vmatprep.subr.mxu0 0.0
        %1607 = vmatpush1.msra.mxu0 0.0
        %1608 = vmatprep.subr.mxu0 0.0
        %1609 = vmatpush1.msra.mxu0 0.0
        %1610 = vmatprep.subr.mxu0 0.0
        %1611 = vmatpush1.msra.mxu0 0.0
        %1612 = vmatprep.subr.mxu0 0.0
        %1613 = vmatpush1.msra.mxu0 0.0
        %1614 = vmatprep.subr.mxu0 0.0
        %1615 = vmatpush1.msra.mxu0 0.0
        %1616 = vmatprep.subr.mxu0 0.0
        %1617 = vmatpush1.msra.mxu0 0.0
        %1618 = vmatprep.subr.mxu0 0.0
        %1619 = vmatpush1.msra.mxu0 0.0
        %1620 = vmatprep.subr.mxu0 0.0
        %1621 = vmatpush1.msra.mxu0 0.0
        %1622 = vmatprep.subr.mxu0 0.0
        %1623 = vmatpush1.msra.mxu0 0.0
        %1624 = vmatprep.subr.mxu0 0.0
        %1625 = vmatpush1.msra.mxu0 0.0
        %1626 = vmatprep.subr.mxu0 0.0
        %1627 = vmatpush1.msra.mxu0 0.0
        %1628 = vmatprep.subr.mxu0 0.0
        %1629 = vmatpush1.msra.mxu0 0.0
        %1630 = vmatprep.subr.mxu0 0.0
        %1631 = vmatpush1.msra.mxu0 0.0
        %1632 = vmatprep.subr.mxu0 0.0
        %1633 = vmatpush1.msra.mxu0 0.0
        %1634 = vmatprep.subr.mxu0 0.0
        %1635 = vmatpush1.msra.mxu0 0.0
        %1636 = vmatprep.subr.mxu0 0.0
        %1637 = vmatpush1.msra.mxu0 0.0
        %1638 = vmatprep.subr.mxu0 0.0
        %1639 = vmatpush1.msra.mxu0 0.0
        %1640 = vmatprep.subr.mxu0 0.0
        %1641 = vmatpush1.msra.mxu0 0.0
        %1642 = vmatprep.subr.mxu0 0.0
        %1643 = vmatpush1.msra.mxu0 0.0
        %1644 = vmatprep.subr.mxu0 0.0
        %1645 = vmatpush1.msra.mxu0 0.0
        %1646 = vmatprep.subr.mxu0 0.0
        %1647 = vmatpush1.msra.mxu0 0.0
        %1648 = vmatprep.subr.mxu0 0.0
        %1649 = vmatpush1.msra.mxu0 0.0
        %1650 = vmatprep.mubr.f32.mxu0 0.0
        %1651 = vmatmul.mubr.f32.gmra.mrb[0].mxu0 %v1581
        %v1652 = vpop.f32.mrb[0].mxu0
        %v1653 = vadd.f32 %v1578, %v1652
        %v1654 = vpop.f32.mrb[0].mxu0
        %1655 = vmatprep.mubr.f32.mxu0 0.0
        %1656 = vmatmul.mubr.f32.gmra.mrb[0].mxu0 %v1584
        %v1657 = vpop.f32.mrb[0].mxu0
        %v1658 = vadd.f32 %v1578, %v1657
        %v1659 = vpop.f32.mrb[0].mxu0
        %1660 = vdwg.mxu0
        %v1661 = vld [vmem:[%s432] sm:$0xff]
        %v1662 = vld [vmem:[%s432 + $0x8] sm:$0xff]
        %v1663 = vld [vmem:[%s432 + $0x10] sm:$0xff]
        %v1664 = vld [vmem:[%s432 + $0x18] sm:$0xff]
        %v1665 = vld [vmem:[%s507] sm:$0x3]
        %v1666 = vld [vmem:[%s511] sm:$0x3]
        %v1668 = vsel %vm534, %v1665, 0
        %1670 = vmatprep.subr.mxu0 0.0
        %1671 = vmatpush1.msra.mxu0 %v1661
        %1672 = vmatprep.subr.mxu0 0.0
        %1673 = vmatpush1.msra.mxu0 %v1662
        %1674 = vmatprep.subr.mxu0 0.0
        %1675 = vmatpush1.msra.mxu0 %v1663
        %1676 = vmatprep.subr.mxu0 0.0
        %1677 = vmatpush1.msra.mxu0 %v1664
        %1678 = vmatprep.subr.mxu0 0.0
        %1679 = vmatpush1.msra.mxu0 0.0
        %1680 = vmatprep.subr.mxu0 0.0
        %1681 = vmatpush1.msra.mxu0 0.0
        %1682 = vmatprep.subr.mxu0 0.0
        %1683 = vmatpush1.msra.mxu0 0.0
        %1684 = vmatprep.subr.mxu0 0.0
        %1685 = vmatpush1.msra.mxu0 0.0
        %1686 = vmatprep.subr.mxu0 0.0
        %1687 = vmatpush1.msra.mxu0 0.0
        %1688 = vmatprep.subr.mxu0 0.0
        %1689 = vmatpush1.msra.mxu0 0.0
        %1690 = vmatprep.subr.mxu0 0.0
        %1691 = vmatpush1.msra.mxu0 0.0
        %1692 = vmatprep.subr.mxu0 0.0
        %1693 = vmatpush1.msra.mxu0 0.0
        %1694 = vmatprep.subr.mxu0 0.0
        %1695 = vmatpush1.msra.mxu0 0.0
        %1696 = vmatprep.subr.mxu0 0.0
        %1697 = vmatpush1.msra.mxu0 0.0
        %1698 = vmatprep.subr.mxu0 0.0
        %1699 = vmatpush1.msra.mxu0 0.0
        %1700 = vmatprep.subr.mxu0 0.0
        %1701 = vmatpush1.msra.mxu0 0.0
        %1702 = vmatprep.subr.mxu0 0.0
        %1703 = vmatpush1.msra.mxu0 0.0
        %1704 = vmatprep.subr.mxu0 0.0
        %1705 = vmatpush1.msra.mxu0 0.0
        %1706 = vmatprep.subr.mxu0 0.0
        %1707 = vmatpush1.msra.mxu0 0.0
        %1708 = vmatprep.subr.mxu0 0.0
        %1709 = vmatpush1.msra.mxu0 0.0
        %1710 = vmatprep.subr.mxu0 0.0
        %1711 = vmatpush1.msra.mxu0 0.0
        %1712 = vmatprep.subr.mxu0 0.0
        %1713 = vmatpush1.msra.mxu0 0.0
        %1714 = vmatprep.subr.mxu0 0.0
        %1715 = vmatpush1.msra.mxu0 0.0
        %1716 = vmatprep.subr.mxu0 0.0
        %1717 = vmatpush1.msra.mxu0 0.0
        %1718 = vmatprep.subr.mxu0 0.0
        %1719 = vmatpush1.msra.mxu0 0.0
        %1720 = vmatprep.subr.mxu0 0.0
        %1721 = vmatpush1.msra.mxu0 0.0
        %1722 = vmatprep.subr.mxu0 0.0
        %1723 = vmatpush1.msra.mxu0 0.0
        %1724 = vmatprep.subr.mxu0 0.0
        %1725 = vmatpush1.msra.mxu0 0.0
        %1726 = vmatprep.subr.mxu0 0.0
        %1727 = vmatpush1.msra.mxu0 0.0
        %1728 = vmatprep.subr.mxu0 0.0
        %1729 = vmatpush1.msra.mxu0 0.0
        %1730 = vmatprep.subr.mxu0 0.0
        %1731 = vmatpush1.msra.mxu0 0.0
        %1732 = vmatprep.subr.mxu0 0.0
        %1733 = vmatpush1.msra.mxu0 0.0
        %1734 = vmatprep.mubr.f32.mxu0 0.0
        %1735 = vmatmul.mubr.f32.gmra.mrb[0].mxu0 %v1668
        %v1736 = vpop.f32.mrb[0].mxu0
        %v1737 = vadd.f32 0.0, %v1736
        %v1738 = vpop.f32.mrb[0].mxu0
        %1739 = vdwg.mxu0
        %v1741 = vrot.slane %v1737, 1
        %v1744 = vadd.f32 %v1653, %v1737
        %v1745 = vadd.f32 %v1658, %v1741
        %v1746 = vrot.slane %v1737, 2
        %v1748 = vadd.f32 %v1653, %v1741
        %v1749 = vadd.f32 %v1658, %v1746
        %v1750 = vxor.u32 %v1744, 2147483648
        %v1751 = vxor.u32 %v1745, 2147483648
        %v1752 = vmul.f32 %v1750, 1.442695
        %v1753 = vpow.pop %v1752
        %v1754 = vmul.f32 %v1751, 1.442695
        %v1755 = vpow.pop %v1754
        %v1756 = vadd.f32 %v1753, 1.0
        %v1757 = vadd.f32 %v1755, 1.0
        %v1758 = vrcp.pop %v1756
        %v1759 = vmul.f32 1.0, %v1758
        %v1760 = vrcp.pop %v1757
        %v1761 = vmul.f32 1.0, %v1760
        %v1762 = vxor.u32 %v1748, 2147483648
        %v1763 = vxor.u32 %v1749, 2147483648
        %v1764 = vmul.f32 %v1762, 1.442695
        %v1765 = vpow.pop %v1764
        %v1766 = vmul.f32 %v1763, 1.442695
        %v1767 = vpow.pop %v1766
        %v1768 = vadd.f32 %v1765, 1.0
        %v1769 = vadd.f32 %v1767, 1.0
        %v1770 = vrcp.pop %v1768
        %v1771 = vmul.f32 1.0, %v1770
        %v1772 = vrcp.pop %v1769
        %v1773 = vmul.f32 1.0, %v1772
        %v1774 = vtanh.pop %v1744
        %v1775 = vtanh.pop %v1745
        %v1776 = vtanh.pop %v1748
        %v1777 = vtanh.pop %v1749
        %v1779 = vrot.slane %v1666, 1
        %1780 = vrot.lane.b32.xlu0 %v1666, 16
        %v1781 = vpop.permute.xlu0 %1780
        %1782 = vrot.lane.b32.xlu0 %v1779, 16
        %v1783 = vpop.permute.xlu0 %1782
        %v1786 = vmul.f32 %v1759, %v1781
        %v1787 = vmul.f32 %v1761, %v1783
        %1790 = vrot.lane.b32.xlu0 %v1774, 80
        %v1791 = vpop.permute.xlu0 %1790
        %1792 = vrot.lane.b32.xlu0 %v1775, 80
        %v1793 = vpop.permute.xlu0 %1792
        %v1796 = vmul.f32 %v1759, %v1791
        %v1797 = vmul.f32 %v1761, %v1793
        %1800 = vrot.lane.b32.xlu0 %v1796, 16
        %v1801 = vpop.permute.xlu0 %1800
        %1802 = vrot.lane.b32.xlu0 %v1797, 16
        %v1803 = vpop.permute.xlu0 %1802
        %v1806 = vadd.f32 %v1786, %v1801
        %v1807 = vadd.f32 %v1787, %v1803
        %v1808 = vrot.slane %v1666, 2
        %1809 = vrot.lane.b32.xlu0 %v1779, 64
        %v1810 = vpop.permute.xlu0 %1809
        %1811 = vrot.lane.b32.xlu0 %v1808, 64
        %v1812 = vpop.permute.xlu0 %1811
        %v1815 = vmul.f32 %v1771, %v1810
        %v1816 = vmul.f32 %v1773, %v1812
        %1819 = vrot.lane.b32.xlu0 %v1776, 80
        %v1820 = vpop.permute.xlu0 %1819
        %1821 = vrot.lane.b32.xlu0 %v1777, 80
        %v1822 = vpop.permute.xlu0 %1821
        %v1825 = vmul.f32 %v1771, %v1820
        %v1826 = vmul.f32 %v1773, %v1822
        %1829 = vrot.lane.b32.xlu0 %v1825, 16
        %v1830 = vpop.permute.xlu0 %1829
        %1831 = vrot.lane.b32.xlu0 %v1826, 16
        %v1832 = vpop.permute.xlu0 %1831
        %v1835 = vadd.f32 %v1815, %v1830
        %v1836 = vadd.f32 %v1816, %v1832
        %v1837 = vtanh.pop %v1806
        %v1838 = vtanh.pop %v1807
        %1841 = vrot.lane.b32.xlu0 %v1837, 16
        %v1842 = vpop.permute.xlu0 %1841
        %1843 = vrot.lane.b32.xlu0 %v1838, 16
        %v1844 = vpop.permute.xlu0 %1843
        %v1847 = vmul.f32 %v1759, %v1842
        %v1848 = vmul.f32 %v1761, %v1844
        %v1849 = vtanh.pop %v1835
        %v1850 = vtanh.pop %v1836
        %1853 = vrot.lane.b32.xlu0 %v1849, 16
        %v1854 = vpop.permute.xlu0 %1853
        %1855 = vrot.lane.b32.xlu0 %v1850, 16
        %v1856 = vpop.permute.xlu0 %1855
        %v1859 = vmul.f32 %v1771, %v1854
        %v1860 = vmul.f32 %v1773, %v1856
        %v1863 = vrot.slane %v1848, 7
        %vm1864 = vcmask 1041409
        %v1865 = vsel %vm1864, %v1863, %v1847
        %1866 = vrot.lane.b32.xlu0 %v1865, 96
        %v1867 = vpop.permute.xlu0 %1866
        %v1871 = vrot.slane %v1859, 7
        %v1872 = vrot.slane %v1860, 6
        %v1873 = vsel %vm1864, %v1872, %v1871
        %1874 = vrot.lane.b32.xlu0 %v1873, 48
        %v1875 = vpop.permute.xlu0 %1874
        %vm1877 = vcmask 130048
        %v1878 = vsel %vm1877, %v1867, %v1875
        %1879 = vrot.lane.b32.xlu0 %v1847, 96
        %v1880 = vpop.permute.xlu0 %1879
        %1881 = vrot.lane.b32.xlu0 %v1848, 96
        %v1882 = vpop.permute.xlu0 %1881
        %vm1885 = vcmask 122880
        %1886 = vst.msk [vmem:[#allocation2] sm:$0x1] %vm1885, %v1880
        %1887 = vst.msk [vmem:[#allocation2 + $0x8] sm:$0x1] %vm1885, %v1882
        %1888 = vrot.lane.b32.xlu0 %v1859, 48
        %v1889 = vpop.permute.xlu0 %1888
        %1890 = vrot.lane.b32.xlu0 %v1860, 48
        %v1891 = vpop.permute.xlu0 %1890
        %vm1894 = vcmask 261255
        %1895 = vst.msk [vmem:[#allocation2] sm:$0x80] %vm1894, %v1889
        %1896 = vst.msk [vmem:[#allocation2 + $0x8] sm:$0x80] %vm1894, %v1891
        %v1898 = vsel %vm534, %v1878, 0
        %1900 = vmatprep.subr.mxu0 0.0
        %1901 = vmatpush1.msra.mxu0 %v1661
        %1902 = vmatprep.subr.mxu0 0.0
        %1903 = vmatpush1.msra.mxu0 %v1662
        %1904 = vmatprep.subr.mxu0 0.0
        %1905 = vmatpush1.msra.mxu0 %v1663
        %1906 = vmatprep.subr.mxu0 0.0
        %1907 = vmatpush1.msra.mxu0 %v1664
        %1908 = vmatprep.subr.mxu0 0.0
        %1909 = vmatpush1.msra.mxu0 0.0
        %1910 = vmatprep.subr.mxu0 0.0
        %1911 = vmatpush1.msra.mxu0 0.0
        %1912 = vmatprep.subr.mxu0 0.0
        %1913 = vmatpush1.msra.mxu0 0.0
        %1914 = vmatprep.subr.mxu0 0.0
        %1915 = vmatpush1.msra.mxu0 0.0
        %1916 = vmatprep.subr.mxu0 0.0
        %1917 = vmatpush1.msra.mxu0 0.0
        %1918 = vmatprep.subr.mxu0 0.0
        %1919 = vmatpush1.msra.mxu0 0.0
        %1920 = vmatprep.subr.mxu0 0.0
        %1921 = vmatpush1.msra.mxu0 0.0
        %1922 = vmatprep.subr.mxu0 0.0
        %1923 = vmatpush1.msra.mxu0 0.0
        %1924 = vmatprep.subr.mxu0 0.0
        %1925 = vmatpush1.msra.mxu0 0.0
        %1926 = vmatprep.subr.mxu0 0.0
        %1927 = vmatpush1.msra.mxu0 0.0
        %1928 = vmatprep.subr.mxu0 0.0
        %1929 = vmatpush1.msra.mxu0 0.0
        %1930 = vmatprep.subr.mxu0 0.0
        %1931 = vmatpush1.msra.mxu0 0.0
        %1932 = vmatprep.subr.mxu0 0.0
        %1933 = vmatpush1.msra.mxu0 0.0
        %1934 = vmatprep.subr.mxu0 0.0
        %1935 = vmatpush1.msra.mxu0 0.0
        %1936 = vmatprep.subr.mxu0 0.0
        %1937 = vmatpush1.msra.mxu0 0.0
        %1938 = vmatprep.subr.mxu0 0.0
        %1939 = vmatpush1.msra.mxu0 0.0
        %1940 = vmatprep.subr.mxu0 0.0
        %1941 = vmatpush1.msra.mxu0 0.0
        %1942 = vmatprep.subr.mxu0 0.0
        %1943 = vmatpush1.msra.mxu0 0.0
        %1944 = vmatprep.subr.mxu0 0.0
        %1945 = vmatpush1.msra.mxu0 0.0
        %1946 = vmatprep.subr.mxu0 0.0
        %1947 = vmatpush1.msra.mxu0 0.0
        %1948 = vmatprep.subr.mxu0 0.0
        %1949 = vmatpush1.msra.mxu0 0.0
        %1950 = vmatprep.subr.mxu0 0.0
        %1951 = vmatpush1.msra.mxu0 0.0
        %1952 = vmatprep.subr.mxu0 0.0
        %1953 = vmatpush1.msra.mxu0 0.0
        %1954 = vmatprep.subr.mxu0 0.0
        %1955 = vmatpush1.msra.mxu0 0.0
        %1956 = vmatprep.subr.mxu0 0.0
        %1957 = vmatpush1.msra.mxu0 0.0
        %1958 = vmatprep.subr.mxu0 0.0
        %1959 = vmatpush1.msra.mxu0 0.0
        %1960 = vmatprep.subr.mxu0 0.0
        %1961 = vmatpush1.msra.mxu0 0.0
        %1962 = vmatprep.subr.mxu0 0.0
        %1963 = vmatpush1.msra.mxu0 0.0
        %1964 = vmatprep.mubr.f32.mxu0 0.0
        %1965 = vmatmul.mubr.f32.gmra.mrb[0].mxu0 %v1898
        %v1966 = vpop.f32.mrb[0].mxu0
        %v1967 = vadd.f32 0.0, %v1966
        %v1968 = vpop.f32.mrb[0].mxu0
        %1969 = vdwg.mxu0
        %v1971 = vrot.slane %v1967, 7
        %v1974 = vadd.f32 %v1653, %v1971
        %v1975 = vadd.f32 %v1658, %v1967
        %v1976 = vrot.slane %v1967, 2
        %v1977 = vrot.slane %v1967, 3
        %v1980 = vadd.f32 %v1653, %v1976
        %v1981 = vadd.f32 %v1658, %v1977
        %v1982 = vxor.u32 %v1974, 2147483648
        %v1983 = vxor.u32 %v1975, 2147483648
        %v1984 = vmul.f32 %v1982, 1.442695
        %v1985 = vpow.pop %v1984
        %v1986 = vmul.f32 %v1983, 1.442695
        %v1987 = vpow.pop %v1986
        %v1988 = vadd.f32 %v1985, 1.0
        %v1989 = vadd.f32 %v1987, 1.0
        %v1990 = vrcp.pop %v1988
        %v1991 = vmul.f32 1.0, %v1990
        %v1992 = vrcp.pop %v1989
        %v1993 = vmul.f32 1.0, %v1992
        %v1994 = vxor.u32 %v1980, 2147483648
        %v1995 = vxor.u32 %v1981, 2147483648
        %v1996 = vmul.f32 %v1994, 1.442695
        %v1997 = vpow.pop %v1996
        %v1998 = vmul.f32 %v1995, 1.442695
        %v1999 = vpow.pop %v1998
        %v2000 = vadd.f32 %v1997, 1.0
        %v2001 = vadd.f32 %v1999, 1.0
        %v2002 = vrcp.pop %v2000
        %v2003 = vmul.f32 1.0, %v2002
        %v2004 = vrcp.pop %v2001
        %v2005 = vmul.f32 1.0, %v2004
        %v2006 = vtanh.pop %v1974
        %v2007 = vtanh.pop %v1975
        %v2008 = vtanh.pop %v1980
        %v2009 = vtanh.pop %v1981
        %v2012 = vrot.slane %v1806, 7
        %v2013 = vrot.slane %v1807, 7
        %v2016 = vmul.f32 %v1991, %v2012
        %v2017 = vmul.f32 %v1993, %v2013
        %2020 = vrot.lane.b32.xlu0 %v2006, 80
        %v2021 = vpop.permute.xlu0 %2020
        %2022 = vrot.lane.b32.xlu0 %v2007, 80
        %v2023 = vpop.permute.xlu0 %2022
        %v2026 = vmul.f32 %v1991, %v2021
        %v2027 = vmul.f32 %v1993, %v2023
        %2030 = vrot.lane.b32.xlu0 %v2026, 16
        %v2031 = vpop.permute.xlu0 %2030
        %2032 = vrot.lane.b32.xlu0 %v2027, 16
        %v2033 = vpop.permute.xlu0 %2032
        %v2036 = vadd.f32 %v2016, %v2031
        %v2037 = vadd.f32 %v2017, %v2033
        %v2040 = vrot.slane %v1835, 1
        %v2041 = vrot.slane %v1836, 1
        %v2044 = vmul.f32 %v2003, %v2040
        %v2045 = vmul.f32 %v2005, %v2041
        %2048 = vrot.lane.b32.xlu0 %v2008, 80
        %v2049 = vpop.permute.xlu0 %2048
        %2050 = vrot.lane.b32.xlu0 %v2009, 80
        %v2051 = vpop.permute.xlu0 %2050
        %v2054 = vmul.f32 %v2003, %v2049
        %v2055 = vmul.f32 %v2005, %v2051
        %2058 = vrot.lane.b32.xlu0 %v2054, 16
        %v2059 = vpop.permute.xlu0 %2058
        %2060 = vrot.lane.b32.xlu0 %v2055, 16
        %v2061 = vpop.permute.xlu0 %2060
        %v2064 = vadd.f32 %v2044, %v2059
        %v2065 = vadd.f32 %v2045, %v2061
        %v2066 = vtanh.pop %v2036
        %v2067 = vtanh.pop %v2037
        %2070 = vrot.lane.b32.xlu0 %v2066, 16
        %v2071 = vpop.permute.xlu0 %2070
        %2072 = vrot.lane.b32.xlu0 %v2067, 16
        %v2073 = vpop.permute.xlu0 %2072
        %v2076 = vmul.f32 %v1991, %v2071
        %v2077 = vmul.f32 %v1993, %v2073
        %v2078 = vtanh.pop %v2064
        %v2079 = vtanh.pop %v2065
        %2082 = vrot.lane.b32.xlu0 %v2078, 16
        %v2083 = vpop.permute.xlu0 %2082
        %2084 = vrot.lane.b32.xlu0 %v2079, 16
        %v2085 = vpop.permute.xlu0 %2084
        %v2088 = vmul.f32 %v2003, %v2083
        %v2089 = vmul.f32 %v2005, %v2085
        %v2092 = vrot.slane %v2077, 7
        %vm2093 = vcmask 1042434
        %v2094 = vsel %vm2093, %v2092, %v2076
        %2095 = vrot.lane.b32.xlu0 %v2094, 96
        %v2096 = vpop.permute.xlu0 %2095
        %v2100 = vrot.slane %v2088, 5
        %v2101 = vrot.slane %v2089, 4
        %v2102 = vsel %vm2093, %v2101, %v2100
        %2103 = vrot.lane.b32.xlu0 %v2102, 48
        %v2104 = vpop.permute.xlu0 %2103
        %v2106 = vsel %vm1877, %v2096, %v2104
        %2107 = vrot.lane.b32.xlu0 %v2076, 96
        %v2108 = vpop.permute.xlu0 %2107
        %2109 = vrot.lane.b32.xlu0 %v2077, 96
        %v2110 = vpop.permute.xlu0 %2109
        %vm2113 = vcmask 123905
        %2114 = vst.msk [vmem:[#allocation2] sm:$0x2] %vm2113, %v2108
        %2115 = vst.msk [vmem:[#allocation2 + $0x8] sm:$0x2] %vm2113, %v2110
        %2116 = vrot.lane.b32.xlu0 %v2088, 48
        %v2117 = vpop.permute.xlu0 %2116
        %2118 = vrot.lane.b32.xlu0 %v2089, 48
        %v2119 = vpop.permute.xlu0 %2118
        %vm2122 = vcmask 260230
        %2123 = vst.msk [vmem:[#allocation2] sm:$0x40] %vm2122, %v2117
        %2124 = vst.msk [vmem:[#allocation2 + $0x8] sm:$0x40] %vm2122, %v2119
        %v2126 = vrot.slane %v2106, 1
        %v2127 = vsel %vm534, %v2126, 0
        %2129 = vmatprep.subr.mxu0 0.0
        %2130 = vmatpush1.msra.mxu0 %v1661
        %2131 = vmatprep.subr.mxu0 0.0
        %2132 = vmatpush1.msra.mxu0 %v1662
        %2133 = vmatprep.subr.mxu0 0.0
        %2134 = vmatpush1.msra.mxu0 %v1663
        %2135 = vmatprep.subr.mxu0 0.0
        %2136 = vmatpush1.msra.mxu0 %v1664
        %2137 = vmatprep.subr.mxu0 0.0
        %2138 = vmatpush1.msra.mxu0 0.0
        %2139 = vmatprep.subr.mxu0 0.0
        %2140 = vmatpush1.msra.mxu0 0.0
        %2141 = vmatprep.subr.mxu0 0.0
        %2142 = vmatpush1.msra.mxu0 0.0
        %2143 = vmatprep.subr.mxu0 0.0
        %2144 = vmatpush1.msra.mxu0 0.0
        %2145 = vmatprep.subr.mxu0 0.0
        %2146 = vmatpush1.msra.mxu0 0.0
        %2147 = vmatprep.subr.mxu0 0.0
        %2148 = vmatpush1.msra.mxu0 0.0
        %2149 = vmatprep.subr.mxu0 0.0
        %2150 = vmatpush1.msra.mxu0 0.0
        %2151 = vmatprep.subr.mxu0 0.0
        %2152 = vmatpush1.msra.mxu0 0.0
        %2153 = vmatprep.subr.mxu0 0.0
        %2154 = vmatpush1.msra.mxu0 0.0
        %2155 = vmatprep.subr.mxu0 0.0
        %2156 = vmatpush1.msra.mxu0 0.0
        %2157 = vmatprep.subr.mxu0 0.0
        %2158 = vmatpush1.msra.mxu0 0.0
        %2159 = vmatprep.subr.mxu0 0.0
        %2160 = vmatpush1.msra.mxu0 0.0
        %2161 = vmatprep.subr.mxu0 0.0
        %2162 = vmatpush1.msra.mxu0 0.0
        %2163 = vmatprep.subr.mxu0 0.0
        %2164 = vmatpush1.msra.mxu0 0.0
        %2165 = vmatprep.subr.mxu0 0.0
        %2166 = vmatpush1.msra.mxu0 0.0
        %2167 = vmatprep.subr.mxu0 0.0
        %2168 = vmatpush1.msra.mxu0 0.0
        %2169 = vmatprep.subr.mxu0 0.0
        %2170 = vmatpush1.msra.mxu0 0.0
        %2171 = vmatprep.subr.mxu0 0.0
        %2172 = vmatpush1.msra.mxu0 0.0
        %2173 = vmatprep.subr.mxu0 0.0
        %2174 = vmatpush1.msra.mxu0 0.0
        %2175 = vmatprep.subr.mxu0 0.0
        %2176 = vmatpush1.msra.mxu0 0.0
        %2177 = vmatprep.subr.mxu0 0.0
        %2178 = vmatpush1.msra.mxu0 0.0
        %2179 = vmatprep.subr.mxu0 0.0
        %2180 = vmatpush1.msra.mxu0 0.0
        %2181 = vmatprep.subr.mxu0 0.0
        %2182 = vmatpush1.msra.mxu0 0.0
        %2183 = vmatprep.subr.mxu0 0.0
        %2184 = vmatpush1.msra.mxu0 0.0
        %2185 = vmatprep.subr.mxu0 0.0
        %2186 = vmatpush1.msra.mxu0 0.0
        %2187 = vmatprep.subr.mxu0 0.0
        %2188 = vmatpush1.msra.mxu0 0.0
        %2189 = vmatprep.subr.mxu0 0.0
        %2190 = vmatpush1.msra.mxu0 0.0
        %2191 = vmatprep.subr.mxu0 0.0
        %2192 = vmatpush1.msra.mxu0 0.0
        %2193 = vmatprep.mubr.f32.mxu0 0.0
        %2194 = vmatmul.mubr.f32.gmra.mrb[0].mxu0 %v2127
        %v2195 = vpop.f32.mrb[0].mxu0
        %v2196 = vadd.f32 0.0, %v2195
        %v2197 = vpop.f32.mrb[0].mxu0
        %2198 = vdwg.mxu0
        %v2200 = vrot.slane %v2196, 6
        %v2201 = vrot.slane %v2196, 7
        %v2204 = vadd.f32 %v1653, %v2200
        %v2205 = vadd.f32 %v1658, %v2201
        %v2206 = vrot.slane %v2196, 3
        %v2207 = vrot.slane %v2196, 4
        %v2210 = vadd.f32 %v1653, %v2206
        %v2211 = vadd.f32 %v1658, %v2207
        %v2212 = vxor.u32 %v2204, 2147483648
        %v2213 = vxor.u32 %v2205, 2147483648
        %v2214 = vmul.f32 %v2212, 1.442695
        %v2215 = vpow.pop %v2214
        %v2216 = vmul.f32 %v2213, 1.442695
        %v2217 = vpow.pop %v2216
        %v2218 = vadd.f32 %v2215, 1.0
        %v2219 = vadd.f32 %v2217, 1.0
        %v2220 = vrcp.pop %v2218
        %v2221 = vmul.f32 1.0, %v2220
        %v2222 = vrcp.pop %v2219
        %v2223 = vmul.f32 1.0, %v2222
        %v2224 = vxor.u32 %v2210, 2147483648
        %v2225 = vxor.u32 %v2211, 2147483648
        %v2226 = vmul.f32 %v2224, 1.442695
        %v2227 = vpow.pop %v2226
        %v2228 = vmul.f32 %v2225, 1.442695
        %v2229 = vpow.pop %v2228
        %v2230 = vadd.f32 %v2227, 1.0
        %v2231 = vadd.f32 %v2229, 1.0
        %v2232 = vrcp.pop %v2230
        %v2233 = vmul.f32 1.0, %v2232
        %v2234 = vrcp.pop %v2231
        %v2235 = vmul.f32 1.0, %v2234
        %v2236 = vtanh.pop %v2204
        %v2237 = vtanh.pop %v2205
        %v2238 = vtanh.pop %v2210
        %v2239 = vtanh.pop %v2211
        %v2242 = vrot.slane %v2036, 7
        %v2243 = vrot.slane %v2037, 7
        %v2246 = vmul.f32 %v2221, %v2242
        %v2247 = vmul.f32 %v2223, %v2243
        %2250 = vrot.lane.b32.xlu0 %v2236, 80
        %v2251 = vpop.permute.xlu0 %2250
        %2252 = vrot.lane.b32.xlu0 %v2237, 80
        %v2253 = vpop.permute.xlu0 %2252
        %v2256 = vmul.f32 %v2221, %v2251
        %v2257 = vmul.f32 %v2223, %v2253
        %2260 = vrot.lane.b32.xlu0 %v2256, 16
        %v2261 = vpop.permute.xlu0 %2260
        %2262 = vrot.lane.b32.xlu0 %v2257, 16
        %v2263 = vpop.permute.xlu0 %2262
        %v2266 = vadd.f32 %v2246, %v2261
        %v2267 = vadd.f32 %v2247, %v2263
        %v2270 = vrot.slane %v2064, 1
        %v2271 = vrot.slane %v2065, 1
        %v2274 = vmul.f32 %v2233, %v2270
        %v2275 = vmul.f32 %v2235, %v2271
        %2278 = vrot.lane.b32.xlu0 %v2238, 80
        %v2279 = vpop.permute.xlu0 %2278
        %2280 = vrot.lane.b32.xlu0 %v2239, 80
        %v2281 = vpop.permute.xlu0 %2280
        %v2284 = vmul.f32 %v2233, %v2279
        %v2285 = vmul.f32 %v2235, %v2281
        %2288 = vrot.lane.b32.xlu0 %v2284, 16
        %v2289 = vpop.permute.xlu0 %2288
        %2290 = vrot.lane.b32.xlu0 %v2285, 16
        %v2291 = vpop.permute.xlu0 %2290
        %v2294 = vadd.f32 %v2274, %v2289
        %v2295 = vadd.f32 %v2275, %v2291
        %v2296 = vtanh.pop %v2266
        %v2297 = vtanh.pop %v2267
        %2300 = vrot.lane.b32.xlu0 %v2296, 16
        %v2301 = vpop.permute.xlu0 %2300
        %2302 = vrot.lane.b32.xlu0 %v2297, 16
        %v2303 = vpop.permute.xlu0 %2302
        %v2306 = vmul.f32 %v2221, %v2301
        %v2307 = vmul.f32 %v2223, %v2303
        %v2308 = vtanh.pop %v2294
        %v2309 = vtanh.pop %v2295
        %2312 = vrot.lane.b32.xlu0 %v2308, 16
        %v2313 = vpop.permute.xlu0 %2312
        %2314 = vrot.lane.b32.xlu0 %v2309, 16
        %v2315 = vpop.permute.xlu0 %2314
        %v2318 = vmul.f32 %v2233, %v2313
        %v2319 = vmul.f32 %v2235, %v2315
        %v2322 = vrot.slane %v2307, 7
        %vm2323 = vcmask 1043459
        %v2324 = vsel %vm2323, %v2322, %v2306
        %2325 = vrot.lane.b32.xlu0 %v2324, 96
        %v2326 = vpop.permute.xlu0 %2325
        %v2330 = vrot.slane %v2318, 3
        %v2331 = vrot.slane %v2319, 2
        %v2332 = vsel %vm2323, %v2331, %v2330
        %2333 = vrot.lane.b32.xlu0 %v2332, 48
        %v2334 = vpop.permute.xlu0 %2333
        %v2336 = vsel %vm1877, %v2326, %v2334
        %2337 = vrot.lane.b32.xlu0 %v2306, 96
        %v2338 = vpop.permute.xlu0 %2337
        %2339 = vrot.lane.b32.xlu0 %v2307, 96
        %v2340 = vpop.permute.xlu0 %2339
        %vm2343 = vcmask 124930
        %2344 = vst.msk [vmem:[#allocation2] sm:$0x4] %vm2343, %v2338
        %2345 = vst.msk [vmem:[#allocation2 + $0x8] sm:$0x4] %vm2343, %v2340
        %2346 = vrot.lane.b32.xlu0 %v2318, 48
        %v2347 = vpop.permute.xlu0 %2346
        %2348 = vrot.lane.b32.xlu0 %v2319, 48
        %v2349 = vpop.permute.xlu0 %2348
        %vm2352 = vcmask 259205
        %2353 = vst.msk [vmem:[#allocation2] sm:$0x20] %vm2352, %v2347
        %2354 = vst.msk [vmem:[#allocation2 + $0x8] sm:$0x20] %vm2352, %v2349
        %v2356 = vrot.slane %v2336, 2
        %v2357 = vsel %vm534, %v2356, 0
        %2359 = vmatprep.subr.mxu0 0.0
        %2360 = vmatpush1.msra.mxu0 %v1661
        %2361 = vmatprep.subr.mxu0 0.0
        %2362 = vmatpush1.msra.mxu0 %v1662
        %2363 = vmatprep.subr.mxu0 0.0
        %2364 = vmatpush1.msra.mxu0 %v1663
        %2365 = vmatprep.subr.mxu0 0.0
        %2366 = vmatpush1.msra.mxu0 %v1664
        %2367 = vmatprep.subr.mxu0 0.0
        %2368 = vmatpush1.msra.mxu0 0.0
        %2369 = vmatprep.subr.mxu0 0.0
        %2370 = vmatpush1.msra.mxu0 0.0
        %2371 = vmatprep.subr.mxu0 0.0
        %2372 = vmatpush1.msra.mxu0 0.0
        %2373 = vmatprep.subr.mxu0 0.0
        %2374 = vmatpush1.msra.mxu0 0.0
        %2375 = vmatprep.subr.mxu0 0.0
        %2376 = vmatpush1.msra.mxu0 0.0
        %2377 = vmatprep.subr.mxu0 0.0
        %2378 = vmatpush1.msra.mxu0 0.0
        %2379 = vmatprep.subr.mxu0 0.0
        %2380 = vmatpush1.msra.mxu0 0.0
        %2381 = vmatprep.subr.mxu0 0.0
        %2382 = vmatpush1.msra.mxu0 0.0
        %2383 = vmatprep.subr.mxu0 0.0
        %2384 = vmatpush1.msra.mxu0 0.0
        %2385 = vmatprep.subr.mxu0 0.0
        %2386 = vmatpush1.msra.mxu0 0.0
        %2387 = vmatprep.subr.mxu0 0.0
        %2388 = vmatpush1.msra.mxu0 0.0
        %2389 = vmatprep.subr.mxu0 0.0
        %2390 = vmatpush1.msra.mxu0 0.0
        %2391 = vmatprep.subr.mxu0 0.0
        %2392 = vmatpush1.msra.mxu0 0.0
        %2393 = vmatprep.subr.mxu0 0.0
        %2394 = vmatpush1.msra.mxu0 0.0
        %2395 = vmatprep.subr.mxu0 0.0
        %2396 = vmatpush1.msra.mxu0 0.0
        %2397 = vmatprep.subr.mxu0 0.0
        %2398 = vmatpush1.msra.mxu0 0.0
        %2399 = vmatprep.subr.mxu0 0.0
        %2400 = vmatpush1.msra.mxu0 0.0
        %2401 = vmatprep.subr.mxu0 0.0
        %2402 = vmatpush1.msra.mxu0 0.0
        %2403 = vmatprep.subr.mxu0 0.0
        %2404 = vmatpush1.msra.mxu0 0.0
        %2405 = vmatprep.subr.mxu0 0.0
        %2406 = vmatpush1.msra.mxu0 0.0
        %2407 = vmatprep.subr.mxu0 0.0
        %2408 = vmatpush1.msra.mxu0 0.0
        %2409 = vmatprep.subr.mxu0 0.0
        %2410 = vmatpush1.msra.mxu0 0.0
        %2411 = vmatprep.subr.mxu0 0.0
        %2412 = vmatpush1.msra.mxu0 0.0
        %2413 = vmatprep.subr.mxu0 0.0
        %2414 = vmatpush1.msra.mxu0 0.0
        %2415 = vmatprep.subr.mxu0 0.0
        %2416 = vmatpush1.msra.mxu0 0.0
        %2417 = vmatprep.subr.mxu0 0.0
        %2418 = vmatpush1.msra.mxu0 0.0
        %2419 = vmatprep.subr.mxu0 0.0
        %2420 = vmatpush1.msra.mxu0 0.0
        %2421 = vmatprep.subr.mxu0 0.0
        %2422 = vmatpush1.msra.mxu0 0.0
        %2423 = vmatprep.mubr.f32.mxu0 0.0
        %2424 = vmatmul.mubr.f32.gmra.mrb[0].mxu0 %v2357
        %v2425 = vpop.f32.mrb[0].mxu0
        %v2426 = vadd.f32 0.0, %v2425
        %v2427 = vpop.f32.mrb[0].mxu0
        %2428 = vdwg.mxu0
        %v2430 = vrot.slane %v2426, 5
        %v2431 = vrot.slane %v2426, 6
        %v2434 = vadd.f32 %v1653, %v2430
        %v2435 = vadd.f32 %v1658, %v2431
        %v2436 = vrot.slane %v2426, 4
        %v2438 = vadd.f32 %v1653, %v2436
        %v2439 = vadd.f32 %v1658, %v2430
        %v2440 = vxor.u32 %v2434, 2147483648
        %v2441 = vxor.u32 %v2435, 2147483648
        %v2442 = vmul.f32 %v2440, 1.442695
        %v2443 = vpow.pop %v2442
        %v2444 = vmul.f32 %v2441, 1.442695
        %v2445 = vpow.pop %v2444
        %v2446 = vadd.f32 %v2443, 1.0
        %v2447 = vadd.f32 %v2445, 1.0
        %v2448 = vrcp.pop %v2446
        %v2449 = vmul.f32 1.0, %v2448
        %v2450 = vrcp.pop %v2447
        %v2451 = vmul.f32 1.0, %v2450
        %v2452 = vxor.u32 %v2438, 2147483648
        %v2453 = vxor.u32 %v2439, 2147483648
        %v2454 = vmul.f32 %v2452, 1.442695
        %v2455 = vpow.pop %v2454
        %v2456 = vmul.f32 %v2453, 1.442695
        %v2457 = vpow.pop %v2456
        %v2458 = vadd.f32 %v2455, 1.0
        %v2459 = vadd.f32 %v2457, 1.0
        %v2460 = vrcp.pop %v2458
        %v2461 = vmul.f32 1.0, %v2460
        %v2462 = vrcp.pop %v2459
        %v2463 = vmul.f32 1.0, %v2462
        %v2464 = vtanh.pop %v2434
        %v2465 = vtanh.pop %v2435
        %v2466 = vtanh.pop %v2438
        %v2467 = vtanh.pop %v2439
        %v2470 = vrot.slane %v2266, 7
        %v2471 = vrot.slane %v2267, 7
        %v2474 = vmul.f32 %v2449, %v2470
        %v2475 = vmul.f32 %v2451, %v2471
        %2478 = vrot.lane.b32.xlu0 %v2464, 80
        %v2479 = vpop.permute.xlu0 %2478
        %2480 = vrot.lane.b32.xlu0 %v2465, 80
        %v2481 = vpop.permute.xlu0 %2480
        %v2484 = vmul.f32 %v2449, %v2479
        %v2485 = vmul.f32 %v2451, %v2481
        %2488 = vrot.lane.b32.xlu0 %v2484, 16
        %v2489 = vpop.permute.xlu0 %2488
        %2490 = vrot.lane.b32.xlu0 %v2485, 16
        %v2491 = vpop.permute.xlu0 %2490
        %v2494 = vadd.f32 %v2474, %v2489
        %v2495 = vadd.f32 %v2475, %v2491
        %v2498 = vrot.slane %v2294, 1
        %v2499 = vrot.slane %v2295, 1
        %v2502 = vmul.f32 %v2461, %v2498
        %v2503 = vmul.f32 %v2463, %v2499
        %2506 = vrot.lane.b32.xlu0 %v2466, 80
        %v2507 = vpop.permute.xlu0 %2506
        %2508 = vrot.lane.b32.xlu0 %v2467, 80
        %v2509 = vpop.permute.xlu0 %2508
        %v2512 = vmul.f32 %v2461, %v2507
        %v2513 = vmul.f32 %v2463, %v2509
        %2516 = vrot.lane.b32.xlu0 %v2512, 16
        %v2517 = vpop.permute.xlu0 %2516
        %2518 = vrot.lane.b32.xlu0 %v2513, 16
        %v2519 = vpop.permute.xlu0 %2518
        %v2522 = vadd.f32 %v2502, %v2517
        %v2523 = vadd.f32 %v2503, %v2519
        %v2524 = vtanh.pop %v2494
        %v2525 = vtanh.pop %v2495
        %2528 = vrot.lane.b32.xlu0 %v2524, 16
        %v2529 = vpop.permute.xlu0 %2528
        %2530 = vrot.lane.b32.xlu0 %v2525, 16
        %v2531 = vpop.permute.xlu0 %2530
        %v2534 = vmul.f32 %v2449, %v2529
        %v2535 = vmul.f32 %v2451, %v2531
        %v2536 = vtanh.pop %v2522
        %v2537 = vtanh.pop %v2523
        %2540 = vrot.lane.b32.xlu0 %v2536, 16
        %v2541 = vpop.permute.xlu0 %2540
        %2542 = vrot.lane.b32.xlu0 %v2537, 16
        %v2543 = vpop.permute.xlu0 %2542
        %v2546 = vmul.f32 %v2461, %v2541
        %v2547 = vmul.f32 %v2463, %v2543
        %v2550 = vrot.slane %v2535, 7
        %vm2551 = vcmask 1044484
        %v2552 = vsel %vm2551, %v2550, %v2534
        %2553 = vrot.lane.b32.xlu0 %v2552, 96
        %v2554 = vpop.permute.xlu0 %2553
        %v2558 = vrot.slane %v2546, 1
        %v2559 = vsel %vm2551, %v2547, %v2558
        %2560 = vrot.lane.b32.xlu0 %v2559, 48
        %v2561 = vpop.permute.xlu0 %2560
        %v2563 = vsel %vm1877, %v2554, %v2561
        %2564 = vrot.lane.b32.xlu0 %v2534, 96
        %v2565 = vpop.permute.xlu0 %2564
        %2566 = vrot.lane.b32.xlu0 %v2535, 96
        %v2567 = vpop.permute.xlu0 %2566
        %vm2570 = vcmask 125955
        %2571 = vst.msk [vmem:[#allocation2] sm:$0x8] %vm2570, %v2565
        %2572 = vst.msk [vmem:[#allocation2 + $0x8] sm:$0x8] %vm2570, %v2567
        %2573 = vrot.lane.b32.xlu0 %v2546, 48
        %v2574 = vpop.permute.xlu0 %2573
        %2575 = vrot.lane.b32.xlu0 %v2547, 48
        %v2576 = vpop.permute.xlu0 %2575
        %vm2579 = vcmask 258180
        %2580 = vst.msk [vmem:[#allocation2] sm:$0x10] %vm2579, %v2574
        %2581 = vst.msk [vmem:[#allocation2 + $0x8] sm:$0x10] %vm2579, %v2576
        %v2583 = vrot.slane %v2563, 3
        %v2584 = vsel %vm534, %v2583, 0
        %2586 = vmatprep.subr.mxu0 0.0
        %2587 = vmatpush1.msra.mxu0 %v1661
        %2588 = vmatprep.subr.mxu0 0.0
        %2589 = vmatpush1.msra.mxu0 %v1662
        %2590 = vmatprep.subr.mxu0 0.0
        %2591 = vmatpush1.msra.mxu0 %v1663
        %2592 = vmatprep.subr.mxu0 0.0
        %2593 = vmatpush1.msra.mxu0 %v1664
        %2594 = vmatprep.subr.mxu0 0.0
        %2595 = vmatpush1.msra.mxu0 0.0
        %2596 = vmatprep.subr.mxu0 0.0
        %2597 = vmatpush1.msra.mxu0 0.0
        %2598 = vmatprep.subr.mxu0 0.0
        %2599 = vmatpush1.msra.mxu0 0.0
        %2600 = vmatprep.subr.mxu0 0.0
        %2601 = vmatpush1.msra.mxu0 0.0
        %2602 = vmatprep.subr.mxu0 0.0
        %2603 = vmatpush1.msra.mxu0 0.0
        %2604 = vmatprep.subr.mxu0 0.0
        %2605 = vmatpush1.msra.mxu0 0.0
        %2606 = vmatprep.subr.mxu0 0.0
        %2607 = vmatpush1.msra.mxu0 0.0
        %2608 = vmatprep.subr.mxu0 0.0
        %2609 = vmatpush1.msra.mxu0 0.0
        %2610 = vmatprep.subr.mxu0 0.0
        %2611 = vmatpush1.msra.mxu0 0.0
        %2612 = vmatprep.subr.mxu0 0.0
        %2613 = vmatpush1.msra.mxu0 0.0
        %2614 = vmatprep.subr.mxu0 0.0
        %2615 = vmatpush1.msra.mxu0 0.0
        %2616 = vmatprep.subr.mxu0 0.0
        %2617 = vmatpush1.msra.mxu0 0.0
        %2618 = vmatprep.subr.mxu0 0.0
        %2619 = vmatpush1.msra.mxu0 0.0
        %2620 = vmatprep.subr.mxu0 0.0
        %2621 = vmatpush1.msra.mxu0 0.0
        %2622 = vmatprep.subr.mxu0 0.0
        %2623 = vmatpush1.msra.mxu0 0.0
        %2624 = vmatprep.subr.mxu0 0.0
        %2625 = vmatpush1.msra.mxu0 0.0
        %2626 = vmatprep.subr.mxu0 0.0
        %2627 = vmatpush1.msra.mxu0 0.0
        %2628 = vmatprep.subr.mxu0 0.0
        %2629 = vmatpush1.msra.mxu0 0.0
        %2630 = vmatprep.subr.mxu0 0.0
        %2631 = vmatpush1.msra.mxu0 0.0
        %2632 = vmatprep.subr.mxu0 0.0
        %2633 = vmatpush1.msra.mxu0 0.0
        %2634 = vmatprep.subr.mxu0 0.0
        %2635 = vmatpush1.msra.mxu0 0.0
        %2636 = vmatprep.subr.mxu0 0.0
        %2637 = vmatpush1.msra.mxu0 0.0
        %2638 = vmatprep.subr.mxu0 0.0
        %2639 = vmatpush1.msra.mxu0 0.0
        %2640 = vmatprep.subr.mxu0 0.0
        %2641 = vmatpush1.msra.mxu0 0.0
        %2642 = vmatprep.subr.mxu0 0.0
        %2643 = vmatpush1.msra.mxu0 0.0
        %2644 = vmatprep.subr.mxu0 0.0
        %2645 = vmatpush1.msra.mxu0 0.0
        %2646 = vmatprep.subr.mxu0 0.0
        %2647 = vmatpush1.msra.mxu0 0.0
        %2648 = vmatprep.subr.mxu0 0.0
        %2649 = vmatpush1.msra.mxu0 0.0
        %2650 = vmatprep.mubr.f32.mxu0 0.0
        %2651 = vmatmul.mubr.f32.gmra.mrb[0].mxu0 %v2584
        %v2652 = vpop.f32.mrb[0].mxu0
        %v2653 = vadd.f32 0.0, %v2652
        %v2654 = vpop.f32.mrb[0].mxu0
        %2655 = vdwg.mxu0
        %v2657 = vrot.slane %v2653, 4
        %v2658 = vrot.slane %v2653, 5
        %v2661 = vadd.f32 %v1653, %v2657
        %v2662 = vadd.f32 %v1658, %v2658
        %v2663 = vrot.slane %v2653, 6
        %v2665 = vadd.f32 %v1653, %v2658
        %v2666 = vadd.f32 %v1658, %v2663
        %v2667 = vxor.u32 %v2661, 2147483648
        %v2668 = vxor.u32 %v2662, 2147483648
        %v2669 = vmul.f32 %v2667, 1.442695
        %v2670 = vpow.pop %v2669
        %v2671 = vmul.f32 %v2668, 1.442695
        %v2672 = vpow.pop %v2671
        %v2673 = vadd.f32 %v2670, 1.0
        %v2674 = vadd.f32 %v2672, 1.0
        %v2675 = vrcp.pop %v2673
        %v2676 = vmul.f32 1.0, %v2675
        %v2677 = vrcp.pop %v2674
        %v2678 = vmul.f32 1.0, %v2677
        %v2679 = vxor.u32 %v2665, 2147483648
        %v2680 = vxor.u32 %v2666, 2147483648
        %v2681 = vmul.f32 %v2679, 1.442695
        %v2682 = vpow.pop %v2681
        %v2683 = vmul.f32 %v2680, 1.442695
        %v2684 = vpow.pop %v2683
        %v2685 = vadd.f32 %v2682, 1.0
        %v2686 = vadd.f32 %v2684, 1.0
        %v2687 = vrcp.pop %v2685
        %v2688 = vmul.f32 1.0, %v2687
        %v2689 = vrcp.pop %v2686
        %v2690 = vmul.f32 1.0, %v2689
        %v2691 = vtanh.pop %v2661
        %v2692 = vtanh.pop %v2662
        %v2693 = vtanh.pop %v2665
        %v2694 = vtanh.pop %v2666
        %v2697 = vrot.slane %v2494, 7
        %v2698 = vrot.slane %v2495, 7
        %v2701 = vmul.f32 %v2676, %v2697
        %v2702 = vmul.f32 %v2678, %v2698
        %2705 = vrot.lane.b32.xlu0 %v2691, 80
        %v2706 = vpop.permute.xlu0 %2705
        %2707 = vrot.lane.b32.xlu0 %v2692, 80
        %v2708 = vpop.permute.xlu0 %2707
        %v2711 = vmul.f32 %v2676, %v2706
        %v2712 = vmul.f32 %v2678, %v2708
        %2715 = vrot.lane.b32.xlu0 %v2711, 16
        %v2716 = vpop.permute.xlu0 %2715
        %2717 = vrot.lane.b32.xlu0 %v2712, 16
        %v2718 = vpop.permute.xlu0 %2717
        %v2721 = vadd.f32 %v2701, %v2716
        %v2722 = vadd.f32 %v2702, %v2718
        %v2725 = vrot.slane %v2522, 1
        %v2726 = vrot.slane %v2523, 1
        %v2729 = vmul.f32 %v2688, %v2725
        %v2730 = vmul.f32 %v2690, %v2726
        %2733 = vrot.lane.b32.xlu0 %v2693, 80
        %v2734 = vpop.permute.xlu0 %2733
        %2735 = vrot.lane.b32.xlu0 %v2694, 80
        %v2736 = vpop.permute.xlu0 %2735
        %v2739 = vmul.f32 %v2688, %v2734
        %v2740 = vmul.f32 %v2690, %v2736
        %2743 = vrot.lane.b32.xlu0 %v2739, 16
        %v2744 = vpop.permute.xlu0 %2743
        %2745 = vrot.lane.b32.xlu0 %v2740, 16
        %v2746 = vpop.permute.xlu0 %2745
        %v2749 = vadd.f32 %v2729, %v2744
        %v2750 = vadd.f32 %v2730, %v2746
        %v2751 = vtanh.pop %v2721
        %v2752 = vtanh.pop %v2722
        %2755 = vrot.lane.b32.xlu0 %v2751, 16
        %v2756 = vpop.permute.xlu0 %2755
        %2757 = vrot.lane.b32.xlu0 %v2752, 16
        %v2758 = vpop.permute.xlu0 %2757
        %v2761 = vmul.f32 %v2676, %v2756
        %v2762 = vmul.f32 %v2678, %v2758
        %v2763 = vtanh.pop %v2749
        %v2764 = vtanh.pop %v2750
        %2767 = vrot.lane.b32.xlu0 %v2763, 16
        %v2768 = vpop.permute.xlu0 %2767
        %2769 = vrot.lane.b32.xlu0 %v2764, 16
        %v2770 = vpop.permute.xlu0 %2769
        %v2773 = vmul.f32 %v2688, %v2768
        %v2774 = vmul.f32 %v2690, %v2770
        %v2777 = vrot.slane %v2762, 7
        %vm2778 = vcmask 1045509
        %v2779 = vsel %vm2778, %v2777, %v2761
        %2780 = vrot.lane.b32.xlu0 %v2779, 96
        %v2781 = vpop.permute.xlu0 %2780
        %v2785 = vrot.slane %v2773, 7
        %v2786 = vrot.slane %v2774, 6
        %v2787 = vsel %vm2778, %v2786, %v2785
        %2788 = vrot.lane.b32.xlu0 %v2787, 48
        %v2789 = vpop.permute.xlu0 %2788
        %v2791 = vsel %vm1877, %v2781, %v2789
        %2792 = vrot.lane.b32.xlu0 %v2761, 96
        %v2793 = vpop.permute.xlu0 %2792
        %2794 = vrot.lane.b32.xlu0 %v2762, 96
        %v2795 = vpop.permute.xlu0 %2794
        %vm2798 = vcmask 126980
        %2799 = vst.msk [vmem:[#allocation2] sm:$0x10] %vm2798, %v2793
        %2800 = vst.msk [vmem:[#allocation2 + $0x8] sm:$0x10] %vm2798, %v2795
        %2801 = vrot.lane.b32.xlu0 %v2773, 48
        %v2802 = vpop.permute.xlu0 %2801
        %2803 = vrot.lane.b32.xlu0 %v2774, 48
        %v2804 = vpop.permute.xlu0 %2803
        %vm2807 = vcmask 257155
        %2808 = vst.msk [vmem:[#allocation2] sm:$0x8] %vm2807, %v2802
        %2809 = vst.msk [vmem:[#allocation2 + $0x8] sm:$0x8] %vm2807, %v2804
        %v2811 = vrot.slane %v2791, 4
        %v2812 = vsel %vm534, %v2811, 0
        %2814 = vmatprep.subr.mxu0 0.0
        %2815 = vmatpush1.msra.mxu0 %v1661
        %2816 = vmatprep.subr.mxu0 0.0
        %2817 = vmatpush1.msra.mxu0 %v1662
        %2818 = vmatprep.subr.mxu0 0.0
        %2819 = vmatpush1.msra.mxu0 %v1663
        %2820 = vmatprep.subr.mxu0 0.0
        %2821 = vmatpush1.msra.mxu0 %v1664
        %2822 = vmatprep.subr.mxu0 0.0
        %2823 = vmatpush1.msra.mxu0 0.0
        %2824 = vmatprep.subr.mxu0 0.0
        %2825 = vmatpush1.msra.mxu0 0.0
        %2826 = vmatprep.subr.mxu0 0.0
        %2827 = vmatpush1.msra.mxu0 0.0
        %2828 = vmatprep.subr.mxu0 0.0
        %2829 = vmatpush1.msra.mxu0 0.0
        %2830 = vmatprep.subr.mxu0 0.0
        %2831 = vmatpush1.msra.mxu0 0.0
        %2832 = vmatprep.subr.mxu0 0.0
        %2833 = vmatpush1.msra.mxu0 0.0
        %2834 = vmatprep.subr.mxu0 0.0
        %2835 = vmatpush1.msra.mxu0 0.0
        %2836 = vmatprep.subr.mxu0 0.0
        %2837 = vmatpush1.msra.mxu0 0.0
        %2838 = vmatprep.subr.mxu0 0.0
        %2839 = vmatpush1.msra.mxu0 0.0
        %2840 = vmatprep.subr.mxu0 0.0
        %2841 = vmatpush1.msra.mxu0 0.0
        %2842 = vmatprep.subr.mxu0 0.0
        %2843 = vmatpush1.msra.mxu0 0.0
        %2844 = vmatprep.subr.mxu0 0.0
        %2845 = vmatpush1.msra.mxu0 0.0
        %2846 = vmatprep.subr.mxu0 0.0
        %2847 = vmatpush1.msra.mxu0 0.0
        %2848 = vmatprep.subr.mxu0 0.0
        %2849 = vmatpush1.msra.mxu0 0.0
        %2850 = vmatprep.subr.mxu0 0.0
        %2851 = vmatpush1.msra.mxu0 0.0
        %2852 = vmatprep.subr.mxu0 0.0
        %2853 = vmatpush1.msra.mxu0 0.0
        %2854 = vmatprep.subr.mxu0 0.0
        %2855 = vmatpush1.msra.mxu0 0.0
        %2856 = vmatprep.subr.mxu0 0.0
        %2857 = vmatpush1.msra.mxu0 0.0
        %2858 = vmatprep.subr.mxu0 0.0
        %2859 = vmatpush1.msra.mxu0 0.0
        %2860 = vmatprep.subr.mxu0 0.0
        %2861 = vmatpush1.msra.mxu0 0.0
        %2862 = vmatprep.subr.mxu0 0.0
        %2863 = vmatpush1.msra.mxu0 0.0
        %2864 = vmatprep.subr.mxu0 0.0
        %2865 = vmatpush1.msra.mxu0 0.0
        %2866 = vmatprep.subr.mxu0 0.0
        %2867 = vmatpush1.msra.mxu0 0.0
        %2868 = vmatprep.subr.mxu0 0.0
        %2869 = vmatpush1.msra.mxu0 0.0
        %2870 = vmatprep.subr.mxu0 0.0
        %2871 = vmatpush1.msra.mxu0 0.0
        %2872 = vmatprep.subr.mxu0 0.0
        %2873 = vmatpush1.msra.mxu0 0.0
        %2874 = vmatprep.subr.mxu0 0.0
        %2875 = vmatpush1.msra.mxu0 0.0
        %2876 = vmatprep.subr.mxu0 0.0
        %2877 = vmatpush1.msra.mxu0 0.0
        %2878 = vmatprep.mubr.f32.mxu0 0.0
        %2879 = vmatmul.mubr.f32.gmra.mrb[0].mxu0 %v2812
        %v2880 = vpop.f32.mrb[0].mxu0
        %v2881 = vadd.f32 0.0, %v2880
        %v2882 = vpop.f32.mrb[0].mxu0
        %2883 = vdwg.mxu0
        %v2885 = vrot.slane %v2881, 3
        %v2886 = vrot.slane %v2881, 4
        %v2889 = vadd.f32 %v1653, %v2885
        %v2890 = vadd.f32 %v1658, %v2886
        %v2891 = vrot.slane %v2881, 6
        %v2892 = vrot.slane %v2881, 7
        %v2895 = vadd.f32 %v1653, %v2891
        %v2896 = vadd.f32 %v1658, %v2892
        %v2897 = vxor.u32 %v2889, 2147483648
        %v2898 = vxor.u32 %v2890, 2147483648
        %v2899 = vmul.f32 %v2897, 1.442695
        %v2900 = vpow.pop %v2899
        %v2901 = vmul.f32 %v2898, 1.442695
        %v2902 = vpow.pop %v2901
        %v2903 = vadd.f32 %v2900, 1.0
        %v2904 = vadd.f32 %v2902, 1.0
        %v2905 = vrcp.pop %v2903
        %v2906 = vmul.f32 1.0, %v2905
        %v2907 = vrcp.pop %v2904
        %v2908 = vmul.f32 1.0, %v2907
        %v2909 = vxor.u32 %v2895, 2147483648
        %v2910 = vxor.u32 %v2896, 2147483648
        %v2911 = vmul.f32 %v2909, 1.442695
        %v2912 = vpow.pop %v2911
        %v2913 = vmul.f32 %v2910, 1.442695
        %v2914 = vpow.pop %v2913
        %v2915 = vadd.f32 %v2912, 1.0
        %v2916 = vadd.f32 %v2914, 1.0
        %v2917 = vrcp.pop %v2915
        %v2918 = vmul.f32 1.0, %v2917
        %v2919 = vrcp.pop %v2916
        %v2920 = vmul.f32 1.0, %v2919
        %v2921 = vtanh.pop %v2889
        %v2922 = vtanh.pop %v2890
        %v2923 = vtanh.pop %v2895
        %v2924 = vtanh.pop %v2896
        %v2927 = vrot.slane %v2721, 7
        %v2928 = vrot.slane %v2722, 7
        %v2931 = vmul.f32 %v2906, %v2927
        %v2932 = vmul.f32 %v2908, %v2928
        %2935 = vrot.lane.b32.xlu0 %v2921, 80
        %v2936 = vpop.permute.xlu0 %2935
        %2937 = vrot.lane.b32.xlu0 %v2922, 80
        %v2938 = vpop.permute.xlu0 %2937
        %v2941 = vmul.f32 %v2906, %v2936
        %v2942 = vmul.f32 %v2908, %v2938
        %2945 = vrot.lane.b32.xlu0 %v2941, 16
        %v2946 = vpop.permute.xlu0 %2945
        %2947 = vrot.lane.b32.xlu0 %v2942, 16
        %v2948 = vpop.permute.xlu0 %2947
        %v2951 = vadd.f32 %v2931, %v2946
        %v2952 = vadd.f32 %v2932, %v2948
        %v2955 = vrot.slane %v2749, 1
        %v2956 = vrot.slane %v2750, 1
        %v2959 = vmul.f32 %v2918, %v2955
        %v2960 = vmul.f32 %v2920, %v2956
        %2963 = vrot.lane.b32.xlu0 %v2923, 80
        %v2964 = vpop.permute.xlu0 %2963
        %2965 = vrot.lane.b32.xlu0 %v2924, 80
        %v2966 = vpop.permute.xlu0 %2965
        %v2969 = vmul.f32 %v2918, %v2964
        %v2970 = vmul.f32 %v2920, %v2966
        %2973 = vrot.lane.b32.xlu0 %v2969, 16
        %v2974 = vpop.permute.xlu0 %2973
        %2975 = vrot.lane.b32.xlu0 %v2970, 16
        %v2976 = vpop.permute.xlu0 %2975
        %v2979 = vadd.f32 %v2959, %v2974
        %v2980 = vadd.f32 %v2960, %v2976
        %v2981 = vtanh.pop %v2951
        %v2982 = vtanh.pop %v2952
        %2985 = vrot.lane.b32.xlu0 %v2981, 16
        %v2986 = vpop.permute.xlu0 %2985
        %2987 = vrot.lane.b32.xlu0 %v2982, 16
        %v2988 = vpop.permute.xlu0 %2987
        %v2991 = vmul.f32 %v2906, %v2986
        %v2992 = vmul.f32 %v2908, %v2988
        %v2993 = vtanh.pop %v2979
        %v2994 = vtanh.pop %v2980
        %2997 = vrot.lane.b32.xlu0 %v2993, 16
        %v2998 = vpop.permute.xlu0 %2997
        %2999 = vrot.lane.b32.xlu0 %v2994, 16
        %v3000 = vpop.permute.xlu0 %2999
        %v3003 = vmul.f32 %v2918, %v2998
        %v3004 = vmul.f32 %v2920, %v3000
        %v3007 = vrot.slane %v2992, 7
        %vm3008 = vcmask 1046534
        %v3009 = vsel %vm3008, %v3007, %v2991
        %3010 = vrot.lane.b32.xlu0 %v3009, 96
        %v3011 = vpop.permute.xlu0 %3010
        %v3015 = vrot.slane %v3003, 5
        %v3016 = vrot.slane %v3004, 4
        %v3017 = vsel %vm3008, %v3016, %v3015
        %3018 = vrot.lane.b32.xlu0 %v3017, 48
        %v3019 = vpop.permute.xlu0 %3018
        %v3021 = vsel %vm1877, %v3011, %v3019
        %3022 = vrot.lane.b32.xlu0 %v2991, 96
        %v3023 = vpop.permute.xlu0 %3022
        %3024 = vrot.lane.b32.xlu0 %v2992, 96
        %v3025 = vpop.permute.xlu0 %3024
        %vm3028 = vcmask 128005
        %3029 = vst.msk [vmem:[#allocation2] sm:$0x20] %vm3028, %v3023
        %3030 = vst.msk [vmem:[#allocation2 + $0x8] sm:$0x20] %vm3028, %v3025
        %3031 = vrot.lane.b32.xlu0 %v3003, 48
        %v3032 = vpop.permute.xlu0 %3031
        %3033 = vrot.lane.b32.xlu0 %v3004, 48
        %v3034 = vpop.permute.xlu0 %3033
        %vm3037 = vcmask 256130
        %3038 = vst.msk [vmem:[#allocation2] sm:$0x4] %vm3037, %v3032
        %3039 = vst.msk [vmem:[#allocation2 + $0x8] sm:$0x4] %vm3037, %v3034
        %v3041 = vrot.slane %v3021, 5
        %v3042 = vsel %vm534, %v3041, 0
        %3044 = vmatprep.subr.mxu0 0.0
        %3045 = vmatpush1.msra.mxu0 %v1661
        %3046 = vmatprep.subr.mxu0 0.0
        %3047 = vmatpush1.msra.mxu0 %v1662
        %3048 = vmatprep.subr.mxu0 0.0
        %3049 = vmatpush1.msra.mxu0 %v1663
        %3050 = vmatprep.subr.mxu0 0.0
        %3051 = vmatpush1.msra.mxu0 %v1664
        %3052 = vmatprep.subr.mxu0 0.0
        %3053 = vmatpush1.msra.mxu0 0.0
        %3054 = vmatprep.subr.mxu0 0.0
        %3055 = vmatpush1.msra.mxu0 0.0
        %3056 = vmatprep.subr.mxu0 0.0
        %3057 = vmatpush1.msra.mxu0 0.0
        %3058 = vmatprep.subr.mxu0 0.0
        %3059 = vmatpush1.msra.mxu0 0.0
        %3060 = vmatprep.subr.mxu0 0.0
        %3061 = vmatpush1.msra.mxu0 0.0
        %3062 = vmatprep.subr.mxu0 0.0
        %3063 = vmatpush1.msra.mxu0 0.0
        %3064 = vmatprep.subr.mxu0 0.0
        %3065 = vmatpush1.msra.mxu0 0.0
        %3066 = vmatprep.subr.mxu0 0.0
        %3067 = vmatpush1.msra.mxu0 0.0
        %3068 = vmatprep.subr.mxu0 0.0
        %3069 = vmatpush1.msra.mxu0 0.0
        %3070 = vmatprep.subr.mxu0 0.0
        %3071 = vmatpush1.msra.mxu0 0.0
        %3072 = vmatprep.subr.mxu0 0.0
        %3073 = vmatpush1.msra.mxu0 0.0
        %3074 = vmatprep.subr.mxu0 0.0
        %3075 = vmatpush1.msra.mxu0 0.0
        %3076 = vmatprep.subr.mxu0 0.0
        %3077 = vmatpush1.msra.mxu0 0.0
        %3078 = vmatprep.subr.mxu0 0.0
        %3079 = vmatpush1.msra.mxu0 0.0
        %3080 = vmatprep.subr.mxu0 0.0
        %3081 = vmatpush1.msra.mxu0 0.0
        %3082 = vmatprep.subr.mxu0 0.0
        %3083 = vmatpush1.msra.mxu0 0.0
        %3084 = vmatprep.subr.mxu0 0.0
        %3085 = vmatpush1.msra.mxu0 0.0
        %3086 = vmatprep.subr.mxu0 0.0
        %3087 = vmatpush1.msra.mxu0 0.0
        %3088 = vmatprep.subr.mxu0 0.0
        %3089 = vmatpush1.msra.mxu0 0.0
        %3090 = vmatprep.subr.mxu0 0.0
        %3091 = vmatpush1.msra.mxu0 0.0
        %3092 = vmatprep.subr.mxu0 0.0
        %3093 = vmatpush1.msra.mxu0 0.0
        %3094 = vmatprep.subr.mxu0 0.0
        %3095 = vmatpush1.msra.mxu0 0.0
        %3096 = vmatprep.subr.mxu0 0.0
        %3097 = vmatpush1.msra.mxu0 0.0
        %3098 = vmatprep.subr.mxu0 0.0
        %3099 = vmatpush1.msra.mxu0 0.0
        %3100 = vmatprep.subr.mxu0 0.0
        %3101 = vmatpush1.msra.mxu0 0.0
        %3102 = vmatprep.subr.mxu0 0.0
        %3103 = vmatpush1.msra.mxu0 0.0
        %3104 = vmatprep.subr.mxu0 0.0
        %3105 = vmatpush1.msra.mxu0 0.0
        %3106 = vmatprep.subr.mxu0 0.0
        %3107 = vmatpush1.msra.mxu0 0.0
        %3108 = vmatprep.mubr.f32.mxu0 0.0
        %3109 = vmatmul.mubr.f32.gmra.mrb[0].mxu0 %v3042
        %v3110 = vpop.f32.mrb[0].mxu0
        %v3111 = vadd.f32 0.0, %v3110
        %v3112 = vpop.f32.mrb[0].mxu0
        %3113 = vdwg.mxu0
        %v3115 = vrot.slane %v3111, 2
        %v3116 = vrot.slane %v3111, 3
        %v3119 = vadd.f32 %v1653, %v3115
        %v3120 = vadd.f32 %v1658, %v3116
        %v3121 = vrot.slane %v3111, 7
        %v3124 = vadd.f32 %v1653, %v3121
        %v3125 = vadd.f32 %v1658, %v3111
        %v3126 = vxor.u32 %v3119, 2147483648
        %v3127 = vxor.u32 %v3120, 2147483648
        %v3128 = vmul.f32 %v3126, 1.442695
        %v3129 = vpow.pop %v3128
        %v3130 = vmul.f32 %v3127, 1.442695
        %v3131 = vpow.pop %v3130
        %v3132 = vadd.f32 %v3129, 1.0
        %v3133 = vadd.f32 %v3131, 1.0
        %v3134 = vrcp.pop %v3132
        %v3135 = vmul.f32 1.0, %v3134
        %v3136 = vrcp.pop %v3133
        %v3137 = vmul.f32 1.0, %v3136
        %v3138 = vxor.u32 %v3124, 2147483648
        %v3139 = vxor.u32 %v3125, 2147483648
        %v3140 = vmul.f32 %v3138, 1.442695
        %v3141 = vpow.pop %v3140
        %v3142 = vmul.f32 %v3139, 1.442695
        %v3143 = vpow.pop %v3142
        %v3144 = vadd.f32 %v3141, 1.0
        %v3145 = vadd.f32 %v3143, 1.0
        %v3146 = vrcp.pop %v3144
        %v3147 = vmul.f32 1.0, %v3146
        %v3148 = vrcp.pop %v3145
        %v3149 = vmul.f32 1.0, %v3148
        %v3150 = vtanh.pop %v3119
        %v3151 = vtanh.pop %v3120
        %v3152 = vtanh.pop %v3124
        %v3153 = vtanh.pop %v3125
        %v3156 = vrot.slane %v2951, 7
        %v3157 = vrot.slane %v2952, 7
        %v3160 = vmul.f32 %v3135, %v3156
        %v3161 = vmul.f32 %v3137, %v3157
        %3164 = vrot.lane.b32.xlu0 %v3150, 80
        %v3165 = vpop.permute.xlu0 %3164
        %3166 = vrot.lane.b32.xlu0 %v3151, 80
        %v3167 = vpop.permute.xlu0 %3166
        %v3170 = vmul.f32 %v3135, %v3165
        %v3171 = vmul.f32 %v3137, %v3167
        %3174 = vrot.lane.b32.xlu0 %v3170, 16
        %v3175 = vpop.permute.xlu0 %3174
        %3176 = vrot.lane.b32.xlu0 %v3171, 16
        %v3177 = vpop.permute.xlu0 %3176
        %v3180 = vadd.f32 %v3160, %v3175
        %v3181 = vadd.f32 %v3161, %v3177
        %v3184 = vrot.slane %v2979, 1
        %v3185 = vrot.slane %v2980, 1
        %v3188 = vmul.f32 %v3147, %v3184
        %v3189 = vmul.f32 %v3149, %v3185
        %3192 = vrot.lane.b32.xlu0 %v3152, 80
        %v3193 = vpop.permute.xlu0 %3192
        %3194 = vrot.lane.b32.xlu0 %v3153, 80
        %v3195 = vpop.permute.xlu0 %3194
        %v3198 = vmul.f32 %v3147, %v3193
        %v3199 = vmul.f32 %v3149, %v3195
        %3202 = vrot.lane.b32.xlu0 %v3198, 16
        %v3203 = vpop.permute.xlu0 %3202
        %3204 = vrot.lane.b32.xlu0 %v3199, 16
        %v3205 = vpop.permute.xlu0 %3204
        %v3208 = vadd.f32 %v3188, %v3203
        %v3209 = vadd.f32 %v3189, %v3205
        %v3210 = vtanh.pop %v3180
        %v3211 = vtanh.pop %v3181
        %3214 = vrot.lane.b32.xlu0 %v3210, 16
        %v3215 = vpop.permute.xlu0 %3214
        %3216 = vrot.lane.b32.xlu0 %v3211, 16
        %v3217 = vpop.permute.xlu0 %3216
        %v3220 = vmul.f32 %v3135, %v3215
        %v3221 = vmul.f32 %v3137, %v3217
        %v3222 = vtanh.pop %v3208
        %v3223 = vtanh.pop %v3209
        %3226 = vrot.lane.b32.xlu0 %v3222, 16
        %v3227 = vpop.permute.xlu0 %3226
        %3228 = vrot.lane.b32.xlu0 %v3223, 16
        %v3229 = vpop.permute.xlu0 %3228
        %v3232 = vmul.f32 %v3147, %v3227
        %v3233 = vmul.f32 %v3149, %v3229
        %v3236 = vrot.slane %v3221, 7
        %vm3237 = vcmask 1047559
        %v3238 = vsel %vm3237, %v3236, %v3220
        %3239 = vrot.lane.b32.xlu0 %v3238, 96
        %v3240 = vpop.permute.xlu0 %3239
        %v3244 = vrot.slane %v3232, 3
        %v3245 = vrot.slane %v3233, 2
        %v3246 = vsel %vm3237, %v3245, %v3244
        %3247 = vrot.lane.b32.xlu0 %v3246, 48
        %v3248 = vpop.permute.xlu0 %3247
        %v3250 = vsel %vm1877, %v3240, %v3248
        %3251 = vrot.lane.b32.xlu0 %v3220, 96
        %v3252 = vpop.permute.xlu0 %3251
        %3253 = vrot.lane.b32.xlu0 %v3221, 96
        %v3254 = vpop.permute.xlu0 %3253
        %vm3257 = vcmask 129030
        %3258 = vst.msk [vmem:[#allocation2] sm:$0x40] %vm3257, %v3252
        %3259 = vst.msk [vmem:[#allocation2 + $0x8] sm:$0x40] %vm3257, %v3254
        %3260 = vrot.lane.b32.xlu0 %v3232, 48
        %v3261 = vpop.permute.xlu0 %3260
        %3262 = vrot.lane.b32.xlu0 %v3233, 48
        %v3263 = vpop.permute.xlu0 %3262
        %vm3266 = vcmask 255105
        %3267 = vst.msk [vmem:[#allocation2] sm:$0x2] %vm3266, %v3261
        %3268 = vst.msk [vmem:[#allocation2 + $0x8] sm:$0x2] %vm3266, %v3263
        %v3270 = vrot.slane %v3250, 6
        %v3271 = vsel %vm534, %v3270, 0
        %3273 = vmatprep.subr.mxu0 0.0
        %3274 = vmatpush1.msra.mxu0 %v1661
        %3275 = vmatprep.subr.mxu0 0.0
        %3276 = vmatpush1.msra.mxu0 %v1662
        %3277 = vmatprep.subr.mxu0 0.0
        %3278 = vmatpush1.msra.mxu0 %v1663
        %3279 = vmatprep.subr.mxu0 0.0
        %3280 = vmatpush1.msra.mxu0 %v1664
        %3281 = vmatprep.subr.mxu0 0.0
        %3282 = vmatpush1.msra.mxu0 0.0
        %3283 = vmatprep.subr.mxu0 0.0
        %3284 = vmatpush1.msra.mxu0 0.0
        %3285 = vmatprep.subr.mxu0 0.0
        %3286 = vmatpush1.msra.mxu0 0.0
        %3287 = vmatprep.subr.mxu0 0.0
        %3288 = vmatpush1.msra.mxu0 0.0
        %3289 = vmatprep.subr.mxu0 0.0
        %3290 = vmatpush1.msra.mxu0 0.0
        %3291 = vmatprep.subr.mxu0 0.0
        %3292 = vmatpush1.msra.mxu0 0.0
        %3293 = vmatprep.subr.mxu0 0.0
        %3294 = vmatpush1.msra.mxu0 0.0
        %3295 = vmatprep.subr.mxu0 0.0
        %3296 = vmatpush1.msra.mxu0 0.0
        %3297 = vmatprep.subr.mxu0 0.0
        %3298 = vmatpush1.msra.mxu0 0.0
        %3299 = vmatprep.subr.mxu0 0.0
        %3300 = vmatpush1.msra.mxu0 0.0
        %3301 = vmatprep.subr.mxu0 0.0
        %3302 = vmatpush1.msra.mxu0 0.0
        %3303 = vmatprep.subr.mxu0 0.0
        %3304 = vmatpush1.msra.mxu0 0.0
        %3305 = vmatprep.subr.mxu0 0.0
        %3306 = vmatpush1.msra.mxu0 0.0
        %3307 = vmatprep.subr.mxu0 0.0
        %3308 = vmatpush1.msra.mxu0 0.0
        %3309 = vmatprep.subr.mxu0 0.0
        %3310 = vmatpush1.msra.mxu0 0.0
        %3311 = vmatprep.subr.mxu0 0.0
        %3312 = vmatpush1.msra.mxu0 0.0
        %3313 = vmatprep.subr.mxu0 0.0
        %3314 = vmatpush1.msra.mxu0 0.0
        %3315 = vmatprep.subr.mxu0 0.0
        %3316 = vmatpush1.msra.mxu0 0.0
        %3317 = vmatprep.subr.mxu0 0.0
        %3318 = vmatpush1.msra.mxu0 0.0
        %3319 = vmatprep.subr.mxu0 0.0
        %3320 = vmatpush1.msra.mxu0 0.0
        %3321 = vmatprep.subr.mxu0 0.0
        %3322 = vmatpush1.msra.mxu0 0.0
        %3323 = vmatprep.subr.mxu0 0.0
        %3324 = vmatpush1.msra.mxu0 0.0
        %3325 = vmatprep.subr.mxu0 0.0
        %3326 = vmatpush1.msra.mxu0 0.0
        %3327 = vmatprep.subr.mxu0 0.0
        %3328 = vmatpush1.msra.mxu0 0.0
        %3329 = vmatprep.subr.mxu0 0.0
        %3330 = vmatpush1.msra.mxu0 0.0
        %3331 = vmatprep.subr.mxu0 0.0
        %3332 = vmatpush1.msra.mxu0 0.0
        %3333 = vmatprep.subr.mxu0 0.0
        %3334 = vmatpush1.msra.mxu0 0.0
        %3335 = vmatprep.subr.mxu0 0.0
        %3336 = vmatpush1.msra.mxu0 0.0
        %3337 = vmatprep.mubr.f32.mxu0 0.0
        %3338 = vmatmul.mubr.f32.gmra.mrb[0].mxu0 %v3271
        %v3339 = vpop.f32.mrb[0].mxu0
        %v3340 = vadd.f32 0.0, %v3339
        %v3341 = vpop.f32.mrb[0].mxu0
        %3342 = vdwg.mxu0
        %v3344 = vrot.slane %v3340, 1
        %v3345 = vrot.slane %v3340, 2
        %v3348 = vadd.f32 %v1653, %v3344
        %v3349 = vadd.f32 %v1658, %v3345
        %v3351 = vadd.f32 %v1653, %v3340
        %v3352 = vadd.f32 %v1658, %v3344
        %v3353 = vxor.u32 %v3348, 2147483648
        %v3354 = vxor.u32 %v3349, 2147483648
        %v3355 = vmul.f32 %v3353, 1.442695
        %v3356 = vpow.pop %v3355
        %v3357 = vmul.f32 %v3354, 1.442695
        %v3358 = vpow.pop %v3357
        %v3359 = vadd.f32 %v3356, 1.0
        %v3360 = vadd.f32 %v3358, 1.0
        %v3361 = vrcp.pop %v3359
        %v3362 = vmul.f32 1.0, %v3361
        %v3363 = vrcp.pop %v3360
        %v3364 = vmul.f32 1.0, %v3363
        %v3365 = vxor.u32 %v3351, 2147483648
        %v3366 = vxor.u32 %v3352, 2147483648
        %v3367 = vmul.f32 %v3365, 1.442695
        %v3368 = vpow.pop %v3367
        %v3369 = vmul.f32 %v3366, 1.442695
        %v3370 = vpow.pop %v3369
        %v3371 = vadd.f32 %v3368, 1.0
        %v3372 = vadd.f32 %v3370, 1.0
        %v3373 = vrcp.pop %v3371
        %v3374 = vmul.f32 1.0, %v3373
        %v3375 = vrcp.pop %v3372
        %v3376 = vmul.f32 1.0, %v3375
        %v3377 = vtanh.pop %v3348
        %v3378 = vtanh.pop %v3349
        %v3379 = vtanh.pop %v3351
        %v3380 = vtanh.pop %v3352
        %v3383 = vrot.slane %v3180, 7
        %v3384 = vrot.slane %v3181, 7
        %v3387 = vmul.f32 %v3362, %v3383
        %v3388 = vmul.f32 %v3364, %v3384
        %3391 = vrot.lane.b32.xlu0 %v3377, 80
        %v3392 = vpop.permute.xlu0 %3391
        %3393 = vrot.lane.b32.xlu0 %v3378, 80
        %v3394 = vpop.permute.xlu0 %3393
        %v3397 = vmul.f32 %v3362, %v3392
        %v3398 = vmul.f32 %v3364, %v3394
        %3401 = vrot.lane.b32.xlu0 %v3397, 16
        %v3402 = vpop.permute.xlu0 %3401
        %3403 = vrot.lane.b32.xlu0 %v3398, 16
        %v3404 = vpop.permute.xlu0 %3403
        %v3407 = vadd.f32 %v3387, %v3402
        %v3408 = vadd.f32 %v3388, %v3404
        %v3411 = vrot.slane %v3208, 1
        %v3412 = vrot.slane %v3209, 1
        %v3415 = vmul.f32 %v3374, %v3411
        %v3416 = vmul.f32 %v3376, %v3412
        %3419 = vrot.lane.b32.xlu0 %v3379, 80
        %v3420 = vpop.permute.xlu0 %3419
        %3421 = vrot.lane.b32.xlu0 %v3380, 80
        %v3422 = vpop.permute.xlu0 %3421
        %v3425 = vmul.f32 %v3374, %v3420
        %v3426 = vmul.f32 %v3376, %v3422
        %3429 = vrot.lane.b32.xlu0 %v3425, 16
        %v3430 = vpop.permute.xlu0 %3429
        %3431 = vrot.lane.b32.xlu0 %v3426, 16
        %v3432 = vpop.permute.xlu0 %3431
        %v3435 = vadd.f32 %v3415, %v3430
        %v3436 = vadd.f32 %v3416, %v3432
        %v3437 = vtanh.pop %v3407
        %v3438 = vtanh.pop %v3408
        %3441 = vrot.lane.b32.xlu0 %v3437, 16
        %v3442 = vpop.permute.xlu0 %3441
        %3443 = vrot.lane.b32.xlu0 %v3438, 16
        %v3444 = vpop.permute.xlu0 %3443
        %v3447 = vmul.f32 %v3362, %v3442
        %v3448 = vmul.f32 %v3364, %v3444
        %v3449 = vtanh.pop %v3435
        %v3450 = vtanh.pop %v3436
        %3453 = vrot.lane.b32.xlu0 %v3449, 16
        %v3454 = vpop.permute.xlu0 %3453
        %3455 = vrot.lane.b32.xlu0 %v3450, 16
        %v3456 = vpop.permute.xlu0 %3455
        %v3459 = vmul.f32 %v3374, %v3454
        %v3460 = vmul.f32 %v3376, %v3456
        %3463 = vrot.lane.b32.xlu0 %v3447, 96
        %v3464 = vpop.permute.xlu0 %3463
        %3465 = vrot.lane.b32.xlu0 %v3448, 96
        %v3466 = vpop.permute.xlu0 %3465
        %vm3469 = vcmask 130055
        %3470 = vst.msk [vmem:[#allocation2] sm:$0x80] %vm3469, %v3464
        %3471 = vst.msk [vmem:[#allocation2 + $0x8] sm:$0x80] %vm3469, %v3466
        %3474 = vrot.lane.b32.xlu0 %v3459, 48
        %v3475 = vpop.permute.xlu0 %3474
        %3476 = vrot.lane.b32.xlu0 %v3460, 48
        %v3477 = vpop.permute.xlu0 %3476
        %vm3480 = vcmask 254080
        %3481 = vst.msk [vmem:[#allocation2] sm:$0x1] %vm3480, %v3475
        %3482 = vst.msk [vmem:[#allocation2 + $0x8] sm:$0x1] %vm3480, %v3477
        %v3483 = vld [vmem:[#allocation2] sm:$0xff]
        %v3484 = vld [vmem:[#allocation2 + $0x8] sm:$0xff]
        %3485 = vst.msk [vmem:[%s492] sm:$0xff] %vm534, %v3483
        %3486 = vst.msk [vmem:[%s492 + $0x8] sm:$0xff] %vm534, %v3484
        %s3487 = sand.u32 %s281, 1
        %s3488 = scalar_lea.sflag [#allocation5], %s3487
        %s3489 = sand.u32 %s281, 1
        %s3490 = smul.addr %s3489, 16
        %s3491 = scalar_lea.vmem [#allocation9], %s3490
        // Predicated region
        $region77: #{tpu_custom_call.1} parent=59 // pred_check
          %p3492 = pneg %p291
        $region78: #{tpu_custom_call.1} parent=59 // pred_check_branch
          %3494 = sbr.rel (%p3492) target = $region80
        $region79: #{tpu_custom_call.1} parent=59 // pred_region
          %s3496 = ssub.s32 256, 256
          %3497 = vsyncadd %s3488, %s3496
          %s3498 = smul.addr %s28, 128
          %s3499 = scalar_lea.hbm %s10, %s3498
          %s3500 = sshll.u32 %s3491, 4
          %s3501 = int_to_ptr.vmem [resolvable:$true] %s3500
          %3506 = dma.vmem_to_hbm [thread:$0]  %s3501, 256, %s3499, %s3488, 128, 256, 8
        $region80: #{tpu_custom_call.1} parent=59 // pred_fallthru
          _
      $region60: #{tpu_custom_call.1} parent=5 // pred_fallthru
        _
      %p3507 = scmp.le.s32.totalorder 2, %s23
      // Predicated region
      $region81: #{tpu_custom_call.1} parent=5 // pred_check
        %p3508 = pneg %p3507
      $region82: #{tpu_custom_call.1} parent=5 // pred_check_branch
        %3510 = sbr.rel (%p3508) target = $region84
      $region83: #{tpu_custom_call.1} parent=5 // pred_region
        %s3511 = ssub.s32 %s23, 2
        // Predicated region
        $region85: #{tpu_custom_call.1} parent=83 // pred_check
          %p3512 = pneg %p297
        $region86: #{tpu_custom_call.1} parent=83 // pred_check_branch
          %3514 = sbr.rel (%p3512) target = $region88
        $region87: #{tpu_custom_call.1} parent=83 // pred_region
          %s3515 = sand.u32 %s282, 1
          %s3516 = scalar_lea.sflag [#allocation5], %s3515
          %s3517 = sand.u32 %s282, 1
          %s3518 = smul.addr %s3517, 16
          %s3519 = scalar_lea.vmem [#allocation9], %s3518
          %3520 = dma.done %s3516, 256
        $region88: #{tpu_custom_call.1} parent=83 // pred_fallthru
          _
      $region84: #{tpu_custom_call.1} parent=5 // pred_fallthru
        _
    $region6: #{tpu_custom_call.1} parent=1 // loop_footer
      %s27 = sadd.s32 1, %s23
    $region7: #{tpu_custom_call.1} parent=1 // loop_footer_branch
      %22 = sbr.rel target = $region3
    $region8: #{tpu_custom_call.1} parent=1 // loop_exit
      _
    %3521 = vsyncpa [#allocation4], 1
    %s3522 = scalar_lea.sflag [#allocation4], 1
    %3523 = vsyncpa %s3522, 1
    %3524 = vsyncpa [#allocation7], 1
    %s3525 = scalar_lea.sflag [#allocation7], 1
    %3526 = vsyncpa %s3525, 1
    %3527 = vsyncpa [#allocation5], 1
    %s3528 = scalar_lea.sflag [#allocation5], 1
    %3529 = vsyncpa %s3528, 1

</llo_original>
